<compile_context>
chip_gen: v7x
topology: tpu7x:2x2x1
jax: 0.10.0
libtpu: 0.0.40
codegen_flags: <defaults>
</compile_context>

<pallas_src>
import jax
import jax.numpy as jnp
import numpy as np
from jax.experimental import pallas as pl
from jax.experimental.pallas import tpu as pltpu

# ---------------------------------------------------------------------------
# Static geometry (32x32 input is required so the flatten is 64*4*4, as in torch).
# ---------------------------------------------------------------------------
H0 = W0 = 32                                 # input spatial size
KH = KW = 5                                  # conv kernel
C_IN = 3
C_MID = 64                                   # conv channel width
POOL_K, POOL_S = 3, 2                        # MaxPool2d(3, stride=2)
HC1 = WC1 = H0 - KH + 1                      # 28 : conv1 output
HP1 = WP1 = (HC1 - POOL_K) // POOL_S + 1     # 13 : pool1 output
HC2 = WC2 = HP1 - KH + 1                     # 9  : conv2 output
HP2 = WP2 = (HC2 - POOL_K) // POOL_S + 1     # 4  : pool2 output
S2 = WP1 + KW - 1                            # 17 : row stride of padded flat conv2 input
SLAB2 = HC2 * S2                             # 153: rows of one conv2 im2col slab
P1_ROWS = 232                                # >= (KH-1)*S2 + (KW-1) + SLAB2 = 225
K1 = KH * KW * C_IN                          # 75  : conv1 im2col depth
K2 = KH * KW * C_MID                         # 1600: conv2 im2col depth
N_FEAT = C_MID * HP2 * WP2                   # 1024
FC1_N, FC2_N, FC3_N = 384, 192, 10
FC3_PAD = 128                                # lane-dense padded logits width
HALF = WC1 // 2                              # 14 : even/odd split of permuted width

# pooled-row extraction slice lengths (derived in the kernel comments)
LEN_HP = 2 * (HP1 - 1) * WC1 + WP1           # 685
LEN_WP = LEN_HP + 2 * WC1                    # 741
LEN_HM = SLAB2 - 2 * S2                      # 119


# ---------------------------------------------------------------------------
# Fused whole-network kernel. One grid step == one image.
# ---------------------------------------------------------------------------
def _net_kernel(patches_ref, w1_ref, b1_ref, w2_ref, b2_ref,
                fw1_ref, fb1_ref, fw2_ref, fb2_ref, fw3_ref, fb3_ref,
                out_ref, p1s_ref):
    # ---------------- conv1 + relu: single K=75 MXU matmul -------------------
    # patch rows are ordered r = h*28 + q, where q<14 -> w=2q, q>=14 -> w=2(q-14)+1
    c1 = jnp.dot(patches_ref[0], w1_ref[...], preferred_element_type=jnp.float32)
    c1 = jnp.maximum(c1 + b1_ref[...], 0.0)                      # (784, 64)

    # ---------------- maxpool 3x3 / stride 2 on the 28x28 map ----------------
    # width max over {2pw, 2pw+1, 2pw+2} == max of slabs shifted by {0, HALF, 1}
    wp = jnp.maximum(jnp.maximum(c1[0:LEN_WP], c1[HALF:HALF + LEN_WP]),
                     c1[1:1 + LEN_WP])                           # (741, 64)
    # height max over {2ph, 2ph+1, 2ph+2} == max of slabs shifted by {0, 28, 56}
    hp = jnp.maximum(jnp.maximum(wp[0:LEN_HP], wp[WC1:WC1 + LEN_HP]),
                     wp[2 * WC1:2 * WC1 + LEN_HP])               # (685, 64)
    # pooled row ph lives at hp[2*ph*28 : 2*ph*28 + 13] -> scatter into the
    # zero-padded flat conv2-input layout (row stride 17)
    p1s_ref[...] = jnp.zeros_like(p1s_ref)
    for ph in range(HP1):
        p1s_ref[pl.ds(ph * S2, WP1), :] = hp[2 * ph * WC1: 2 * ph * WC1 + WP1, :]

    # ---------------- conv2 + relu: in-kernel im2col, K=1600 -----------------
    patches2 = jnp.concatenate(
        [p1s_ref[pl.ds(kh * S2 + kw, SLAB2), :]
         for kh in range(KH) for kw in range(KW)], axis=-1)      # (153, 1600)
    c2 = jnp.dot(patches2, w2_ref[...], preferred_element_type=jnp.float32)
    c2 = jnp.maximum(c2 + b2_ref[...], 0.0)                      # (153, 64)

    # ---------------- maxpool 3x3 / stride 2 on the 9x9 map ------------------
    hm = jnp.maximum(jnp.maximum(c2[0:LEN_HM], c2[S2:S2 + LEN_HM]),
                     c2[2 * S2:2 * S2 + LEN_HM])                 # (119, 64)
    mm = jnp.maximum(jnp.maximum(hm[0:LEN_HM - 2], hm[1:LEN_HM - 1]),
                     hm[2:LEN_HM])                               # (117, 64) full 3x3 max
    # pooled (h, w) value sits at mm[2h*17 + 2w]; build lane-major (1, 1024) features
    # in (h, w, c) order -- fc1 weights are pre-permuted to match torch's NCHW flatten.
    feat = jnp.concatenate(
        [mm[2 * h * S2 + 2 * w: 2 * h * S2 + 2 * w + 1, :]
         for h in range(HP2) for w in range(WP2)], axis=-1)      # (1, 1024)

    # ---------------- fused MLP head ------------------------------------------
    a1 = jnp.maximum(
        jnp.dot(feat, fw1_ref[...], preferred_element_type=jnp.float32)
        + fb1_ref[...], 0.0)                                     # (1, 384)
    a2 = jnp.maximum(
        jnp.dot(a1, fw2_ref[...], preferred_element_type=jnp.float32)
        + fb2_ref[...], 0.0)                                     # (1, 192)
    out_ref[0] = (jnp.dot(a2, fw3_ref[...], preferred_element_type=jnp.float32)
                  + fb3_ref[...])                                # (1, 128) lane-dense


def _run_net(patches1, w1c, b1c, w2c, b2c, fw1, fb1, fw2, fb2, fw3, fb3):
    B = patches1.shape[0]

    def full(a):
        return pl.BlockSpec(a.shape, lambda b, nd=a.ndim: (0,) * nd)

    out = pl.pallas_call(
        _net_kernel,
        out_shape=jax.ShapeDtypeStruct((B, 1, FC3_PAD), jnp.float32),
        grid=(B,),
        in_specs=[pl.BlockSpec((1, HC1 * WC1, K1), lambda b: (b, 0, 0)),
                  full(w1c), full(b1c), full(w2c), full(b2c),
                  full(fw1), full(fb1), full(fw2), full(fb2),
                  full(fw3), full(fb3)],
        out_specs=pl.BlockSpec((1, 1, FC3_PAD), lambda b: (b, 0, 0)),
        scratch_shapes=[pltpu.VMEM((P1_ROWS, C_MID), jnp.float32)],
        compiler_params=pltpu.CompilerParams(
            dimension_semantics=("parallel",),
            vmem_limit_bytes=32 * 1024 * 1024),
    )(patches1, w1c, b1c, w2c, b2c, fw1, fb1, fw2, fb2, fw3, fb3)
    return out[:, 0, :FC3_N]


@jax.jit
def net_forward(x_nchw, p):
    x = jnp.transpose(x_nchw, (0, 2, 3, 1)).astype(jnp.float32)   # NCHW -> NHWC
    B = x.shape[0]

    # ---- wrapper-side im2col for conv1 (layout plumbing on the external input) ----
    pats = jnp.concatenate(
        [x[:, kh:kh + HC1, kw:kw + WC1, :] for kh in range(KH) for kw in range(KW)],
        axis=-1)                                                  # (B, 28, 28, 75)
    # even widths first, then odd widths, so the in-kernel stride-2 pool subsample
    # becomes contiguous slices.
    w_order = np.array([2 * q for q in range(HALF)] + [2 * q + 1 for q in range(HALF)])
    pats = pats[:, :, w_order, :].reshape(B, HC1 * WC1, K1)

    # ---- weight layout plumbing ----
    w1c = p["conv1_w"].reshape(K1, C_MID)                         # (75, 64)
    w2c = p["conv2_w"].reshape(K2, C_MID)                         # (1600, 64)
    # torch flattens NCHW (c, h, w); the kernel emits (h, w, c) -> permute fc1 rows.
    fw1 = (p["fc1_w"].reshape(C_MID, HP2, WP2, FC1_N)
           .transpose(1, 2, 0, 3).reshape(N_FEAT, FC1_N))
    fw3 = jnp.pad(p["fc3_w"], ((0, 0), (0, FC3_PAD - FC3_N)))     # lane-dense logits
    fb3 = jnp.pad(p["fc3_b"], (0, FC3_PAD - FC3_N))

    return _run_net(pats, w1c, p["conv1_b"].reshape(1, -1),
                    w2c, p["conv2_b"].reshape(1, -1),
                    fw1, p["fc1_b"].reshape(1, -1),
                    p["fc2_w"], p["fc2_b"].reshape(1, -1),
                    fw3, fb3.reshape(1, -1))


# ---------------------------------------------------------------------------
# Parameters (deterministic synthetic init; torch shapes transposed to HWIO / (in,out)).
# ---------------------------------------------------------------------------
def init_params(key):
    ks = jax.random.split(key, 10)

    def nrm(k, shape, scale):
        return jax.random.normal(k, shape, jnp.float32) * scale

    return {
        "conv1_w": nrm(ks[0], (5, 5, 3, 64), 0.115),    # torch conv1.weight -> HWIO
        "conv1_b": nrm(ks[1], (64,), 0.1),
        "conv2_w": nrm(ks[2], (5, 5, 64, 64), 0.025),   # torch conv2.weight -> HWIO
        "conv2_b": nrm(ks[3], (64,), 0.05),
        "fc1_w": nrm(ks[4], (64 * 4 * 4, 384), 0.03),   # torch fc1.weight.T
        "fc1_b": nrm(ks[5], (384,), 0.03),
        "fc2_w": nrm(ks[6], (384, 192), 0.05),
        "fc2_b": nrm(ks[7], (192,), 0.05),
        "fc3_w": nrm(ks[8], (192, 10), 0.07),
        "fc3_b": nrm(ks[9], (10,), 0.07),
    }


# Pure-JAX reference for correctness checking.
def reference_forward(x_nchw, p):
    x = jnp.transpose(x_nchw, (0, 2, 3, 1)).astype(jnp.float32)

    def conv(x, w, b):
        y = jax.lax.conv_general_dilated(
            x, w, (1, 1), "VALID", dimension_numbers=("NHWC", "HWIO", "NHWC"))
        return jnp.maximum(y + b, 0.0)

    def pool(x):
        return jax.lax.reduce_window(
            x, -jnp.inf, jax.lax.max, (1, POOL_K, POOL_K, 1),
            (1, POOL_S, POOL_S, 1), "VALID")

    h = pool(conv(x, p["conv1_w"], p["conv1_b"]))
    h = pool(conv(h, p["conv2_w"], p["conv2_b"]))
    h = jnp.transpose(h, (0, 3, 1, 2)).reshape(h.shape[0], -1)    # torch NCHW flatten
    h = jnp.maximum(h @ p["fc1_w"] + p["fc1_b"], 0.0)
    h = jnp.maximum(h @ p["fc2_w"] + p["fc2_b"], 0.0)
    return h @ p["fc3_w"] + p["fc3_b"]


if __name__ == "__main__":
    key = jax.random.PRNGKey(0)
    pkey, xkey = jax.random.split(key)
    params = init_params(pkey)
    # NCHW input, as the PyTorch module expects: 32x32 so the flatten is 64*4*4.
    x = jax.random.normal(xkey, (2, 3, 32, 32), jnp.float32)

    out = jax.block_until_ready(net_forward(x, params))
    assert out.shape == (2, 10), out.shape

    ref = reference_forward(x, params)
    np.testing.assert_allclose(np.asarray(out), np.asarray(ref), rtol=2e-2, atol=2e-2)

    print("KERNEL_OK")
</pallas_src>

<mosaic_0001>
module attributes {stable_mosaic.version = 11 : i64} {
  func.func @_net_kernel(%arg0: i32, %arg1: memref<1x784x75xf32, #tpu.memory_space<vmem>>, %arg2: memref<75x64xf32, #tpu.memory_space<vmem>>, %arg3: memref<1x64xf32, #tpu.memory_space<vmem>>, %arg4: memref<1600x64xf32, #tpu.memory_space<vmem>>, %arg5: memref<1x64xf32, #tpu.memory_space<vmem>>, %arg6: memref<1024x384xf32, #tpu.memory_space<vmem>>, %arg7: memref<1x384xf32, #tpu.memory_space<vmem>>, %arg8: memref<384x192xf32, #tpu.memory_space<vmem>>, %arg9: memref<1x192xf32, #tpu.memory_space<vmem>>, %arg10: memref<192x128xf32, #tpu.memory_space<vmem>>, %arg11: memref<1x128xf32, #tpu.memory_space<vmem>>, %arg12: memref<1x1x128xf32, #tpu.memory_space<vmem>>, %arg13: memref<232x64xf32, #tpu.memory_space<vmem>>) attributes {dimension_semantics = [#tpu.dimension_semantics<parallel>], iteration_bounds = array<i64: 2>, scalar_prefetch = 0 : i64, scratch_operands = 1 : i64, tpu.core_type = #tpu.core_type<tc>, window_params = [{transform_indices = @transform_0, window_bounds = array<i64: 1, 784, 75>}, {pipeline_mode = #tpu.pipeline_mode<synchronous>, transform_indices = @transform_1, window_bounds = array<i64: 75, 64>}, {pipeline_mode = #tpu.pipeline_mode<synchronous>, transform_indices = @transform_2, window_bounds = array<i64: 1, 64>}, {pipeline_mode = #tpu.pipeline_mode<synchronous>, transform_indices = @transform_3, window_bounds = array<i64: 1600, 64>}, {pipeline_mode = #tpu.pipeline_mode<synchronous>, transform_indices = @transform_4, window_bounds = array<i64: 1, 64>}, {pipeline_mode = #tpu.pipeline_mode<synchronous>, transform_indices = @transform_5, window_bounds = array<i64: 1024, 384>}, {pipeline_mode = #tpu.pipeline_mode<synchronous>, transform_indices = @transform_6, window_bounds = array<i64: 1, 384>}, {pipeline_mode = #tpu.pipeline_mode<synchronous>, transform_indices = @transform_7, window_bounds = array<i64: 384, 192>}, {pipeline_mode = #tpu.pipeline_mode<synchronous>, transform_indices = @transform_8, window_bounds = array<i64: 1, 192>}, {pipeline_mode = #tpu.pipeline_mode<synchronous>, transform_indices = @transform_9, window_bounds = array<i64: 192, 128>}, {pipeline_mode = #tpu.pipeline_mode<synchronous>, transform_indices = @transform_10, window_bounds = array<i64: 1, 128>}, {transform_indices = @transform_11, window_bounds = array<i64: 1, 1, 128>}]} {
    %c0 = arith.constant 0 : index
    %c0_0 = arith.constant 0 : index
    %c0_1 = arith.constant 0 : index
    %0 = vector.load %arg1[%c0, %c0_0, %c0_1] : memref<1x784x75xf32, #tpu.memory_space<vmem>>, vector<1x784x75xf32>
    %1 = vector.shape_cast %0 : vector<1x784x75xf32> to vector<784x75xf32>
    %c0_2 = arith.constant 0 : index
    %c0_3 = arith.constant 0 : index
    %2 = vector.load %arg2[%c0_2, %c0_3] : memref<75x64xf32, #tpu.memory_space<vmem>>, vector<75x64xf32>
    %cst = arith.constant dense<0.000000e+00> : vector<784x64xf32>
    %3 = tpu.matmul %1, %2, %cst {dimension_numbers = #tpu.dot_dimension_numbers<[1], [0], [0], [1], [0, 0, 1, 1], [], []>} : vector<784x75xf32>, vector<75x64xf32>, vector<784x64xf32> -> vector<784x64xf32>
    %c0_4 = arith.constant 0 : index
    %c0_5 = arith.constant 0 : index
    %4 = vector.load %arg3[%c0_4, %c0_5] : memref<1x64xf32, #tpu.memory_space<vmem>>, vector<1x64xf32>
    %5 = vector.broadcast %4 : vector<1x64xf32> to vector<784x64xf32>
    %6 = arith.addf %3, %5 : vector<784x64xf32>
    %cst_6 = arith.constant 0.000000e+00 : f32
    %7 = vector.broadcast %cst_6 : f32 to vector<784x64xf32>
    %8 = arith.maximumf %6, %7 : vector<784x64xf32>
    %9 = vector.extract_strided_slice %8 {offsets = [0, 0], sizes = [741, 64], strides = [1, 1]} : vector<784x64xf32> to vector<741x64xf32>
    %10 = vector.extract_strided_slice %8 {offsets = [14, 0], sizes = [741, 64], strides = [1, 1]} : vector<784x64xf32> to vector<741x64xf32>
    %11 = arith.maximumf %9, %10 : vector<741x64xf32>
    %12 = vector.extract_strided_slice %8 {offsets = [1, 0], sizes = [741, 64], strides = [1, 1]} : vector<784x64xf32> to vector<741x64xf32>
    %13 = arith.maximumf %11, %12 : vector<741x64xf32>
    %14 = vector.extract_strided_slice %13 {offsets = [0, 0], sizes = [685, 64], strides = [1, 1]} : vector<741x64xf32> to vector<685x64xf32>
    %15 = vector.extract_strided_slice %13 {offsets = [28, 0], sizes = [685, 64], strides = [1, 1]} : vector<741x64xf32> to vector<685x64xf32>
    %16 = arith.maximumf %14, %15 : vector<685x64xf32>
    %17 = vector.extract_strided_slice %13 {offsets = [56, 0], sizes = [685, 64], strides = [1, 1]} : vector<741x64xf32> to vector<685x64xf32>
    %18 = arith.maximumf %16, %17 : vector<685x64xf32>
    %cst_7 = arith.constant 0.000000e+00 : f32
    %19 = vector.broadcast %cst_7 : f32 to vector<232x64xf32>
    %c0_8 = arith.constant 0 : index
    %c0_9 = arith.constant 0 : index
    %20 = vector.load %arg13[%c0_8, %c0_9] : memref<232x64xf32, #tpu.memory_space<vmem>>, vector<232x64xf32>
    tpu.vector_store %arg13[%c0_8, %c0_9], %19 {strides = array<i32>} : memref<232x64xf32, #tpu.memory_space<vmem>>, vector<232x64xf32>,
    %21 = vector.extract_strided_slice %18 {offsets = [0, 0], sizes = [13, 64], strides = [1, 1]} : vector<685x64xf32> to vector<13x64xf32>
    %c0_10 = arith.constant 0 : index
    %c0_11 = arith.constant 0 : index
    %22 = vector.load %arg13[%c0_10, %c0_11] : memref<232x64xf32, #tpu.memory_space<vmem>>, vector<13x64xf32>
    tpu.vector_store %arg13[%c0_10, %c0_11], %21 {strides = array<i32>} : memref<232x64xf32, #tpu.memory_space<vmem>>, vector<13x64xf32>,
    %23 = vector.extract_strided_slice %18 {offsets = [56, 0], sizes = [13, 64], strides = [1, 1]} : vector<685x64xf32> to vector<13x64xf32>
    %c17 = arith.constant 17 : index
    %c0_12 = arith.constant 0 : index
    %24 = vector.load %arg13[%c17, %c0_12] : memref<232x64xf32, #tpu.memory_space<vmem>>, vector<13x64xf32>
    tpu.vector_store %arg13[%c17, %c0_12], %23 {strides = array<i32>} : memref<232x64xf32, #tpu.memory_space<vmem>>, vector<13x64xf32>,
    %25 = vector.extract_strided_slice %18 {offsets = [112, 0], sizes = [13, 64], strides = [1, 1]} : vector<685x64xf32> to vector<13x64xf32>
    %c34 = arith.constant 34 : index
    %c0_13 = arith.constant 0 : index
    %26 = vector.load %arg13[%c34, %c0_13] : memref<232x64xf32, #tpu.memory_space<vmem>>, vector<13x64xf32>
    tpu.vector_store %arg13[%c34, %c0_13], %25 {strides = array<i32>} : memref<232x64xf32, #tpu.memory_space<vmem>>, vector<13x64xf32>,
    %27 = vector.extract_strided_slice %18 {offsets = [168, 0], sizes = [13, 64], strides = [1, 1]} : vector<685x64xf32> to vector<13x64xf32>
    %c51 = arith.constant 51 : index
    %c0_14 = arith.constant 0 : index
    %28 = vector.load %arg13[%c51, %c0_14] : memref<232x64xf32, #tpu.memory_space<vmem>>, vector<13x64xf32>
    tpu.vector_store %arg13[%c51, %c0_14], %27 {strides = array<i32>} : memref<232x64xf32, #tpu.memory_space<vmem>>, vector<13x64xf32>,
    %29 = vector.extract_strided_slice %18 {offsets = [224, 0], sizes = [13, 64], strides = [1, 1]} : vector<685x64xf32> to vector<13x64xf32>
    %c68 = arith.constant 68 : index
    %c0_15 = arith.constant 0 : index
    %30 = vector.load %arg13[%c68, %c0_15] : memref<232x64xf32, #tpu.memory_space<vmem>>, vector<13x64xf32>
    tpu.vector_store %arg13[%c68, %c0_15], %29 {strides = array<i32>} : memref<232x64xf32, #tpu.memory_space<vmem>>, vector<13x64xf32>,
    %31 = vector.extract_strided_slice %18 {offsets = [280, 0], sizes = [13, 64], strides = [1, 1]} : vector<685x64xf32> to vector<13x64xf32>
    %c85 = arith.constant 85 : index
    %c0_16 = arith.constant 0 : index
    %32 = vector.load %arg13[%c85, %c0_16] : memref<232x64xf32, #tpu.memory_space<vmem>>, vector<13x64xf32>
    tpu.vector_store %arg13[%c85, %c0_16], %31 {strides = array<i32>} : memref<232x64xf32, #tpu.memory_space<vmem>>, vector<13x64xf32>,
    %33 = vector.extract_strided_slice %18 {offsets = [336, 0], sizes = [13, 64], strides = [1, 1]} : vector<685x64xf32> to vector<13x64xf32>
    %c102 = arith.constant 102 : index
    %c0_17 = arith.constant 0 : index
    %34 = vector.load %arg13[%c102, %c0_17] : memref<232x64xf32, #tpu.memory_space<vmem>>, vector<13x64xf32>
    tpu.vector_store %arg13[%c102, %c0_17], %33 {strides = array<i32>} : memref<232x64xf32, #tpu.memory_space<vmem>>, vector<13x64xf32>,
    %35 = vector.extract_strided_slice %18 {offsets = [392, 0], sizes = [13, 64], strides = [1, 1]} : vector<685x64xf32> to vector<13x64xf32>
    %c119 = arith.constant 119 : index
    %c0_18 = arith.constant 0 : index
    %36 = vector.load %arg13[%c119, %c0_18] : memref<232x64xf32, #tpu.memory_space<vmem>>, vector<13x64xf32>
    tpu.vector_store %arg13[%c119, %c0_18], %35 {strides = array<i32>} : memref<232x64xf32, #tpu.memory_space<vmem>>, vector<13x64xf32>,
    %37 = vector.extract_strided_slice %18 {offsets = [448, 0], sizes = [13, 64], strides = [1, 1]} : vector<685x64xf32> to vector<13x64xf32>
    %c136 = arith.constant 136 : index
    %c0_19 = arith.constant 0 : index
    %38 = vector.load %arg13[%c136, %c0_19] : memref<232x64xf32, #tpu.memory_space<vmem>>, vector<13x64xf32>
    tpu.vector_store %arg13[%c136, %c0_19], %37 {strides = array<i32>} : memref<232x64xf32, #tpu.memory_space<vmem>>, vector<13x64xf32>,
    %39 = vector.extract_strided_slice %18 {offsets = [504, 0], sizes = [13, 64], strides = [1, 1]} : vector<685x64xf32> to vector<13x64xf32>
    %c153 = arith.constant 153 : index
    %c0_20 = arith.constant 0 : index
    %40 = vector.load %arg13[%c153, %c0_20] : memref<232x64xf32, #tpu.memory_space<vmem>>, vector<13x64xf32>
    tpu.vector_store %arg13[%c153, %c0_20], %39 {strides = array<i32>} : memref<232x64xf32, #tpu.memory_space<vmem>>, vector<13x64xf32>,
    %41 = vector.extract_strided_slice %18 {offsets = [560, 0], sizes = [13, 64], strides = [1, 1]} : vector<685x64xf32> to vector<13x64xf32>
    %c170 = arith.constant 170 : index
    %c0_21 = arith.constant 0 : index
    %42 = vector.load %arg13[%c170, %c0_21] : memref<232x64xf32, #tpu.memory_space<vmem>>, vector<13x64xf32>
    tpu.vector_store %arg13[%c170, %c0_21], %41 {strides = array<i32>} : memref<232x64xf32, #tpu.memory_space<vmem>>, vector<13x64xf32>,
    %43 = vector.extract_strided_slice %18 {offsets = [616, 0], sizes = [13, 64], strides = [1, 1]} : vector<685x64xf32> to vector<13x64xf32>
    %c187 = arith.constant 187 : index
    %c0_22 = arith.constant 0 : index
    %44 = vector.load %arg13[%c187, %c0_22] : memref<232x64xf32, #tpu.memory_space<vmem>>, vector<13x64xf32>
    tpu.vector_store %arg13[%c187, %c0_22], %43 {strides = array<i32>} : memref<232x64xf32, #tpu.memory_space<vmem>>, vector<13x64xf32>,
    %45 = vector.extract_strided_slice %18 {offsets = [672, 0], sizes = [13, 64], strides = [1, 1]} : vector<685x64xf32> to vector<13x64xf32>
    %c204 = arith.constant 204 : index
    %c0_23 = arith.constant 0 : index
    %46 = vector.load %arg13[%c204, %c0_23] : memref<232x64xf32, #tpu.memory_space<vmem>>, vector<13x64xf32>
    tpu.vector_store %arg13[%c204, %c0_23], %45 {strides = array<i32>} : memref<232x64xf32, #tpu.memory_space<vmem>>, vector<13x64xf32>,
    %c0_24 = arith.constant 0 : index
    %c0_25 = arith.constant 0 : index
    %47 = vector.load %arg13[%c0_24, %c0_25] : memref<232x64xf32, #tpu.memory_space<vmem>>, vector<153x64xf32>
    %c1 = arith.constant 1 : index
    %c0_26 = arith.constant 0 : index
    %48 = vector.load %arg13[%c1, %c0_26] : memref<232x64xf32, #tpu.memory_space<vmem>>, vector<153x64xf32>
    %c2 = arith.constant 2 : index
    %c0_27 = arith.constant 0 : index
    %49 = vector.load %arg13[%c2, %c0_27] : memref<232x64xf32, #tpu.memory_space<vmem>>, vector<153x64xf32>
    %c3 = arith.constant 3 : index
    %c0_28 = arith.constant 0 : index
    %50 = vector.load %arg13[%c3, %c0_28] : memref<232x64xf32, #tpu.memory_space<vmem>>, vector<153x64xf32>
    %c4 = arith.constant 4 : index
    %c0_29 = arith.constant 0 : index
    %51 = vector.load %arg13[%c4, %c0_29] : memref<232x64xf32, #tpu.memory_space<vmem>>, vector<153x64xf32>
    %c17_30 = arith.constant 17 : index
    %c0_31 = arith.constant 0 : index
    %52 = vector.load %arg13[%c17_30, %c0_31] : memref<232x64xf32, #tpu.memory_space<vmem>>, vector<153x64xf32>
    %c18 = arith.constant 18 : index
    %c0_32 = arith.constant 0 : index
    %53 = vector.load %arg13[%c18, %c0_32] : memref<232x64xf32, #tpu.memory_space<vmem>>, vector<153x64xf32>
    %c19 = arith.constant 19 : index
    %c0_33 = arith.constant 0 : index
    %54 = vector.load %arg13[%c19, %c0_33] : memref<232x64xf32, #tpu.memory_space<vmem>>, vector<153x64xf32>
    %c20 = arith.constant 20 : index
    %c0_34 = arith.constant 0 : index
    %55 = vector.load %arg13[%c20, %c0_34] : memref<232x64xf32, #tpu.memory_space<vmem>>, vector<153x64xf32>
    %c21 = arith.constant 21 : index
    %c0_35 = arith.constant 0 : index
    %56 = vector.load %arg13[%c21, %c0_35] : memref<232x64xf32, #tpu.memory_space<vmem>>, vector<153x64xf32>
    %c34_36 = arith.constant 34 : index
    %c0_37 = arith.constant 0 : index
    %57 = vector.load %arg13[%c34_36, %c0_37] : memref<232x64xf32, #tpu.memory_space<vmem>>, vector<153x64xf32>
    %c35 = arith.constant 35 : index
    %c0_38 = arith.constant 0 : index
    %58 = vector.load %arg13[%c35, %c0_38] : memref<232x64xf32, #tpu.memory_space<vmem>>, vector<153x64xf32>
    %c36 = arith.constant 36 : index
    %c0_39 = arith.constant 0 : index
    %59 = vector.load %arg13[%c36, %c0_39] : memref<232x64xf32, #tpu.memory_space<vmem>>, vector<153x64xf32>
    %c37 = arith.constant 37 : index
    %c0_40 = arith.constant 0 : index
    %60 = vector.load %arg13[%c37, %c0_40] : memref<232x64xf32, #tpu.memory_space<vmem>>, vector<153x64xf32>
    %c38 = arith.constant 38 : index
    %c0_41 = arith.constant 0 : index
    %61 = vector.load %arg13[%c38, %c0_41] : memref<232x64xf32, #tpu.memory_space<vmem>>, vector<153x64xf32>
    %c51_42 = arith.constant 51 : index
    %c0_43 = arith.constant 0 : index
    %62 = vector.load %arg13[%c51_42, %c0_43] : memref<232x64xf32, #tpu.memory_space<vmem>>, vector<153x64xf32>
    %c52 = arith.constant 52 : index
    %c0_44 = arith.constant 0 : index
    %63 = vector.load %arg13[%c52, %c0_44] : memref<232x64xf32, #tpu.memory_space<vmem>>, vector<153x64xf32>
    %c53 = arith.constant 53 : index
    %c0_45 = arith.constant 0 : index
    %64 = vector.load %arg13[%c53, %c0_45] : memref<232x64xf32, #tpu.memory_space<vmem>>, vector<153x64xf32>
    %c54 = arith.constant 54 : index
    %c0_46 = arith.constant 0 : index
    %65 = vector.load %arg13[%c54, %c0_46] : memref<232x64xf32, #tpu.memory_space<vmem>>, vector<153x64xf32>
    %c55 = arith.constant 55 : index
    %c0_47 = arith.constant 0 : index
    %66 = vector.load %arg13[%c55, %c0_47] : memref<232x64xf32, #tpu.memory_space<vmem>>, vector<153x64xf32>
    %c68_48 = arith.constant 68 : index
    %c0_49 = arith.constant 0 : index
    %67 = vector.load %arg13[%c68_48, %c0_49] : memref<232x64xf32, #tpu.memory_space<vmem>>, vector<153x64xf32>
    %c69 = arith.constant 69 : index
    %c0_50 = arith.constant 0 : index
    %68 = vector.load %arg13[%c69, %c0_50] : memref<232x64xf32, #tpu.memory_space<vmem>>, vector<153x64xf32>
    %c70 = arith.constant 70 : index
    %c0_51 = arith.constant 0 : index
    %69 = vector.load %arg13[%c70, %c0_51] : memref<232x64xf32, #tpu.memory_space<vmem>>, vector<153x64xf32>
    %c71 = arith.constant 71 : index
    %c0_52 = arith.constant 0 : index
    %70 = vector.load %arg13[%c71, %c0_52] : memref<232x64xf32, #tpu.memory_space<vmem>>, vector<153x64xf32>
    %c72 = arith.constant 72 : index
    %c0_53 = arith.constant 0 : index
    %71 = vector.load %arg13[%c72, %c0_53] : memref<232x64xf32, #tpu.memory_space<vmem>>, vector<153x64xf32>
    %72 = tpu.concatenate %47, %48, %49, %50, %51, %52, %53, %54, %55, %56, %57, %58, %59, %60, %61, %62 in 1 : vector<153x64xf32>, vector<153x64xf32>, vector<153x64xf32>, vector<153x64xf32>, vector<153x64xf32>, vector<153x64xf32>, vector<153x64xf32>, vector<153x64xf32>, vector<153x64xf32>, vector<153x64xf32>, vector<153x64xf32>, vector<153x64xf32>, vector<153x64xf32>, vector<153x64xf32>, vector<153x64xf32>, vector<153x64xf32> -> vector<153x1024xf32>
    %73 = tpu.concatenate %63, %64, %65, %66, %67, %68, %69, %70, %71 in 1 : vector<153x64xf32>, vector<153x64xf32>, vector<153x64xf32>, vector<153x64xf32>, vector<153x64xf32>, vector<153x64xf32>, vector<153x64xf32>, vector<153x64xf32>, vector<153x64xf32> -> vector<153x576xf32>
    %74 = tpu.concatenate %72, %73 in 1 : vector<153x1024xf32>, vector<153x576xf32> -> vector<153x1600xf32>
    %c0_54 = arith.constant 0 : index
    %c0_55 = arith.constant 0 : index
    %75 = vector.load %arg4[%c0_54, %c0_55] : memref<1600x64xf32, #tpu.memory_space<vmem>>, vector<1600x64xf32>
    %cst_56 = arith.constant dense<0.000000e+00> : vector<153x64xf32>
    %76 = tpu.matmul %74, %75, %cst_56 {dimension_numbers = #tpu.dot_dimension_numbers<[1], [0], [0], [1], [0, 0, 1, 1], [], []>} : vector<153x1600xf32>, vector<1600x64xf32>, vector<153x64xf32> -> vector<153x64xf32>
    %c0_57 = arith.constant 0 : index
    %c0_58 = arith.constant 0 : index
    %77 = vector.load %arg5[%c0_57, %c0_58] : memref<1x64xf32, #tpu.memory_space<vmem>>, vector<1x64xf32>
    %78 = vector.broadcast %77 : vector<1x64xf32> to vector<153x64xf32>
    %79 = arith.addf %76, %78 : vector<153x64xf32>
    %cst_59 = arith.constant 0.000000e+00 : f32
    %80 = vector.broadcast %cst_59 : f32 to vector<153x64xf32>
    %81 = arith.maximumf %79, %80 : vector<153x64xf32>
    %82 = vector.extract_strided_slice %81 {offsets = [0, 0], sizes = [119, 64], strides = [1, 1]} : vector<153x64xf32> to vector<119x64xf32>
    %83 = vector.extract_strided_slice %81 {offsets = [17, 0], sizes = [119, 64], strides = [1, 1]} : vector<153x64xf32> to vector<119x64xf32>
    %84 = arith.maximumf %82, %83 : vector<119x64xf32>
    %85 = vector.extract_strided_slice %81 {offsets = [34, 0], sizes = [119, 64], strides = [1, 1]} : vector<153x64xf32> to vector<119x64xf32>
    %86 = arith.maximumf %84, %85 : vector<119x64xf32>
    %87 = vector.extract_strided_slice %86 {offsets = [0, 0], sizes = [117, 64], strides = [1, 1]} : vector<119x64xf32> to vector<117x64xf32>
    %88 = vector.extract_strided_slice %86 {offsets = [1, 0], sizes = [117, 64], strides = [1, 1]} : vector<119x64xf32> to vector<117x64xf32>
    %89 = arith.maximumf %87, %88 : vector<117x64xf32>
    %90 = vector.extract_strided_slice %86 {offsets = [2, 0], sizes = [117, 64], strides = [1, 1]} : vector<119x64xf32> to vector<117x64xf32>
    %91 = arith.maximumf %89, %90 : vector<117x64xf32>
    %92 = vector.extract_strided_slice %91 {offsets = [0, 0], sizes = [1, 64], strides = [1, 1]} : vector<117x64xf32> to vector<1x64xf32>
    %93 = vector.extract_strided_slice %91 {offsets = [2, 0], sizes = [1, 64], strides = [1, 1]} : vector<117x64xf32> to vector<1x64xf32>
    %94 = vector.extract_strided_slice %91 {offsets = [4, 0], sizes = [1, 64], strides = [1, 1]} : vector<117x64xf32> to vector<1x64xf32>
    %95 = vector.extract_strided_slice %91 {offsets = [6, 0], sizes = [1, 64], strides = [1, 1]} : vector<117x64xf32> to vector<1x64xf32>
    %96 = vector.extract_strided_slice %91 {offsets = [34, 0], sizes = [1, 64], strides = [1, 1]} : vector<117x64xf32> to vector<1x64xf32>
    %97 = vector.extract_strided_slice %91 {offsets = [36, 0], sizes = [1, 64], strides = [1, 1]} : vector<117x64xf32> to vector<1x64xf32>
    %98 = vector.extract_strided_slice %91 {offsets = [38, 0], sizes = [1, 64], strides = [1, 1]} : vector<117x64xf32> to vector<1x64xf32>
    %99 = vector.extract_strided_slice %91 {offsets = [40, 0], sizes = [1, 64], strides = [1, 1]} : vector<117x64xf32> to vector<1x64xf32>
    %100 = vector.extract_strided_slice %91 {offsets = [68, 0], sizes = [1, 64], strides = [1, 1]} : vector<117x64xf32> to vector<1x64xf32>
    %101 = vector.extract_strided_slice %91 {offsets = [70, 0], sizes = [1, 64], strides = [1, 1]} : vector<117x64xf32> to vector<1x64xf32>
    %102 = vector.extract_strided_slice %91 {offsets = [72, 0], sizes = [1, 64], strides = [1, 1]} : vector<117x64xf32> to vector<1x64xf32>
    %103 = vector.extract_strided_slice %91 {offsets = [74, 0], sizes = [1, 64], strides = [1, 1]} : vector<117x64xf32> to vector<1x64xf32>
    %104 = vector.extract_strided_slice %91 {offsets = [102, 0], sizes = [1, 64], strides = [1, 1]} : vector<117x64xf32> to vector<1x64xf32>
    %105 = vector.extract_strided_slice %91 {offsets = [104, 0], sizes = [1, 64], strides = [1, 1]} : vector<117x64xf32> to vector<1x64xf32>
    %106 = vector.extract_strided_slice %91 {offsets = [106, 0], sizes = [1, 64], strides = [1, 1]} : vector<117x64xf32> to vector<1x64xf32>
    %107 = vector.extract_strided_slice %91 {offsets = [108, 0], sizes = [1, 64], strides = [1, 1]} : vector<117x64xf32> to vector<1x64xf32>
    %108 = tpu.concatenate %92, %93, %94, %95, %96, %97, %98, %99, %100, %101, %102, %103, %104, %105, %106, %107 in 1 : vector<1x64xf32>, vector<1x64xf32>, vector<1x64xf32>, vector<1x64xf32>, vector<1x64xf32>, vector<1x64xf32>, vector<1x64xf32>, vector<1x64xf32>, vector<1x64xf32>, vector<1x64xf32>, vector<1x64xf32>, vector<1x64xf32>, vector<1x64xf32>, vector<1x64xf32>, vector<1x64xf32>, vector<1x64xf32> -> vector<1x1024xf32>
    %c0_60 = arith.constant 0 : index
    %c0_61 = arith.constant 0 : index
    %109 = vector.load %arg6[%c0_60, %c0_61] : memref<1024x384xf32, #tpu.memory_space<vmem>>, vector<1024x384xf32>
    %cst_62 = arith.constant dense<0.000000e+00> : vector<1x384xf32>
    %110 = tpu.matmul %108, %109, %cst_62 {dimension_numbers = #tpu.dot_dimension_numbers<[1], [0], [0], [1], [0, 0, 1, 1], [], []>} : vector<1x1024xf32>, vector<1024x384xf32>, vector<1x384xf32> -> vector<1x384xf32>
    %c0_63 = arith.constant 0 : index
    %c0_64 = arith.constant 0 : index
    %111 = vector.load %arg7[%c0_63, %c0_64] : memref<1x384xf32, #tpu.memory_space<vmem>>, vector<1x384xf32>
    %112 = arith.addf %110, %111 : vector<1x384xf32>
    %cst_65 = arith.constant 0.000000e+00 : f32
    %113 = vector.broadcast %cst_65 : f32 to vector<1x384xf32>
    %114 = arith.maximumf %112, %113 : vector<1x384xf32>
    %c0_66 = arith.constant 0 : index
    %c0_67 = arith.constant 0 : index
    %115 = vector.load %arg8[%c0_66, %c0_67] : memref<384x192xf32, #tpu.memory_space<vmem>>, vector<384x192xf32>
    %cst_68 = arith.constant dense<0.000000e+00> : vector<1x192xf32>
    %116 = tpu.matmul %114, %115, %cst_68 {dimension_numbers = #tpu.dot_dimension_numbers<[1], [0], [0], [1], [0, 0, 1, 1], [], []>} : vector<1x384xf32>, vector<384x192xf32>, vector<1x192xf32> -> vector<1x192xf32>
    %c0_69 = arith.constant 0 : index
    %c0_70 = arith.constant 0 : index
    %117 = vector.load %arg9[%c0_69, %c0_70] : memref<1x192xf32, #tpu.memory_space<vmem>>, vector<1x192xf32>
    %118 = arith.addf %116, %117 : vector<1x192xf32>
    %cst_71 = arith.constant 0.000000e+00 : f32
    %119 = vector.broadcast %cst_71 : f32 to vector<1x192xf32>
    %120 = arith.maximumf %118, %119 : vector<1x192xf32>
    %c0_72 = arith.constant 0 : index
    %c0_73 = arith.constant 0 : index
    %121 = vector.load %arg10[%c0_72, %c0_73] : memref<192x128xf32, #tpu.memory_space<vmem>>, vector<192x128xf32>
    %cst_74 = arith.constant dense<0.000000e+00> : vector<1x128xf32>
    %122 = tpu.matmul %120, %121, %cst_74 {dimension_numbers = #tpu.dot_dimension_numbers<[1], [0], [0], [1], [0, 0, 1, 1], [], []>} : vector<1x192xf32>, vector<192x128xf32>, vector<1x128xf32> -> vector<1x128xf32>
    %c0_75 = arith.constant 0 : index
    %c0_76 = arith.constant 0 : index
    %123 = vector.load %arg11[%c0_75, %c0_76] : memref<1x128xf32, #tpu.memory_space<vmem>>, vector<1x128xf32>
    %124 = arith.addf %122, %123 : vector<1x128xf32>
    %c0_77 = arith.constant 0 : index
    %c0_78 = arith.constant 0 : index
    %c0_79 = arith.constant 0 : index
    %125 = vector.load %arg12[%c0_77, %c0_78, %c0_79] : memref<1x1x128xf32, #tpu.memory_space<vmem>>, vector<1x1x128xf32>
    %126 = vector.shape_cast %125 : vector<1x1x128xf32> to vector<1x128xf32>
    %127 = vector.shape_cast %124 : vector<1x128xf32> to vector<1x1x128xf32>
    tpu.vector_store %arg12[%c0_77, %c0_78, %c0_79], %127 {strides = array<i32>} : memref<1x1x128xf32, #tpu.memory_space<vmem>>, vector<1x1x128xf32>,
    return
  }
  func.func @transform_0(%arg0: i32) -> (i32, i32, i32) {
    %c0_i32 = arith.constant 0 : i32
    %c0_i32_0 = arith.constant 0 : i32
    %c0_i32_1 = arith.constant 0 : i32
    return %arg0, %c0_i32, %c0_i32_0 : i32, i32, i32
  }
  func.func @transform_1(%arg0: i32) -> (i32, i32) {
    %c0_i32 = arith.constant 0 : i32
    %c0_i32_0 = arith.constant 0 : i32
    %c0_i32_1 = arith.constant 0 : i32
    return %c0_i32, %c0_i32_0 : i32, i32
  }
  func.func @transform_2(%arg0: i32) -> (i32, i32) {
    %c0_i32 = arith.constant 0 : i32
    %c0_i32_0 = arith.constant 0 : i32
    %c0_i32_1 = arith.constant 0 : i32
    return %c0_i32, %c0_i32_0 : i32, i32
  }
  func.func @transform_3(%arg0: i32) -> (i32, i32) {
    %c0_i32 = arith.constant 0 : i32
    %c0_i32_0 = arith.constant 0 : i32
    %c0_i32_1 = arith.constant 0 : i32
    return %c0_i32, %c0_i32_0 : i32, i32
  }
  func.func @transform_4(%arg0: i32) -> (i32, i32) {
    %c0_i32 = arith.constant 0 : i32
    %c0_i32_0 = arith.constant 0 : i32
    %c0_i32_1 = arith.constant 0 : i32
    return %c0_i32, %c0_i32_0 : i32, i32
  }
  func.func @transform_5(%arg0: i32) -> (i32, i32) {
    %c0_i32 = arith.constant 0 : i32
    %c0_i32_0 = arith.constant 0 : i32
    %c0_i32_1 = arith.constant 0 : i32
    return %c0_i32, %c0_i32_0 : i32, i32
  }
  func.func @transform_6(%arg0: i32) -> (i32, i32) {
    %c0_i32 = arith.constant 0 : i32
    %c0_i32_0 = arith.constant 0 : i32
    %c0_i32_1 = arith.constant 0 : i32
    return %c0_i32, %c0_i32_0 : i32, i32
  }
  func.func @transform_7(%arg0: i32) -> (i32, i32) {
    %c0_i32 = arith.constant 0 : i32
    %c0_i32_0 = arith.constant 0 : i32
    %c0_i32_1 = arith.constant 0 : i32
    return %c0_i32, %c0_i32_0 : i32, i32
  }
  func.func @transform_8(%arg0: i32) -> (i32, i32) {
    %c0_i32 = arith.constant 0 : i32
    %c0_i32_0 = arith.constant 0 : i32
    %c0_i32_1 = arith.constant 0 : i32
    return %c0_i32, %c0_i32_0 : i32, i32
  }
  func.func @transform_9(%arg0: i32) -> (i32, i32) {
    %c0_i32 = arith.constant 0 : i32
    %c0_i32_0 = arith.constant 0 : i32
    %c0_i32_1 = arith.constant 0 : i32
    return %c0_i32, %c0_i32_0 : i32, i32
  }
  func.func @transform_10(%arg0: i32) -> (i32, i32) {
    %c0_i32 = arith.constant 0 : i32
    %c0_i32_0 = arith.constant 0 : i32
    %c0_i32_1 = arith.constant 0 : i32
    return %c0_i32, %c0_i32_0 : i32, i32
  }
  func.func @transform_11(%arg0: i32) -> (i32, i32, i32) {
    %c0_i32 = arith.constant 0 : i32
    %c0_i32_0 = arith.constant 0 : i32
    %c0_i32_1 = arith.constant 0 : i32
    return %arg0, %c0_i32, %c0_i32_0 : i32, i32, i32
  }
}

</mosaic_0001>

<llo_original>
// kernel: net_forward.1
$region0: #{net_forward.1}
  #allocation0 [shape = 'u32[]', space=smem, size = 0x4, offset = 0x4, fixed_abs, tag = 'smem constant byte address 0x4 - core index']
  #allocation1 [shape = 'u32[144,128]{1,0:T(1,128)}', space=vmem, size = 0x12000, scoped, tag = 'internal scratch']
  #allocation2 [shape = 'f32[232,64]{1,0:T(8,128)}', space=vmem, size = 0x1d000, scoped, tag = 'scratch operand']
  %s0 = inlined_call_operand.vmem [shape: f32[2,784,75], index: 0, kind: input, shape index: {}]
  %s1 = inlined_call_operand.vmem [shape: f32[75,64], index: 1, kind: input, shape index: {}]
  %s2 = inlined_call_operand.vmem [shape: f32[1,64], index: 2, kind: input, shape index: {}]
  %s3 = inlined_call_operand.vmem [shape: f32[1600,64], index: 3, kind: input, shape index: {}]
  %s4 = inlined_call_operand.vmem [shape: f32[1,64], index: 4, kind: input, shape index: {}]
  %s5 = inlined_call_operand.vmem [shape: f32[1024,384], index: 5, kind: input, shape index: {}]
  %s6 = inlined_call_operand.vmem [shape: f32[1,384], index: 6, kind: input, shape index: {}]
  %s7 = inlined_call_operand.vmem [shape: f32[384,192], index: 7, kind: input, shape index: {}]
  %s8 = inlined_call_operand.vmem [shape: f32[1,192], index: 8, kind: input, shape index: {}]
  %s9 = inlined_call_operand.vmem [shape: f32[192,128], index: 9, kind: input, shape index: {}]
  %s10 = inlined_call_operand.vmem [shape: f32[1,128], index: 10, kind: input, shape index: {}]
  %s11 = inlined_call_operand.hbm [shape: f32[2,1,128], index: 11, kind: output, shape index: {}]
  %s12 = sld [smem:[#allocation0]]
  $region77: #{net_forward.1} parent=0
    _
  %s14 = ssub.s32 1, %s12
  %s15 = scalar_select 0, %s14, %s12
  $region1: #{net_forward.1} parent=0
    #allocation3 [shape = 'u8[1024]{0}', space=vmem, size = 0x400, scoped, tag = 'output window, operand 0']
    #allocation4 [shape = 's32[2]{0}', space=sflag, size = 0x8, scoped, tag = 'scoped memory for net_forward.1']
    %16 = vsyncpa [#allocation4], 0
    %s17 = scalar_lea.sflag [#allocation4], 1
    %18 = vsyncpa %s17, 0
    loop: start=0, step=1, limit=4
    $region2: #{net_forward.1} parent=1 // loop_pre_header
      _
    $region3: #{net_forward.1} parent=1 // loop_header
      %s20 = sphi 0, %s24
      %p21 = scmp.ge.s32.totalorder %s20, 4
      %s30 = sphi 0, %s32
      %s33 = sphi 0, %s30
      %s34 = sphi 0, %s33
      %s50 = sphi 0, %s34
      %s54 = sphi 0, %s54
      %s56 = sphi 0, %s54
      %s57 = sphi 0, %s56
      %s71 = sphi 0, %s57
      %s75 = sphi 0, %s75
      %s77 = sphi 0, %s75
      %s78 = sphi 0, %s77
      %s92 = sphi 0, %s78
      %s96 = sphi 0, %s96
      %s98 = sphi 0, %s96
      %s99 = sphi 0, %s98
      %s113 = sphi 0, %s99
      %s117 = sphi 0, %s117
      %s119 = sphi 0, %s117
      %s120 = sphi 0, %s119
      %s134 = sphi 0, %s120
      %s138 = sphi 0, %s138
      %s140 = sphi 0, %s138
      %s141 = sphi 0, %s140
      %s155 = sphi 0, %s141
      %s159 = sphi 0, %s159
      %s161 = sphi 0, %s159
      %s162 = sphi 0, %s161
      %s176 = sphi 0, %s162
      %s180 = sphi 0, %s180
      %s182 = sphi 0, %s180
      %s183 = sphi 0, %s182
      %s197 = sphi 0, %s183
      %s201 = sphi 0, %s201
      %s203 = sphi 0, %s201
      %s204 = sphi 0, %s203
      %s218 = sphi 0, %s204
      %s222 = sphi 0, %s222
      %s224 = sphi 0, %s222
      %s225 = sphi 0, %s224
      %s239 = sphi 0, %s225
      %s243 = sphi 0, %s243
      %s245 = sphi 0, %s243
      %s246 = sphi 0, %s245
      %s260 = sphi 0, %s246
      %s266 = sphi 0, %s268
      %s269 = sphi 0, %s266
      %s270 = sphi 0, %s269
      %s286 = sphi 0, %s270
    $region4: #{net_forward.1} parent=1 // loop_header_branch
      %23 = sbr.rel (%p21) target = $region8
    $region5: #{net_forward.1} parent=1 // loop_body
      %s25 = ssub.s32 %s20, 1
      %s26 = ssub.s32 %s20, 2
      %s27 = sadd.s32 %s20, 1
      %s28 = ssub.s32 %s20, %s27
      %p29 = scmp.eq.s32.totalorder %s28, 0
      %s31 = sadd.s32 %s30, 1
      %s32 = scalar_select %p29, %s30, %s31
      %p35 = pneg %p29
      %p36 = scmp.eq.s32.totalorder %s20, 1
      %p37 = por %p35, %p36
      %p38 = scmp.ne.s32.totalorder %s30, %s33
      %p39 = scmp.eq.s32.totalorder %s20, 0
      %p40 = por %p38, %p39
      %p41 = scmp.ne.s32.totalorder %s30, %s33
      %p42 = scmp.eq.s32.totalorder %s25, 1
      %p43 = por %p41, %p42
      %p44 = scmp.ne.s32.totalorder %s33, %s34
      %p45 = scmp.eq.s32.totalorder %s25, 0
      %p46 = por %p44, %p45
      %p47 = scmp.ne.s32.totalorder %s33, %s34
      %p48 = scmp.eq.s32.totalorder %s26, 1
      %p49 = por %p47, %p48
      %p51 = scmp.ne.s32.totalorder %s34, %s50
      %p52 = scmp.eq.s32.totalorder %s26, 0
      %p53 = por %p51, %p52
      %s55 = sadd.s32 %s54, 1
      %p58 = scmp.eq.s32.totalorder %s20, 1
      %p59 = scmp.ne.s32.totalorder %s54, %s56
      %p60 = scmp.eq.s32.totalorder %s20, 0
      %p61 = por %p59, %p60
      %p62 = scmp.ne.s32.totalorder %s54, %s56
      %p63 = scmp.eq.s32.totalorder %s25, 1
      %p64 = por %p62, %p63
      %p65 = scmp.ne.s32.totalorder %s56, %s57
      %p66 = scmp.eq.s32.totalorder %s25, 0
      %p67 = por %p65, %p66
      %p68 = scmp.ne.s32.totalorder %s56, %s57
      %p69 = scmp.eq.s32.totalorder %s26, 1
      %p70 = por %p68, %p69
      %p72 = scmp.ne.s32.totalorder %s57, %s71
      %p73 = scmp.eq.s32.totalorder %s26, 0
      %p74 = por %p72, %p73
      %s76 = sadd.s32 %s75, 1
      %p79 = scmp.eq.s32.totalorder %s20, 1
      %p80 = scmp.ne.s32.totalorder %s75, %s77
      %p81 = scmp.eq.s32.totalorder %s20, 0
      %p82 = por %p80, %p81
      %p83 = scmp.ne.s32.totalorder %s75, %s77
      %p84 = scmp.eq.s32.totalorder %s25, 1
      %p85 = por %p83, %p84
      %p86 = scmp.ne.s32.totalorder %s77, %s78
      %p87 = scmp.eq.s32.totalorder %s25, 0
      %p88 = por %p86, %p87
      %p89 = scmp.ne.s32.totalorder %s77, %s78
      %p90 = scmp.eq.s32.totalorder %s26, 1
      %p91 = por %p89, %p90
      %p93 = scmp.ne.s32.totalorder %s78, %s92
      %p94 = scmp.eq.s32.totalorder %s26, 0
      %p95 = por %p93, %p94
      %s97 = sadd.s32 %s96, 1
      %p100 = scmp.eq.s32.totalorder %s20, 1
      %p101 = scmp.ne.s32.totalorder %s96, %s98
      %p102 = scmp.eq.s32.totalorder %s20, 0
      %p103 = por %p101, %p102
      %p104 = scmp.ne.s32.totalorder %s96, %s98
      %p105 = scmp.eq.s32.totalorder %s25, 1
      %p106 = por %p104, %p105
      %p107 = scmp.ne.s32.totalorder %s98, %s99
      %p108 = scmp.eq.s32.totalorder %s25, 0
      %p109 = por %p107, %p108
      %p110 = scmp.ne.s32.totalorder %s98, %s99
      %p111 = scmp.eq.s32.totalorder %s26, 1
      %p112 = por %p110, %p111
      %p114 = scmp.ne.s32.totalorder %s99, %s113
      %p115 = scmp.eq.s32.totalorder %s26, 0
      %p116 = por %p114, %p115
      %s118 = sadd.s32 %s117, 1
      %p121 = scmp.eq.s32.totalorder %s20, 1
      %p122 = scmp.ne.s32.totalorder %s117, %s119
      %p123 = scmp.eq.s32.totalorder %s20, 0
      %p124 = por %p122, %p123
      %p125 = scmp.ne.s32.totalorder %s117, %s119
      %p126 = scmp.eq.s32.totalorder %s25, 1
      %p127 = por %p125, %p126
      %p128 = scmp.ne.s32.totalorder %s119, %s120
      %p129 = scmp.eq.s32.totalorder %s25, 0
      %p130 = por %p128, %p129
      %p131 = scmp.ne.s32.totalorder %s119, %s120
      %p132 = scmp.eq.s32.totalorder %s26, 1
      %p133 = por %p131, %p132
      %p135 = scmp.ne.s32.totalorder %s120, %s134
      %p136 = scmp.eq.s32.totalorder %s26, 0
      %p137 = por %p135, %p136
      %s139 = sadd.s32 %s138, 1
      %p142 = scmp.eq.s32.totalorder %s20, 1
      %p143 = scmp.ne.s32.totalorder %s138, %s140
      %p144 = scmp.eq.s32.totalorder %s20, 0
      %p145 = por %p143, %p144
      %p146 = scmp.ne.s32.totalorder %s138, %s140
      %p147 = scmp.eq.s32.totalorder %s25, 1
      %p148 = por %p146, %p147
      %p149 = scmp.ne.s32.totalorder %s140, %s141
      %p150 = scmp.eq.s32.totalorder %s25, 0
      %p151 = por %p149, %p150
      %p152 = scmp.ne.s32.totalorder %s140, %s141
      %p153 = scmp.eq.s32.totalorder %s26, 1
      %p154 = por %p152, %p153
      %p156 = scmp.ne.s32.totalorder %s141, %s155
      %p157 = scmp.eq.s32.totalorder %s26, 0
      %p158 = por %p156, %p157
      %s160 = sadd.s32 %s159, 1
      %p163 = scmp.eq.s32.totalorder %s20, 1
      %p164 = scmp.ne.s32.totalorder %s159, %s161
      %p165 = scmp.eq.s32.totalorder %s20, 0
      %p166 = por %p164, %p165
      %p167 = scmp.ne.s32.totalorder %s159, %s161
      %p168 = scmp.eq.s32.totalorder %s25, 1
      %p169 = por %p167, %p168
      %p170 = scmp.ne.s32.totalorder %s161, %s162
      %p171 = scmp.eq.s32.totalorder %s25, 0
      %p172 = por %p170, %p171
      %p173 = scmp.ne.s32.totalorder %s161, %s162
      %p174 = scmp.eq.s32.totalorder %s26, 1
      %p175 = por %p173, %p174
      %p177 = scmp.ne.s32.totalorder %s162, %s176
      %p178 = scmp.eq.s32.totalorder %s26, 0
      %p179 = por %p177, %p178
      %s181 = sadd.s32 %s180, 1
      %p184 = scmp.eq.s32.totalorder %s20, 1
      %p185 = scmp.ne.s32.totalorder %s180, %s182
      %p186 = scmp.eq.s32.totalorder %s20, 0
      %p187 = por %p185, %p186
      %p188 = scmp.ne.s32.totalorder %s180, %s182
      %p189 = scmp.eq.s32.totalorder %s25, 1
      %p190 = por %p188, %p189
      %p191 = scmp.ne.s32.totalorder %s182, %s183
      %p192 = scmp.eq.s32.totalorder %s25, 0
      %p193 = por %p191, %p192
      %p194 = scmp.ne.s32.totalorder %s182, %s183
      %p195 = scmp.eq.s32.totalorder %s26, 1
      %p196 = por %p194, %p195
      %p198 = scmp.ne.s32.totalorder %s183, %s197
      %p199 = scmp.eq.s32.totalorder %s26, 0
      %p200 = por %p198, %p199
      %s202 = sadd.s32 %s201, 1
      %p205 = scmp.eq.s32.totalorder %s20, 1
      %p206 = scmp.ne.s32.totalorder %s201, %s203
      %p207 = scmp.eq.s32.totalorder %s20, 0
      %p208 = por %p206, %p207
      %p209 = scmp.ne.s32.totalorder %s201, %s203
      %p210 = scmp.eq.s32.totalorder %s25, 1
      %p211 = por %p209, %p210
      %p212 = scmp.ne.s32.totalorder %s203, %s204
      %p213 = scmp.eq.s32.totalorder %s25, 0
      %p214 = por %p212, %p213
      %p215 = scmp.ne.s32.totalorder %s203, %s204
      %p216 = scmp.eq.s32.totalorder %s26, 1
      %p217 = por %p215, %p216
      %p219 = scmp.ne.s32.totalorder %s204, %s218
      %p220 = scmp.eq.s32.totalorder %s26, 0
      %p221 = por %p219, %p220
      %s223 = sadd.s32 %s222, 1
      %p226 = scmp.eq.s32.totalorder %s20, 1
      %p227 = scmp.ne.s32.totalorder %s222, %s224
      %p228 = scmp.eq.s32.totalorder %s20, 0
      %p229 = por %p227, %p228
      %p230 = scmp.ne.s32.totalorder %s222, %s224
      %p231 = scmp.eq.s32.totalorder %s25, 1
      %p232 = por %p230, %p231
      %p233 = scmp.ne.s32.totalorder %s224, %s225
      %p234 = scmp.eq.s32.totalorder %s25, 0
      %p235 = por %p233, %p234
      %p236 = scmp.ne.s32.totalorder %s224, %s225
      %p237 = scmp.eq.s32.totalorder %s26, 1
      %p238 = por %p236, %p237
      %p240 = scmp.ne.s32.totalorder %s225, %s239
      %p241 = scmp.eq.s32.totalorder %s26, 0
      %p242 = por %p240, %p241
      %s244 = sadd.s32 %s243, 1
      %p247 = scmp.eq.s32.totalorder %s20, 1
      %p248 = scmp.ne.s32.totalorder %s243, %s245
      %p249 = scmp.eq.s32.totalorder %s20, 0
      %p250 = por %p248, %p249
      %p251 = scmp.ne.s32.totalorder %s243, %s245
      %p252 = scmp.eq.s32.totalorder %s25, 1
      %p253 = por %p251, %p252
      %p254 = scmp.ne.s32.totalorder %s245, %s246
      %p255 = scmp.eq.s32.totalorder %s25, 0
      %p256 = por %p254, %p255
      %p257 = scmp.ne.s32.totalorder %s245, %s246
      %p258 = scmp.eq.s32.totalorder %s26, 1
      %p259 = por %p257, %p258
      %p261 = scmp.ne.s32.totalorder %s246, %s260
      %p262 = scmp.eq.s32.totalorder %s26, 0
      %p263 = por %p261, %p262
      %s264 = ssub.s32 %s20, %s27
      %p265 = scmp.eq.s32.totalorder %s264, 0
      %s267 = sadd.s32 %s266, 1
      %s268 = scalar_select %p265, %s266, %s267
      %p271 = pneg %p265
      %p272 = scmp.eq.s32.totalorder %s20, 1
      %p273 = por %p271, %p272
      %p274 = scmp.ne.s32.totalorder %s266, %s269
      %p275 = scmp.eq.s32.totalorder %s20, 0
      %p276 = por %p274, %p275
      %p277 = scmp.ne.s32.totalorder %s266, %s269
      %p278 = scmp.eq.s32.totalorder %s25, 1
      %p279 = por %p277, %p278
      %p280 = scmp.ne.s32.totalorder %s269, %s270
      %p281 = scmp.eq.s32.totalorder %s25, 0
      %p282 = por %p280, %p281
      %p283 = scmp.ne.s32.totalorder %s269, %s270
      %p284 = scmp.eq.s32.totalorder %s26, 1
      %p285 = por %p283, %p284
      %p287 = scmp.ne.s32.totalorder %s270, %s286
      %p288 = scmp.eq.s32.totalorder %s26, 0
      %p289 = por %p287, %p288
      %p290 = scmp.le.s32.totalorder 1, %s20
      %p291 = scmp.lt.s32.totalorder %s20, 3
      %p292 = pnand %p290, %p291
      %p293 = pneg %p292
      // Predicated region
      $region9: #{net_forward.1} parent=5 // pred_check
        _
      $region10: #{net_forward.1} parent=5 // pred_check_branch
        %295 = sbr.rel (%p292) target = $region12
      $region11: #{net_forward.1} parent=5 // pred_region
        %s296 = ssub.s32 %s20, 1
        // Predicated region
        $region13: #{net_forward.1} parent=11 // pred_check
          %p297 = pneg %p67
        $region14: #{net_forward.1} parent=11 // pred_check_branch
          %299 = sbr.rel (%p297) target = $region16
        $region15: #{net_forward.1} parent=11 // pred_region
          _
        $region16: #{net_forward.1} parent=11 // pred_fallthru
          _
        // Predicated region
        $region17: #{net_forward.1} parent=11 // pred_check
          %p300 = pneg %p88
        $region18: #{net_forward.1} parent=11 // pred_check_branch
          %302 = sbr.rel (%p300) target = $region20
        $region19: #{net_forward.1} parent=11 // pred_region
          _
        $region20: #{net_forward.1} parent=11 // pred_fallthru
          _
        // Predicated region
        $region21: #{net_forward.1} parent=11 // pred_check
          %p303 = pneg %p109
        $region22: #{net_forward.1} parent=11 // pred_check_branch
          %305 = sbr.rel (%p303) target = $region24
        $region23: #{net_forward.1} parent=11 // pred_region
          _
        $region24: #{net_forward.1} parent=11 // pred_fallthru
          _
        // Predicated region
        $region25: #{net_forward.1} parent=11 // pred_check
          %p306 = pneg %p130
        $region26: #{net_forward.1} parent=11 // pred_check_branch
          %308 = sbr.rel (%p306) target = $region28
        $region27: #{net_forward.1} parent=11 // pred_region
          _
        $region28: #{net_forward.1} parent=11 // pred_fallthru
          _
        // Predicated region
        $region29: #{net_forward.1} parent=11 // pred_check
          %p309 = pneg %p151
        $region30: #{net_forward.1} parent=11 // pred_check_branch
          %311 = sbr.rel (%p309) target = $region32
        $region31: #{net_forward.1} parent=11 // pred_region
          _
        $region32: #{net_forward.1} parent=11 // pred_fallthru
          _
        // Predicated region
        $region33: #{net_forward.1} parent=11 // pred_check
          %p312 = pneg %p172
        $region34: #{net_forward.1} parent=11 // pred_check_branch
          %314 = sbr.rel (%p312) target = $region36
        $region35: #{net_forward.1} parent=11 // pred_region
          _
        $region36: #{net_forward.1} parent=11 // pred_fallthru
          _
        // Predicated region
        $region37: #{net_forward.1} parent=11 // pred_check
          %p315 = pneg %p193
        $region38: #{net_forward.1} parent=11 // pred_check_branch
          %317 = sbr.rel (%p315) target = $region40
        $region39: #{net_forward.1} parent=11 // pred_region
          _
        $region40: #{net_forward.1} parent=11 // pred_fallthru
          _
        // Predicated region
        $region41: #{net_forward.1} parent=11 // pred_check
          %p318 = pneg %p214
        $region42: #{net_forward.1} parent=11 // pred_check_branch
          %320 = sbr.rel (%p318) target = $region44
        $region43: #{net_forward.1} parent=11 // pred_region
          _
        $region44: #{net_forward.1} parent=11 // pred_fallthru
          _
        // Predicated region
        $region45: #{net_forward.1} parent=11 // pred_check
          %p321 = pneg %p235
        $region46: #{net_forward.1} parent=11 // pred_check_branch
          %323 = sbr.rel (%p321) target = $region48
        $region47: #{net_forward.1} parent=11 // pred_region
          _
        $region48: #{net_forward.1} parent=11 // pred_fallthru
          _
        // Predicated region
        $region49: #{net_forward.1} parent=11 // pred_check
          %p324 = pneg %p256
        $region50: #{net_forward.1} parent=11 // pred_check_branch
          %326 = sbr.rel (%p324) target = $region52
        $region51: #{net_forward.1} parent=11 // pred_region
          _
        $region52: #{net_forward.1} parent=11 // pred_fallthru
          _
      $region12: #{net_forward.1} parent=5 // pred_fallthru
        _
      %p327 = scmp.lt.s32.totalorder %s20, 2
      // Predicated region
      $region53: #{net_forward.1} parent=5 // pred_check
        %p328 = pneg %p327
      $region54: #{net_forward.1} parent=5 // pred_check_branch
        %330 = sbr.rel (%p328) target = $region56
      $region55: #{net_forward.1} parent=5 // pred_region
        // Predicated region
        $region57: #{net_forward.1} parent=55 // pred_check
          %p331 = pneg %p40
        $region58: #{net_forward.1} parent=55 // pred_check_branch
          %333 = sbr.rel (%p331) target = $region60
        $region59: #{net_forward.1} parent=55 // pred_region
          %p334 = scmp.lt.s32.totalorder %s20, 1
          %s335 = scalar_select %p334, %s20, 1
          %s336 = smul.addr %s335, 98
          %s337 = smul.addr %s336, 8
          %s338 = scalar_lea.vmem %s0, %s337
        $region60: #{net_forward.1} parent=55 // pred_fallthru
          _
      $region56: #{net_forward.1} parent=5 // pred_fallthru
        _
      %p339 = scmp.le.s32.totalorder 1, %s20
      %p340 = scmp.lt.s32.totalorder %s20, 3
      %p341 = pnand %p339, %p340
      %p342 = pneg %p341
      // Predicated region
      $region61: #{net_forward.1} parent=5 // pred_check
        _
      $region62: #{net_forward.1} parent=5 // pred_check_branch
        %344 = sbr.rel (%p341) target = $region64
      $region63: #{net_forward.1} parent=5 // pred_region
        %s345 = ssub.s32 %s20, 1
        %p346 = scmp.lt.s32.totalorder %s25, 1
        %s347 = scalar_select %p346, %s25, 1
        %s348 = smul.addr %s347, 98
        %s349 = smul.addr %s348, 8
        %s350 = scalar_lea.vmem %s0, %s349
        %p351 = pneg %p46
        %p352 = pneg %p43
        %p353 = pneg %p67
        %p354 = pneg %p64
        %p355 = pneg %p88
        %p356 = pneg %p85
        %p357 = pneg %p109
        %p358 = pneg %p106
        %p359 = pneg %p130
        %p360 = pneg %p127
        %p361 = pneg %p151
        %p362 = pneg %p148
        %p363 = pneg %p172
        %p364 = pneg %p169
        %p365 = pneg %p193
        %p366 = pneg %p190
        %p367 = pneg %p214
        %p368 = pneg %p211
        %p369 = pneg %p235
        %p370 = pneg %p232
        %p371 = pneg %p256
        %p372 = pneg %p253
        %p373 = pneg %p282
        %p374 = pneg %p279
        %s375 = sand.u32 %s269, 1
        %s376 = scalar_lea.sflag [#allocation4], %s375
        %s377 = sand.u32 %s269, 1
        %s378 = scalar_lea.vmem [#allocation3], %s377
        %p379 = scmp.lt.s32.totalorder %s25, 1
        %s380 = scalar_select %p379, %s25, 1
        %s381 = smul.addr %s380, 98
        %s382 = smul.addr %s381, 8
        %s383 = scalar_lea.vmem %s0, %s382
        %v384 = vld [vmem:[%s383] sm:$0xff]
        %v385 = vld [vmem:[%s383 + $0x8] sm:$0xff]
        %v386 = vld [vmem:[%s383 + $0x10] sm:$0xff]
        %v387 = vld [vmem:[%s383 + $0x18] sm:$0xff]
        %v388 = vld [vmem:[%s383 + $0x20] sm:$0xff]
        %v389 = vld [vmem:[%s383 + $0x28] sm:$0xff]
        %v390 = vld [vmem:[%s383 + $0x30] sm:$0xff]
        %v391 = vld [vmem:[%s383 + $0x38] sm:$0xff]
        %v392 = vld [vmem:[%s383 + $0x40] sm:$0xff]
        %v393 = vld [vmem:[%s383 + $0x48] sm:$0xff]
        %v394 = vld [vmem:[%s383 + $0x50] sm:$0xff]
        %v395 = vld [vmem:[%s383 + $0x58] sm:$0xff]
        %v396 = vld [vmem:[%s383 + $0x60] sm:$0xff]
        %v397 = vld [vmem:[%s383 + $0x68] sm:$0xff]
        %v398 = vld [vmem:[%s383 + $0x70] sm:$0xff]
        %v399 = vld [vmem:[%s383 + $0x78] sm:$0xff]
        %v400 = vld [vmem:[%s383 + $0x80] sm:$0xff]
        %v401 = vld [vmem:[%s383 + $0x88] sm:$0xff]
        %v402 = vld [vmem:[%s383 + $0x90] sm:$0xff]
        %v403 = vld [vmem:[%s383 + $0x98] sm:$0xff]
        %v404 = vld [vmem:[%s383 + $0xa0] sm:$0xff]
        %v405 = vld [vmem:[%s383 + $0xa8] sm:$0xff]
        %v406 = vld [vmem:[%s383 + $0xb0] sm:$0xff]
        %v407 = vld [vmem:[%s383 + $0xb8] sm:$0xff]
        %v408 = vld [vmem:[%s383 + $0xc0] sm:$0xff]
        %v409 = vld [vmem:[%s383 + $0xc8] sm:$0xff]
        %v410 = vld [vmem:[%s383 + $0xd0] sm:$0xff]
        %v411 = vld [vmem:[%s383 + $0xd8] sm:$0xff]
        %v412 = vld [vmem:[%s383 + $0xe0] sm:$0xff]
        %v413 = vld [vmem:[%s383 + $0xe8] sm:$0xff]
        %v414 = vld [vmem:[%s383 + $0xf0] sm:$0xff]
        %v415 = vld [vmem:[%s383 + $0xf8] sm:$0xff]
        %v416 = vld [vmem:[%s383 + $0x100] sm:$0xff]
        %v417 = vld [vmem:[%s383 + $0x108] sm:$0xff]
        %v418 = vld [vmem:[%s383 + $0x110] sm:$0xff]
        %v419 = vld [vmem:[%s383 + $0x118] sm:$0xff]
        %v420 = vld [vmem:[%s383 + $0x120] sm:$0xff]
        %v421 = vld [vmem:[%s383 + $0x128] sm:$0xff]
        %v422 = vld [vmem:[%s383 + $0x130] sm:$0xff]
        %v423 = vld [vmem:[%s383 + $0x138] sm:$0xff]
        %v424 = vld [vmem:[%s383 + $0x140] sm:$0xff]
        %v425 = vld [vmem:[%s383 + $0x148] sm:$0xff]
        %v426 = vld [vmem:[%s383 + $0x150] sm:$0xff]
        %v427 = vld [vmem:[%s383 + $0x158] sm:$0xff]
        %v428 = vld [vmem:[%s383 + $0x160] sm:$0xff]
        %v429 = vld [vmem:[%s383 + $0x168] sm:$0xff]
        %v430 = vld [vmem:[%s383 + $0x170] sm:$0xff]
        %v431 = vld [vmem:[%s383 + $0x178] sm:$0xff]
        %v432 = vld [vmem:[%s383 + $0x180] sm:$0xff]
        %v433 = vld [vmem:[%s383 + $0x188] sm:$0xff]
        %v434 = vld [vmem:[%s383 + $0x190] sm:$0xff]
        %v435 = vld [vmem:[%s383 + $0x198] sm:$0xff]
        %v436 = vld [vmem:[%s383 + $0x1a0] sm:$0xff]
        %v437 = vld [vmem:[%s383 + $0x1a8] sm:$0xff]
        %v438 = vld [vmem:[%s383 + $0x1b0] sm:$0xff]
        %v439 = vld [vmem:[%s383 + $0x1b8] sm:$0xff]
        %v440 = vld [vmem:[%s383 + $0x1c0] sm:$0xff]
        %v441 = vld [vmem:[%s383 + $0x1c8] sm:$0xff]
        %v442 = vld [vmem:[%s383 + $0x1d0] sm:$0xff]
        %v443 = vld [vmem:[%s383 + $0x1d8] sm:$0xff]
        %v444 = vld [vmem:[%s383 + $0x1e0] sm:$0xff]
        %v445 = vld [vmem:[%s383 + $0x1e8] sm:$0xff]
        %v446 = vld [vmem:[%s383 + $0x1f0] sm:$0xff]
        %v447 = vld [vmem:[%s383 + $0x1f8] sm:$0xff]
        %v448 = vld [vmem:[%s383 + $0x200] sm:$0xff]
        %v449 = vld [vmem:[%s383 + $0x208] sm:$0xff]
        %v450 = vld [vmem:[%s383 + $0x210] sm:$0xff]
        %v451 = vld [vmem:[%s383 + $0x218] sm:$0xff]
        %v452 = vld [vmem:[%s383 + $0x220] sm:$0xff]
        %v453 = vld [vmem:[%s383 + $0x228] sm:$0xff]
        %v454 = vld [vmem:[%s383 + $0x230] sm:$0xff]
        %v455 = vld [vmem:[%s383 + $0x238] sm:$0xff]
        %v456 = vld [vmem:[%s383 + $0x240] sm:$0xff]
        %v457 = vld [vmem:[%s383 + $0x248] sm:$0xff]
        %v458 = vld [vmem:[%s383 + $0x250] sm:$0xff]
        %v459 = vld [vmem:[%s383 + $0x258] sm:$0xff]
        %v460 = vld [vmem:[%s383 + $0x260] sm:$0xff]
        %v461 = vld [vmem:[%s383 + $0x268] sm:$0xff]
        %v462 = vld [vmem:[%s383 + $0x270] sm:$0xff]
        %v463 = vld [vmem:[%s383 + $0x278] sm:$0xff]
        %v464 = vld [vmem:[%s383 + $0x280] sm:$0xff]
        %v465 = vld [vmem:[%s383 + $0x288] sm:$0xff]
        %v466 = vld [vmem:[%s383 + $0x290] sm:$0xff]
        %v467 = vld [vmem:[%s383 + $0x298] sm:$0xff]
        %v468 = vld [vmem:[%s383 + $0x2a0] sm:$0xff]
        %v469 = vld [vmem:[%s383 + $0x2a8] sm:$0xff]
        %v470 = vld [vmem:[%s383 + $0x2b0] sm:$0xff]
        %v471 = vld [vmem:[%s383 + $0x2b8] sm:$0xff]
        %v472 = vld [vmem:[%s383 + $0x2c0] sm:$0xff]
        %v473 = vld [vmem:[%s383 + $0x2c8] sm:$0xff]
        %v474 = vld [vmem:[%s383 + $0x2d0] sm:$0xff]
        %v475 = vld [vmem:[%s383 + $0x2d8] sm:$0xff]
        %v476 = vld [vmem:[%s383 + $0x2e0] sm:$0xff]
        %v477 = vld [vmem:[%s383 + $0x2e8] sm:$0xff]
        %v478 = vld [vmem:[%s383 + $0x2f0] sm:$0xff]
        %v479 = vld [vmem:[%s383 + $0x2f8] sm:$0xff]
        %v480 = vld [vmem:[%s383 + $0x300] sm:$0xff]
        %v481 = vld [vmem:[%s383 + $0x308] sm:$0xff]
        %v482 = vld [vmem:[%s1] sm:$0xff]
        %v483 = vld [vmem:[%s1 + $0x8] sm:$0xff]
        %v484 = vld [vmem:[%s1 + $0x10] sm:$0xff]
        %v485 = vld [vmem:[%s1 + $0x18] sm:$0xff]
        %v486 = vld [vmem:[%s1 + $0x20] sm:$0xff]
        %v487 = vld [vmem:[%s1 + $0x28] sm:$0xff]
        %v488 = vld [vmem:[%s1 + $0x30] sm:$0xff]
        %v489 = vld [vmem:[%s1 + $0x38] sm:$0xff]
        %v490 = vld [vmem:[%s1 + $0x40] sm:$0xff]
        %v491 = vld [vmem:[%s1 + $0x48] sm:$0x7]
        %v492 = vld [vmem:[%s2] sm:$0x1]
        %v494 = vlaneseq
        %v495 = vshrl.u32 %v494, 7
        %v496 = vsub.s32 0, %v495
        %v497 = vrot.slane %v492, %v496
        %vm499 = vcmask 613376
        %v501 = vsel %vm499, %v384, 0
        %v504 = vsel %vm499, %v385, 0
        %v507 = vsel %vm499, %v386, 0
        %v510 = vsel %vm499, %v387, 0
        %v513 = vsel %vm499, %v388, 0
        %v516 = vsel %vm499, %v389, 0
        %v519 = vsel %vm499, %v390, 0
        %v522 = vsel %vm499, %v391, 0
        %v525 = vsel %vm499, %v392, 0
        %v528 = vsel %vm499, %v393, 0
        %v531 = vsel %vm499, %v394, 0
        %v534 = vsel %vm499, %v395, 0
        %v537 = vsel %vm499, %v396, 0
        %v540 = vsel %vm499, %v397, 0
        %v543 = vsel %vm499, %v398, 0
        %v546 = vsel %vm499, %v399, 0
        %v549 = vsel %vm499, %v400, 0
        %v552 = vsel %vm499, %v401, 0
        %v555 = vsel %vm499, %v402, 0
        %v558 = vsel %vm499, %v403, 0
        %v561 = vsel %vm499, %v404, 0
        %v564 = vsel %vm499, %v405, 0
        %v567 = vsel %vm499, %v406, 0
        %v570 = vsel %vm499, %v407, 0
        %v573 = vsel %vm499, %v408, 0
        %v576 = vsel %vm499, %v409, 0
        %v579 = vsel %vm499, %v410, 0
        %v582 = vsel %vm499, %v411, 0
        %v585 = vsel %vm499, %v412, 0
        %v588 = vsel %vm499, %v413, 0
        %v591 = vsel %vm499, %v414, 0
        %v594 = vsel %vm499, %v415, 0
        %v597 = vsel %vm499, %v416, 0
        %v600 = vsel %vm499, %v417, 0
        %v603 = vsel %vm499, %v418, 0
        %v606 = vsel %vm499, %v419, 0
        %v609 = vsel %vm499, %v420, 0
        %v612 = vsel %vm499, %v421, 0
        %v615 = vsel %vm499, %v422, 0
        %v618 = vsel %vm499, %v423, 0
        %v621 = vsel %vm499, %v424, 0
        %v624 = vsel %vm499, %v425, 0
        %v627 = vsel %vm499, %v426, 0
        %v630 = vsel %vm499, %v427, 0
        %v633 = vsel %vm499, %v428, 0
        %v636 = vsel %vm499, %v429, 0
        %v639 = vsel %vm499, %v430, 0
        %v642 = vsel %vm499, %v431, 0
        %v645 = vsel %vm499, %v432, 0
        %v648 = vsel %vm499, %v433, 0
        %v651 = vsel %vm499, %v434, 0
        %v654 = vsel %vm499, %v435, 0
        %v657 = vsel %vm499, %v436, 0
        %v660 = vsel %vm499, %v437, 0
        %v663 = vsel %vm499, %v438, 0
        %v666 = vsel %vm499, %v439, 0
        %v669 = vsel %vm499, %v440, 0
        %v672 = vsel %vm499, %v441, 0
        %v675 = vsel %vm499, %v442, 0
        %v678 = vsel %vm499, %v443, 0
        %v681 = vsel %vm499, %v444, 0
        %v684 = vsel %vm499, %v445, 0
        %v687 = vsel %vm499, %v446, 0
        %v690 = vsel %vm499, %v447, 0
        %v693 = vsel %vm499, %v448, 0
        %v696 = vsel %vm499, %v449, 0
        %v699 = vsel %vm499, %v450, 0
        %v702 = vsel %vm499, %v451, 0
        %v705 = vsel %vm499, %v452, 0
        %v708 = vsel %vm499, %v453, 0
        %v711 = vsel %vm499, %v454, 0
        %v714 = vsel %vm499, %v455, 0
        %v717 = vsel %vm499, %v456, 0
        %v720 = vsel %vm499, %v457, 0
        %v723 = vsel %vm499, %v458, 0
        %v726 = vsel %vm499, %v459, 0
        %v729 = vsel %vm499, %v460, 0
        %v732 = vsel %vm499, %v461, 0
        %v735 = vsel %vm499, %v462, 0
        %v738 = vsel %vm499, %v463, 0
        %v741 = vsel %vm499, %v464, 0
        %v744 = vsel %vm499, %v465, 0
        %v747 = vsel %vm499, %v466, 0
        %v750 = vsel %vm499, %v467, 0
        %v753 = vsel %vm499, %v468, 0
        %v756 = vsel %vm499, %v469, 0
        %v759 = vsel %vm499, %v470, 0
        %v762 = vsel %vm499, %v471, 0
        %v765 = vsel %vm499, %v472, 0
        %v768 = vsel %vm499, %v473, 0
        %v771 = vsel %vm499, %v474, 0
        %v774 = vsel %vm499, %v475, 0
        %v777 = vsel %vm499, %v476, 0
        %v780 = vsel %vm499, %v477, 0
        %v783 = vsel %vm499, %v478, 0
        %v786 = vsel %vm499, %v479, 0
        %v789 = vsel %vm499, %v480, 0
        %v792 = vsel %vm499, %v481, 0
        %vm794 = vcmask 1042432
        %v796 = vsel %vm794, %v491, 0
        %798 = vmatprep.subr.mxu0 0.0
        %799 = vmatpush1.msra.mxu0 %v482
        %800 = vmatprep.subr.mxu0 0.0
        %801 = vmatpush1.msra.mxu0 %v483
        %802 = vmatprep.subr.mxu0 0.0
        %803 = vmatpush1.msra.mxu0 %v484
        %804 = vmatprep.subr.mxu0 0.0
        %805 = vmatpush1.msra.mxu0 %v485
        %806 = vmatprep.subr.mxu0 0.0
        %807 = vmatpush1.msra.mxu0 %v486
        %808 = vmatprep.subr.mxu0 0.0
        %809 = vmatpush1.msra.mxu0 %v487
        %810 = vmatprep.subr.mxu0 0.0
        %811 = vmatpush1.msra.mxu0 %v488
        %812 = vmatprep.subr.mxu0 0.0
        %813 = vmatpush1.msra.mxu0 %v489
        %814 = vmatprep.subr.mxu0 0.0
        %815 = vmatpush1.msra.mxu0 %v490
        %816 = vmatprep.subr.mxu0 0.0
        %817 = vmatpush1.msra.mxu0 %v796
        %818 = vmatprep.subr.mxu0 0.0
        %819 = vmatpush1.msra.mxu0 0.0
        %820 = vmatprep.subr.mxu0 0.0
        %821 = vmatpush1.msra.mxu0 0.0
        %822 = vmatprep.subr.mxu0 0.0
        %823 = vmatpush1.msra.mxu0 0.0
        %824 = vmatprep.subr.mxu0 0.0
        %825 = vmatpush1.msra.mxu0 0.0
        %826 = vmatprep.subr.mxu0 0.0
        %827 = vmatpush1.msra.mxu0 0.0
        %828 = vmatprep.subr.mxu0 0.0
        %829 = vmatpush1.msra.mxu0 0.0
        %830 = vmatprep.subr.mxu0 0.0
        %831 = vmatpush1.msra.mxu0 0.0
        %832 = vmatprep.subr.mxu0 0.0
        %833 = vmatpush1.msra.mxu0 0.0
        %834 = vmatprep.subr.mxu0 0.0
        %835 = vmatpush1.msra.mxu0 0.0
        %836 = vmatprep.subr.mxu0 0.0
        %837 = vmatpush1.msra.mxu0 0.0
        %838 = vmatprep.subr.mxu0 0.0
        %839 = vmatpush1.msra.mxu0 0.0
        %840 = vmatprep.subr.mxu0 0.0
        %841 = vmatpush1.msra.mxu0 0.0
        %842 = vmatprep.subr.mxu0 0.0
        %843 = vmatpush1.msra.mxu0 0.0
        %844 = vmatprep.subr.mxu0 0.0
        %845 = vmatpush1.msra.mxu0 0.0
        %846 = vmatprep.subr.mxu0 0.0
        %847 = vmatpush1.msra.mxu0 0.0
        %848 = vmatprep.subr.mxu0 0.0
        %849 = vmatpush1.msra.mxu0 0.0
        %850 = vmatprep.subr.mxu0 0.0
        %851 = vmatpush1.msra.mxu0 0.0
        %852 = vmatprep.subr.mxu0 0.0
        %853 = vmatpush1.msra.mxu0 0.0
        %854 = vmatprep.subr.mxu0 0.0
        %855 = vmatpush1.msra.mxu0 0.0
        %856 = vmatprep.subr.mxu0 0.0
        %857 = vmatpush1.msra.mxu0 0.0
        %858 = vmatprep.subr.mxu0 0.0
        %859 = vmatpush1.msra.mxu0 0.0
        %860 = vmatprep.subr.mxu0 0.0
        %861 = vmatpush1.msra.mxu0 0.0
        %862 = vmatprep.mubr.f32.mxu0 0.0
        %863 = vmatmul.mubr.f32.gmra.mrb[0].mxu0 %v501
        %v864 = vpop.f32.mrb[0].mxu0
        %v865 = vadd.f32 %v497, %v864
        %v866 = vpop.f32.mrb[0].mxu0
        %867 = vmatprep.mubr.f32.mxu0 0.0
        %868 = vmatmul.mubr.f32.gmra.mrb[0].mxu0 %v504
        %v869 = vpop.f32.mrb[0].mxu0
        %v870 = vadd.f32 %v497, %v869
        %v871 = vpop.f32.mrb[0].mxu0
        %872 = vmatprep.mubr.f32.mxu0 0.0
        %873 = vmatmul.mubr.f32.gmra.mrb[0].mxu0 %v507
        %v874 = vpop.f32.mrb[0].mxu0
        %v875 = vadd.f32 %v497, %v874
        %v876 = vpop.f32.mrb[0].mxu0
        %877 = vmatprep.mubr.f32.mxu0 0.0
        %878 = vmatmul.mubr.f32.gmra.mrb[0].mxu0 %v510
        %v879 = vpop.f32.mrb[0].mxu0
        %v880 = vadd.f32 %v497, %v879
        %v881 = vpop.f32.mrb[0].mxu0
        %882 = vmatprep.mubr.f32.mxu0 0.0
        %883 = vmatmul.mubr.f32.gmra.mrb[0].mxu0 %v513
        %v884 = vpop.f32.mrb[0].mxu0
        %v885 = vadd.f32 %v497, %v884
        %v886 = vpop.f32.mrb[0].mxu0
        %887 = vmatprep.mubr.f32.mxu0 0.0
        %888 = vmatmul.mubr.f32.gmra.mrb[0].mxu0 %v516
        %v889 = vpop.f32.mrb[0].mxu0
        %v890 = vadd.f32 %v497, %v889
        %v891 = vpop.f32.mrb[0].mxu0
        %892 = vmatprep.mubr.f32.mxu0 0.0
        %893 = vmatmul.mubr.f32.gmra.mrb[0].mxu0 %v519
        %v894 = vpop.f32.mrb[0].mxu0
        %v895 = vadd.f32 %v497, %v894
        %v896 = vpop.f32.mrb[0].mxu0
        %897 = vmatprep.mubr.f32.mxu0 0.0
        %898 = vmatmul.mubr.f32.gmra.mrb[0].mxu0 %v522
        %v899 = vpop.f32.mrb[0].mxu0
        %v900 = vadd.f32 %v497, %v899
        %v901 = vpop.f32.mrb[0].mxu0
        %902 = vmatprep.mubr.f32.mxu0 0.0
        %903 = vmatmul.mubr.f32.gmra.mrb[0].mxu0 %v525
        %v904 = vpop.f32.mrb[0].mxu0
        %v905 = vadd.f32 %v497, %v904
        %v906 = vpop.f32.mrb[0].mxu0
        %907 = vmatprep.mubr.f32.mxu0 0.0
        %908 = vmatmul.mubr.f32.gmra.mrb[0].mxu0 %v528
        %v909 = vpop.f32.mrb[0].mxu0
        %v910 = vadd.f32 %v497, %v909
        %v911 = vpop.f32.mrb[0].mxu0
        %912 = vmatprep.mubr.f32.mxu0 0.0
        %913 = vmatmul.mubr.f32.gmra.mrb[0].mxu0 %v531
        %v914 = vpop.f32.mrb[0].mxu0
        %v915 = vadd.f32 %v497, %v914
        %v916 = vpop.f32.mrb[0].mxu0
        %917 = vmatprep.mubr.f32.mxu0 0.0
        %918 = vmatmul.mubr.f32.gmra.mrb[0].mxu0 %v534
        %v919 = vpop.f32.mrb[0].mxu0
        %v920 = vadd.f32 %v497, %v919
        %v921 = vpop.f32.mrb[0].mxu0
        %922 = vmatprep.mubr.f32.mxu0 0.0
        %923 = vmatmul.mubr.f32.gmra.mrb[0].mxu0 %v537
        %v924 = vpop.f32.mrb[0].mxu0
        %v925 = vadd.f32 %v497, %v924
        %v926 = vpop.f32.mrb[0].mxu0
        %927 = vmatprep.mubr.f32.mxu0 0.0
        %928 = vmatmul.mubr.f32.gmra.mrb[0].mxu0 %v540
        %v929 = vpop.f32.mrb[0].mxu0
        %v930 = vadd.f32 %v497, %v929
        %v931 = vpop.f32.mrb[0].mxu0
        %932 = vmatprep.mubr.f32.mxu0 0.0
        %933 = vmatmul.mubr.f32.gmra.mrb[0].mxu0 %v543
        %v934 = vpop.f32.mrb[0].mxu0
        %v935 = vadd.f32 %v497, %v934
        %v936 = vpop.f32.mrb[0].mxu0
        %937 = vmatprep.mubr.f32.mxu0 0.0
        %938 = vmatmul.mubr.f32.gmra.mrb[0].mxu0 %v546
        %v939 = vpop.f32.mrb[0].mxu0
        %v940 = vadd.f32 %v497, %v939
        %v941 = vpop.f32.mrb[0].mxu0
        %942 = vmatprep.mubr.f32.mxu0 0.0
        %943 = vmatmul.mubr.f32.gmra.mrb[0].mxu0 %v549
        %v944 = vpop.f32.mrb[0].mxu0
        %v945 = vadd.f32 %v497, %v944
        %v946 = vpop.f32.mrb[0].mxu0
        %947 = vmatprep.mubr.f32.mxu0 0.0
        %948 = vmatmul.mubr.f32.gmra.mrb[0].mxu0 %v552
        %v949 = vpop.f32.mrb[0].mxu0
        %v950 = vadd.f32 %v497, %v949
        %v951 = vpop.f32.mrb[0].mxu0
        %952 = vmatprep.mubr.f32.mxu0 0.0
        %953 = vmatmul.mubr.f32.gmra.mrb[0].mxu0 %v555
        %v954 = vpop.f32.mrb[0].mxu0
        %v955 = vadd.f32 %v497, %v954
        %v956 = vpop.f32.mrb[0].mxu0
        %957 = vmatprep.mubr.f32.mxu0 0.0
        %958 = vmatmul.mubr.f32.gmra.mrb[0].mxu0 %v558
        %v959 = vpop.f32.mrb[0].mxu0
        %v960 = vadd.f32 %v497, %v959
        %v961 = vpop.f32.mrb[0].mxu0
        %962 = vmatprep.mubr.f32.mxu0 0.0
        %963 = vmatmul.mubr.f32.gmra.mrb[0].mxu0 %v561
        %v964 = vpop.f32.mrb[0].mxu0
        %v965 = vadd.f32 %v497, %v964
        %v966 = vpop.f32.mrb[0].mxu0
        %967 = vmatprep.mubr.f32.mxu0 0.0
        %968 = vmatmul.mubr.f32.gmra.mrb[0].mxu0 %v564
        %v969 = vpop.f32.mrb[0].mxu0
        %v970 = vadd.f32 %v497, %v969
        %v971 = vpop.f32.mrb[0].mxu0
        %972 = vmatprep.mubr.f32.mxu0 0.0
        %973 = vmatmul.mubr.f32.gmra.mrb[0].mxu0 %v567
        %v974 = vpop.f32.mrb[0].mxu0
        %v975 = vadd.f32 %v497, %v974
        %v976 = vpop.f32.mrb[0].mxu0
        %977 = vmatprep.mubr.f32.mxu0 0.0
        %978 = vmatmul.mubr.f32.gmra.mrb[0].mxu0 %v570
        %v979 = vpop.f32.mrb[0].mxu0
        %v980 = vadd.f32 %v497, %v979
        %v981 = vpop.f32.mrb[0].mxu0
        %982 = vmatprep.mubr.f32.mxu0 0.0
        %983 = vmatmul.mubr.f32.gmra.mrb[0].mxu0 %v573
        %v984 = vpop.f32.mrb[0].mxu0
        %v985 = vadd.f32 %v497, %v984
        %v986 = vpop.f32.mrb[0].mxu0
        %987 = vmatprep.mubr.f32.mxu0 0.0
        %988 = vmatmul.mubr.f32.gmra.mrb[0].mxu0 %v576
        %v989 = vpop.f32.mrb[0].mxu0
        %v990 = vadd.f32 %v497, %v989
        %v991 = vpop.f32.mrb[0].mxu0
        %992 = vmatprep.mubr.f32.mxu0 0.0
        %993 = vmatmul.mubr.f32.gmra.mrb[0].mxu0 %v579
        %v994 = vpop.f32.mrb[0].mxu0
        %v995 = vadd.f32 %v497, %v994
        %v996 = vpop.f32.mrb[0].mxu0
        %997 = vmatprep.mubr.f32.mxu0 0.0
        %998 = vmatmul.mubr.f32.gmra.mrb[0].mxu0 %v582
        %v999 = vpop.f32.mrb[0].mxu0
        %v1000 = vadd.f32 %v497, %v999
        %v1001 = vpop.f32.mrb[0].mxu0
        %1002 = vmatprep.mubr.f32.mxu0 0.0
        %1003 = vmatmul.mubr.f32.gmra.mrb[0].mxu0 %v585
        %v1004 = vpop.f32.mrb[0].mxu0
        %v1005 = vadd.f32 %v497, %v1004
        %v1006 = vpop.f32.mrb[0].mxu0
        %1007 = vmatprep.mubr.f32.mxu0 0.0
        %1008 = vmatmul.mubr.f32.gmra.mrb[0].mxu0 %v588
        %v1009 = vpop.f32.mrb[0].mxu0
        %v1010 = vadd.f32 %v497, %v1009
        %v1011 = vpop.f32.mrb[0].mxu0
        %1012 = vmatprep.mubr.f32.mxu0 0.0
        %1013 = vmatmul.mubr.f32.gmra.mrb[0].mxu0 %v591
        %v1014 = vpop.f32.mrb[0].mxu0
        %v1015 = vadd.f32 %v497, %v1014
        %v1016 = vpop.f32.mrb[0].mxu0
        %1017 = vmatprep.mubr.f32.mxu0 0.0
        %1018 = vmatmul.mubr.f32.gmra.mrb[0].mxu0 %v594
        %v1019 = vpop.f32.mrb[0].mxu0
        %v1020 = vadd.f32 %v497, %v1019
        %v1021 = vpop.f32.mrb[0].mxu0
        %1022 = vmatprep.mubr.f32.mxu0 0.0
        %1023 = vmatmul.mubr.f32.gmra.mrb[0].mxu0 %v597
        %v1024 = vpop.f32.mrb[0].mxu0
        %v1025 = vadd.f32 %v497, %v1024
        %v1026 = vpop.f32.mrb[0].mxu0
        %1027 = vmatprep.mubr.f32.mxu0 0.0
        %1028 = vmatmul.mubr.f32.gmra.mrb[0].mxu0 %v600
        %v1029 = vpop.f32.mrb[0].mxu0
        %v1030 = vadd.f32 %v497, %v1029
        %v1031 = vpop.f32.mrb[0].mxu0
        %1032 = vmatprep.mubr.f32.mxu0 0.0
        %1033 = vmatmul.mubr.f32.gmra.mrb[0].mxu0 %v603
        %v1034 = vpop.f32.mrb[0].mxu0
        %v1035 = vadd.f32 %v497, %v1034
        %v1036 = vpop.f32.mrb[0].mxu0
        %1037 = vmatprep.mubr.f32.mxu0 0.0
        %1038 = vmatmul.mubr.f32.gmra.mrb[0].mxu0 %v606
        %v1039 = vpop.f32.mrb[0].mxu0
        %v1040 = vadd.f32 %v497, %v1039
        %v1041 = vpop.f32.mrb[0].mxu0
        %1042 = vmatprep.mubr.f32.mxu0 0.0
        %1043 = vmatmul.mubr.f32.gmra.mrb[0].mxu0 %v609
        %v1044 = vpop.f32.mrb[0].mxu0
        %v1045 = vadd.f32 %v497, %v1044
        %v1046 = vpop.f32.mrb[0].mxu0
        %1047 = vmatprep.mubr.f32.mxu0 0.0
        %1048 = vmatmul.mubr.f32.gmra.mrb[0].mxu0 %v612
        %v1049 = vpop.f32.mrb[0].mxu0
        %v1050 = vadd.f32 %v497, %v1049
        %v1051 = vpop.f32.mrb[0].mxu0
        %1052 = vmatprep.mubr.f32.mxu0 0.0
        %1053 = vmatmul.mubr.f32.gmra.mrb[0].mxu0 %v615
        %v1054 = vpop.f32.mrb[0].mxu0
        %v1055 = vadd.f32 %v497, %v1054
        %v1056 = vpop.f32.mrb[0].mxu0
        %1057 = vmatprep.mubr.f32.mxu0 0.0
        %1058 = vmatmul.mubr.f32.gmra.mrb[0].mxu0 %v618
        %v1059 = vpop.f32.mrb[0].mxu0
        %v1060 = vadd.f32 %v497, %v1059
        %v1061 = vpop.f32.mrb[0].mxu0
        %1062 = vmatprep.mubr.f32.mxu0 0.0
        %1063 = vmatmul.mubr.f32.gmra.mrb[0].mxu0 %v621
        %v1064 = vpop.f32.mrb[0].mxu0
        %v1065 = vadd.f32 %v497, %v1064
        %v1066 = vpop.f32.mrb[0].mxu0
        %1067 = vmatprep.mubr.f32.mxu0 0.0
        %1068 = vmatmul.mubr.f32.gmra.mrb[0].mxu0 %v624
        %v1069 = vpop.f32.mrb[0].mxu0
        %v1070 = vadd.f32 %v497, %v1069
        %v1071 = vpop.f32.mrb[0].mxu0
        %1072 = vmatprep.mubr.f32.mxu0 0.0
        %1073 = vmatmul.mubr.f32.gmra.mrb[0].mxu0 %v627
        %v1074 = vpop.f32.mrb[0].mxu0
        %v1075 = vadd.f32 %v497, %v1074
        %v1076 = vpop.f32.mrb[0].mxu0
        %1077 = vmatprep.mubr.f32.mxu0 0.0
        %1078 = vmatmul.mubr.f32.gmra.mrb[0].mxu0 %v630
        %v1079 = vpop.f32.mrb[0].mxu0
        %v1080 = vadd.f32 %v497, %v1079
        %v1081 = vpop.f32.mrb[0].mxu0
        %1082 = vmatprep.mubr.f32.mxu0 0.0
        %1083 = vmatmul.mubr.f32.gmra.mrb[0].mxu0 %v633
        %v1084 = vpop.f32.mrb[0].mxu0
        %v1085 = vadd.f32 %v497, %v1084
        %v1086 = vpop.f32.mrb[0].mxu0
        %1087 = vmatprep.mubr.f32.mxu0 0.0
        %1088 = vmatmul.mubr.f32.gmra.mrb[0].mxu0 %v636
        %v1089 = vpop.f32.mrb[0].mxu0
        %v1090 = vadd.f32 %v497, %v1089
        %v1091 = vpop.f32.mrb[0].mxu0
        %1092 = vmatprep.mubr.f32.mxu0 0.0
        %1093 = vmatmul.mubr.f32.gmra.mrb[0].mxu0 %v639
        %v1094 = vpop.f32.mrb[0].mxu0
        %v1095 = vadd.f32 %v497, %v1094
        %v1096 = vpop.f32.mrb[0].mxu0
        %1097 = vmatprep.mubr.f32.mxu0 0.0
        %1098 = vmatmul.mubr.f32.gmra.mrb[0].mxu0 %v642
        %v1099 = vpop.f32.mrb[0].mxu0
        %v1100 = vadd.f32 %v497, %v1099
        %v1101 = vpop.f32.mrb[0].mxu0
        %1102 = vmatprep.mubr.f32.mxu0 0.0
        %1103 = vmatmul.mubr.f32.gmra.mrb[0].mxu0 %v645
        %v1104 = vpop.f32.mrb[0].mxu0
        %v1105 = vadd.f32 %v497, %v1104
        %v1106 = vpop.f32.mrb[0].mxu0
        %1107 = vmatprep.mubr.f32.mxu0 0.0
        %1108 = vmatmul.mubr.f32.gmra.mrb[0].mxu0 %v648
        %v1109 = vpop.f32.mrb[0].mxu0
        %v1110 = vadd.f32 %v497, %v1109
        %v1111 = vpop.f32.mrb[0].mxu0
        %1112 = vmatprep.mubr.f32.mxu0 0.0
        %1113 = vmatmul.mubr.f32.gmra.mrb[0].mxu0 %v651
        %v1114 = vpop.f32.mrb[0].mxu0
        %v1115 = vadd.f32 %v497, %v1114
        %v1116 = vpop.f32.mrb[0].mxu0
        %1117 = vmatprep.mubr.f32.mxu0 0.0
        %1118 = vmatmul.mubr.f32.gmra.mrb[0].mxu0 %v654
        %v1119 = vpop.f32.mrb[0].mxu0
        %v1120 = vadd.f32 %v497, %v1119
        %v1121 = vpop.f32.mrb[0].mxu0
        %1122 = vmatprep.mubr.f32.mxu0 0.0
        %1123 = vmatmul.mubr.f32.gmra.mrb[0].mxu0 %v657
        %v1124 = vpop.f32.mrb[0].mxu0
        %v1125 = vadd.f32 %v497, %v1124
        %v1126 = vpop.f32.mrb[0].mxu0
        %1127 = vmatprep.mubr.f32.mxu0 0.0
        %1128 = vmatmul.mubr.f32.gmra.mrb[0].mxu0 %v660
        %v1129 = vpop.f32.mrb[0].mxu0
        %v1130 = vadd.f32 %v497, %v1129
        %v1131 = vpop.f32.mrb[0].mxu0
        %1132 = vmatprep.mubr.f32.mxu0 0.0
        %1133 = vmatmul.mubr.f32.gmra.mrb[0].mxu0 %v663
        %v1134 = vpop.f32.mrb[0].mxu0
        %v1135 = vadd.f32 %v497, %v1134
        %v1136 = vpop.f32.mrb[0].mxu0
        %1137 = vmatprep.mubr.f32.mxu0 0.0
        %1138 = vmatmul.mubr.f32.gmra.mrb[0].mxu0 %v666
        %v1139 = vpop.f32.mrb[0].mxu0
        %v1140 = vadd.f32 %v497, %v1139
        %v1141 = vpop.f32.mrb[0].mxu0
        %1142 = vmatprep.mubr.f32.mxu0 0.0
        %1143 = vmatmul.mubr.f32.gmra.mrb[0].mxu0 %v669
        %v1144 = vpop.f32.mrb[0].mxu0
        %v1145 = vadd.f32 %v497, %v1144
        %v1146 = vpop.f32.mrb[0].mxu0
        %1147 = vmatprep.mubr.f32.mxu0 0.0
        %1148 = vmatmul.mubr.f32.gmra.mrb[0].mxu0 %v672
        %v1149 = vpop.f32.mrb[0].mxu0
        %v1150 = vadd.f32 %v497, %v1149
        %v1151 = vpop.f32.mrb[0].mxu0
        %1152 = vmatprep.mubr.f32.mxu0 0.0
        %1153 = vmatmul.mubr.f32.gmra.mrb[0].mxu0 %v675
        %v1154 = vpop.f32.mrb[0].mxu0
        %v1155 = vadd.f32 %v497, %v1154
        %v1156 = vpop.f32.mrb[0].mxu0
        %1157 = vmatprep.mubr.f32.mxu0 0.0
        %1158 = vmatmul.mubr.f32.gmra.mrb[0].mxu0 %v678
        %v1159 = vpop.f32.mrb[0].mxu0
        %v1160 = vadd.f32 %v497, %v1159
        %v1161 = vpop.f32.mrb[0].mxu0
        %1162 = vmatprep.mubr.f32.mxu0 0.0
        %1163 = vmatmul.mubr.f32.gmra.mrb[0].mxu0 %v681
        %v1164 = vpop.f32.mrb[0].mxu0
        %v1165 = vadd.f32 %v497, %v1164
        %v1166 = vpop.f32.mrb[0].mxu0
        %1167 = vmatprep.mubr.f32.mxu0 0.0
        %1168 = vmatmul.mubr.f32.gmra.mrb[0].mxu0 %v684
        %v1169 = vpop.f32.mrb[0].mxu0
        %v1170 = vadd.f32 %v497, %v1169
        %v1171 = vpop.f32.mrb[0].mxu0
        %1172 = vmatprep.mubr.f32.mxu0 0.0
        %1173 = vmatmul.mubr.f32.gmra.mrb[0].mxu0 %v687
        %v1174 = vpop.f32.mrb[0].mxu0
        %v1175 = vadd.f32 %v497, %v1174
        %v1176 = vpop.f32.mrb[0].mxu0
        %1177 = vmatprep.mubr.f32.mxu0 0.0
        %1178 = vmatmul.mubr.f32.gmra.mrb[0].mxu0 %v690
        %v1179 = vpop.f32.mrb[0].mxu0
        %v1180 = vadd.f32 %v497, %v1179
        %v1181 = vpop.f32.mrb[0].mxu0
        %1182 = vmatprep.mubr.f32.mxu0 0.0
        %1183 = vmatmul.mubr.f32.gmra.mrb[0].mxu0 %v693
        %v1184 = vpop.f32.mrb[0].mxu0
        %v1185 = vadd.f32 %v497, %v1184
        %v1186 = vpop.f32.mrb[0].mxu0
        %1187 = vmatprep.mubr.f32.mxu0 0.0
        %1188 = vmatmul.mubr.f32.gmra.mrb[0].mxu0 %v696
        %v1189 = vpop.f32.mrb[0].mxu0
        %v1190 = vadd.f32 %v497, %v1189
        %v1191 = vpop.f32.mrb[0].mxu0
        %1192 = vmatprep.mubr.f32.mxu0 0.0
        %1193 = vmatmul.mubr.f32.gmra.mrb[0].mxu0 %v699
        %v1194 = vpop.f32.mrb[0].mxu0
        %v1195 = vadd.f32 %v497, %v1194
        %v1196 = vpop.f32.mrb[0].mxu0
        %1197 = vmatprep.mubr.f32.mxu0 0.0
        %1198 = vmatmul.mubr.f32.gmra.mrb[0].mxu0 %v702
        %v1199 = vpop.f32.mrb[0].mxu0
        %v1200 = vadd.f32 %v497, %v1199
        %v1201 = vpop.f32.mrb[0].mxu0
        %1202 = vmatprep.mubr.f32.mxu0 0.0
        %1203 = vmatmul.mubr.f32.gmra.mrb[0].mxu0 %v705
        %v1204 = vpop.f32.mrb[0].mxu0
        %v1205 = vadd.f32 %v497, %v1204
        %v1206 = vpop.f32.mrb[0].mxu0
        %1207 = vmatprep.mubr.f32.mxu0 0.0
        %1208 = vmatmul.mubr.f32.gmra.mrb[0].mxu0 %v708
        %v1209 = vpop.f32.mrb[0].mxu0
        %v1210 = vadd.f32 %v497, %v1209
        %v1211 = vpop.f32.mrb[0].mxu0
        %1212 = vmatprep.mubr.f32.mxu0 0.0
        %1213 = vmatmul.mubr.f32.gmra.mrb[0].mxu0 %v711
        %v1214 = vpop.f32.mrb[0].mxu0
        %v1215 = vadd.f32 %v497, %v1214
        %v1216 = vpop.f32.mrb[0].mxu0
        %1217 = vmatprep.mubr.f32.mxu0 0.0
        %1218 = vmatmul.mubr.f32.gmra.mrb[0].mxu0 %v714
        %v1219 = vpop.f32.mrb[0].mxu0
        %v1220 = vadd.f32 %v497, %v1219
        %v1221 = vpop.f32.mrb[0].mxu0
        %1222 = vmatprep.mubr.f32.mxu0 0.0
        %1223 = vmatmul.mubr.f32.gmra.mrb[0].mxu0 %v717
        %v1224 = vpop.f32.mrb[0].mxu0
        %v1225 = vadd.f32 %v497, %v1224
        %v1226 = vpop.f32.mrb[0].mxu0
        %1227 = vmatprep.mubr.f32.mxu0 0.0
        %1228 = vmatmul.mubr.f32.gmra.mrb[0].mxu0 %v720
        %v1229 = vpop.f32.mrb[0].mxu0
        %v1230 = vadd.f32 %v497, %v1229
        %v1231 = vpop.f32.mrb[0].mxu0
        %1232 = vmatprep.mubr.f32.mxu0 0.0
        %1233 = vmatmul.mubr.f32.gmra.mrb[0].mxu0 %v723
        %v1234 = vpop.f32.mrb[0].mxu0
        %v1235 = vadd.f32 %v497, %v1234
        %v1236 = vpop.f32.mrb[0].mxu0
        %1237 = vmatprep.mubr.f32.mxu0 0.0
        %1238 = vmatmul.mubr.f32.gmra.mrb[0].mxu0 %v726
        %v1239 = vpop.f32.mrb[0].mxu0
        %v1240 = vadd.f32 %v497, %v1239
        %v1241 = vpop.f32.mrb[0].mxu0
        %1242 = vmatprep.mubr.f32.mxu0 0.0
        %1243 = vmatmul.mubr.f32.gmra.mrb[0].mxu0 %v729
        %v1244 = vpop.f32.mrb[0].mxu0
        %v1245 = vadd.f32 %v497, %v1244
        %v1246 = vpop.f32.mrb[0].mxu0
        %1247 = vmatprep.mubr.f32.mxu0 0.0
        %1248 = vmatmul.mubr.f32.gmra.mrb[0].mxu0 %v732
        %v1249 = vpop.f32.mrb[0].mxu0
        %v1250 = vadd.f32 %v497, %v1249
        %v1251 = vpop.f32.mrb[0].mxu0
        %1252 = vmatprep.mubr.f32.mxu0 0.0
        %1253 = vmatmul.mubr.f32.gmra.mrb[0].mxu0 %v735
        %v1254 = vpop.f32.mrb[0].mxu0
        %v1255 = vadd.f32 %v497, %v1254
        %v1256 = vpop.f32.mrb[0].mxu0
        %1257 = vmatprep.mubr.f32.mxu0 0.0
        %1258 = vmatmul.mubr.f32.gmra.mrb[0].mxu0 %v738
        %v1259 = vpop.f32.mrb[0].mxu0
        %v1260 = vadd.f32 %v497, %v1259
        %v1261 = vpop.f32.mrb[0].mxu0
        %1262 = vmatprep.mubr.f32.mxu0 0.0
        %1263 = vmatmul.mubr.f32.gmra.mrb[0].mxu0 %v741
        %v1264 = vpop.f32.mrb[0].mxu0
        %v1265 = vadd.f32 %v497, %v1264
        %v1266 = vpop.f32.mrb[0].mxu0
        %1267 = vmatprep.mubr.f32.mxu0 0.0
        %1268 = vmatmul.mubr.f32.gmra.mrb[0].mxu0 %v744
        %v1269 = vpop.f32.mrb[0].mxu0
        %v1270 = vadd.f32 %v497, %v1269
        %v1271 = vpop.f32.mrb[0].mxu0
        %1272 = vmatprep.mubr.f32.mxu0 0.0
        %1273 = vmatmul.mubr.f32.gmra.mrb[0].mxu0 %v747
        %v1274 = vpop.f32.mrb[0].mxu0
        %v1275 = vadd.f32 %v497, %v1274
        %v1276 = vpop.f32.mrb[0].mxu0
        %1277 = vmatprep.mubr.f32.mxu0 0.0
        %1278 = vmatmul.mubr.f32.gmra.mrb[0].mxu0 %v750
        %v1279 = vpop.f32.mrb[0].mxu0
        %v1280 = vadd.f32 %v497, %v1279
        %v1281 = vpop.f32.mrb[0].mxu0
        %1282 = vmatprep.mubr.f32.mxu0 0.0
        %1283 = vmatmul.mubr.f32.gmra.mrb[0].mxu0 %v753
        %v1284 = vpop.f32.mrb[0].mxu0
        %v1285 = vadd.f32 %v497, %v1284
        %v1286 = vpop.f32.mrb[0].mxu0
        %1287 = vmatprep.mubr.f32.mxu0 0.0
        %1288 = vmatmul.mubr.f32.gmra.mrb[0].mxu0 %v756
        %v1289 = vpop.f32.mrb[0].mxu0
        %v1290 = vadd.f32 %v497, %v1289
        %v1291 = vpop.f32.mrb[0].mxu0
        %1292 = vmatprep.mubr.f32.mxu0 0.0
        %1293 = vmatmul.mubr.f32.gmra.mrb[0].mxu0 %v759
        %v1294 = vpop.f32.mrb[0].mxu0
        %v1295 = vadd.f32 %v497, %v1294
        %v1296 = vpop.f32.mrb[0].mxu0
        %1297 = vmatprep.mubr.f32.mxu0 0.0
        %1298 = vmatmul.mubr.f32.gmra.mrb[0].mxu0 %v762
        %v1299 = vpop.f32.mrb[0].mxu0
        %v1300 = vadd.f32 %v497, %v1299
        %v1301 = vpop.f32.mrb[0].mxu0
        %1302 = vmatprep.mubr.f32.mxu0 0.0
        %1303 = vmatmul.mubr.f32.gmra.mrb[0].mxu0 %v765
        %v1304 = vpop.f32.mrb[0].mxu0
        %v1305 = vadd.f32 %v497, %v1304
        %v1306 = vpop.f32.mrb[0].mxu0
        %1307 = vmatprep.mubr.f32.mxu0 0.0
        %1308 = vmatmul.mubr.f32.gmra.mrb[0].mxu0 %v768
        %v1309 = vpop.f32.mrb[0].mxu0
        %v1310 = vadd.f32 %v497, %v1309
        %v1311 = vpop.f32.mrb[0].mxu0
        %1312 = vmatprep.mubr.f32.mxu0 0.0
        %1313 = vmatmul.mubr.f32.gmra.mrb[0].mxu0 %v771
        %v1314 = vpop.f32.mrb[0].mxu0
        %v1315 = vadd.f32 %v497, %v1314
        %v1316 = vpop.f32.mrb[0].mxu0
        %1317 = vmatprep.mubr.f32.mxu0 0.0
        %1318 = vmatmul.mubr.f32.gmra.mrb[0].mxu0 %v774
        %v1319 = vpop.f32.mrb[0].mxu0
        %v1320 = vadd.f32 %v497, %v1319
        %v1321 = vpop.f32.mrb[0].mxu0
        %1322 = vmatprep.mubr.f32.mxu0 0.0
        %1323 = vmatmul.mubr.f32.gmra.mrb[0].mxu0 %v777
        %v1324 = vpop.f32.mrb[0].mxu0
        %v1325 = vadd.f32 %v497, %v1324
        %v1326 = vpop.f32.mrb[0].mxu0
        %1327 = vmatprep.mubr.f32.mxu0 0.0
        %1328 = vmatmul.mubr.f32.gmra.mrb[0].mxu0 %v780
        %v1329 = vpop.f32.mrb[0].mxu0
        %v1330 = vadd.f32 %v497, %v1329
        %v1331 = vpop.f32.mrb[0].mxu0
        %1332 = vmatprep.mubr.f32.mxu0 0.0
        %1333 = vmatmul.mubr.f32.gmra.mrb[0].mxu0 %v783
        %v1334 = vpop.f32.mrb[0].mxu0
        %v1335 = vadd.f32 %v497, %v1334
        %v1336 = vpop.f32.mrb[0].mxu0
        %1337 = vmatprep.mubr.f32.mxu0 0.0
        %1338 = vmatmul.mubr.f32.gmra.mrb[0].mxu0 %v786
        %v1339 = vpop.f32.mrb[0].mxu0
        %v1340 = vpop.f32.mrb[0].mxu0
        %1341 = vmatprep.mubr.f32.mxu0 0.0
        %1342 = vmatmul.mubr.f32.gmra.mrb[0].mxu0 %v789
        %v1343 = vpop.f32.mrb[0].mxu0
        %v1344 = vpop.f32.mrb[0].mxu0
        %1345 = vmatprep.mubr.f32.mxu0 0.0
        %1346 = vmatmul.mubr.f32.gmra.mrb[0].mxu0 %v792
        %v1347 = vpop.f32.mrb[0].mxu0
        %v1348 = vpop.f32.mrb[0].mxu0
        %1349 = vdwg.mxu0
        %v1350 = vmax.f32 %v865, 0.0
        %v1351 = vmax.f32 %v870, 0.0
        %v1352 = vmax.f32 %v875, 0.0
        %v1353 = vmax.f32 %v880, 0.0
        %v1354 = vmax.f32 %v885, 0.0
        %v1355 = vmax.f32 %v890, 0.0
        %v1356 = vmax.f32 %v895, 0.0
        %v1357 = vmax.f32 %v900, 0.0
        %v1358 = vmax.f32 %v905, 0.0
        %v1359 = vmax.f32 %v910, 0.0
        %v1360 = vmax.f32 %v915, 0.0
        %v1361 = vmax.f32 %v920, 0.0
        %v1362 = vmax.f32 %v925, 0.0
        %v1363 = vmax.f32 %v930, 0.0
        %v1364 = vmax.f32 %v935, 0.0
        %v1365 = vmax.f32 %v940, 0.0
        %v1366 = vmax.f32 %v945, 0.0
        %v1367 = vmax.f32 %v950, 0.0
        %v1368 = vmax.f32 %v955, 0.0
        %v1369 = vmax.f32 %v960, 0.0
        %v1370 = vmax.f32 %v965, 0.0
        %v1371 = vmax.f32 %v970, 0.0
        %v1372 = vmax.f32 %v975, 0.0
        %v1373 = vmax.f32 %v980, 0.0
        %v1374 = vmax.f32 %v985, 0.0
        %v1375 = vmax.f32 %v990, 0.0
        %v1376 = vmax.f32 %v995, 0.0
        %v1377 = vmax.f32 %v1000, 0.0
        %v1378 = vmax.f32 %v1005, 0.0
        %v1379 = vmax.f32 %v1010, 0.0
        %v1380 = vmax.f32 %v1015, 0.0
        %v1381 = vmax.f32 %v1020, 0.0
        %v1382 = vmax.f32 %v1025, 0.0
        %v1383 = vmax.f32 %v1030, 0.0
        %v1384 = vmax.f32 %v1035, 0.0
        %v1385 = vmax.f32 %v1040, 0.0
        %v1386 = vmax.f32 %v1045, 0.0
        %v1387 = vmax.f32 %v1050, 0.0
        %v1388 = vmax.f32 %v1055, 0.0
        %v1389 = vmax.f32 %v1060, 0.0
        %v1390 = vmax.f32 %v1065, 0.0
        %v1391 = vmax.f32 %v1070, 0.0
        %v1392 = vmax.f32 %v1075, 0.0
        %v1393 = vmax.f32 %v1080, 0.0
        %v1394 = vmax.f32 %v1085, 0.0
        %v1395 = vmax.f32 %v1090, 0.0
        %v1396 = vmax.f32 %v1095, 0.0
        %v1397 = vmax.f32 %v1100, 0.0
        %v1398 = vmax.f32 %v1105, 0.0
        %v1399 = vmax.f32 %v1110, 0.0
        %v1400 = vmax.f32 %v1115, 0.0
        %v1401 = vmax.f32 %v1120, 0.0
        %v1402 = vmax.f32 %v1125, 0.0
        %v1403 = vmax.f32 %v1130, 0.0
        %v1404 = vmax.f32 %v1135, 0.0
        %v1405 = vmax.f32 %v1140, 0.0
        %v1406 = vmax.f32 %v1145, 0.0
        %v1407 = vmax.f32 %v1150, 0.0
        %v1408 = vmax.f32 %v1155, 0.0
        %v1409 = vmax.f32 %v1160, 0.0
        %v1410 = vmax.f32 %v1165, 0.0
        %v1411 = vmax.f32 %v1170, 0.0
        %v1412 = vmax.f32 %v1175, 0.0
        %v1413 = vmax.f32 %v1180, 0.0
        %v1414 = vmax.f32 %v1185, 0.0
        %v1415 = vmax.f32 %v1190, 0.0
        %v1416 = vmax.f32 %v1195, 0.0
        %v1417 = vmax.f32 %v1200, 0.0
        %v1418 = vmax.f32 %v1205, 0.0
        %v1419 = vmax.f32 %v1210, 0.0
        %v1420 = vmax.f32 %v1215, 0.0
        %v1421 = vmax.f32 %v1220, 0.0
        %v1422 = vmax.f32 %v1225, 0.0
        %v1423 = vmax.f32 %v1230, 0.0
        %v1424 = vmax.f32 %v1235, 0.0
        %v1425 = vmax.f32 %v1240, 0.0
        %v1426 = vmax.f32 %v1245, 0.0
        %v1427 = vmax.f32 %v1250, 0.0
        %v1428 = vmax.f32 %v1255, 0.0
        %v1429 = vmax.f32 %v1260, 0.0
        %v1430 = vmax.f32 %v1265, 0.0
        %v1431 = vmax.f32 %v1270, 0.0
        %v1432 = vmax.f32 %v1275, 0.0
        %v1433 = vmax.f32 %v1280, 0.0
        %v1434 = vmax.f32 %v1285, 0.0
        %v1435 = vmax.f32 %v1290, 0.0
        %v1436 = vmax.f32 %v1295, 0.0
        %v1437 = vmax.f32 %v1300, 0.0
        %v1438 = vmax.f32 %v1305, 0.0
        %v1439 = vmax.f32 %v1310, 0.0
        %v1440 = vmax.f32 %v1315, 0.0
        %v1441 = vmax.f32 %v1320, 0.0
        %v1442 = vmax.f32 %v1325, 0.0
        %v1443 = vmax.f32 %v1330, 0.0
        %v1444 = vmax.f32 %v1335, 0.0
        %vm1539 = vcmask 1041408
        %v1540 = vrot.slane %v1351, 6
        %v1541 = vrot.slane %v1352, 6
        %v1542 = vsel %vm1539, %v1540, %v1541
        %v1543 = vrot.slane %v1353, 6
        %v1544 = vsel %vm1539, %v1541, %v1543
        %v1545 = vrot.slane %v1354, 6
        %v1546 = vrot.slane %v1355, 6
        %v1547 = vsel %vm1539, %v1545, %v1546
        %v1548 = vrot.slane %v1356, 6
        %v1549 = vsel %vm1539, %v1546, %v1548
        %v1550 = vrot.slane %v1357, 6
        %v1551 = vsel %vm1539, %v1548, %v1550
        %v1552 = vrot.slane %v1358, 6
        %v1553 = vrot.slane %v1359, 6
        %v1554 = vsel %vm1539, %v1552, %v1553
        %v1555 = vrot.slane %v1360, 6
        %v1556 = vsel %vm1539, %v1553, %v1555
        %v1557 = vrot.slane %v1361, 6
        %v1558 = vrot.slane %v1362, 6
        %v1559 = vsel %vm1539, %v1557, %v1558
        %v1560 = vrot.slane %v1363, 6
        %v1561 = vsel %vm1539, %v1558, %v1560
        %v1562 = vrot.slane %v1364, 6
        %v1563 = vsel %vm1539, %v1560, %v1562
        %v1564 = vrot.slane %v1365, 6
        %v1565 = vrot.slane %v1366, 6
        %v1566 = vsel %vm1539, %v1564, %v1565
        %v1567 = vrot.slane %v1367, 6
        %v1568 = vsel %vm1539, %v1565, %v1567
        %v1569 = vrot.slane %v1368, 6
        %v1570 = vrot.slane %v1369, 6
        %v1571 = vsel %vm1539, %v1569, %v1570
        %v1572 = vrot.slane %v1370, 6
        %v1573 = vsel %vm1539, %v1570, %v1572
        %v1574 = vrot.slane %v1371, 6
        %v1575 = vsel %vm1539, %v1572, %v1574
        %v1576 = vrot.slane %v1372, 6
        %v1577 = vrot.slane %v1373, 6
        %v1578 = vsel %vm1539, %v1576, %v1577
        %v1579 = vrot.slane %v1374, 6
        %v1580 = vsel %vm1539, %v1577, %v1579
        %v1581 = vrot.slane %v1375, 6
        %v1582 = vrot.slane %v1376, 6
        %v1583 = vsel %vm1539, %v1581, %v1582
        %v1584 = vrot.slane %v1377, 6
        %v1585 = vsel %vm1539, %v1582, %v1584
        %v1586 = vrot.slane %v1378, 6
        %v1587 = vsel %vm1539, %v1584, %v1586
        %v1588 = vrot.slane %v1379, 6
        %v1589 = vrot.slane %v1380, 6
        %v1590 = vsel %vm1539, %v1588, %v1589
        %v1591 = vrot.slane %v1381, 6
        %v1592 = vsel %vm1539, %v1589, %v1591
        %v1593 = vrot.slane %v1382, 6
        %v1594 = vrot.slane %v1383, 6
        %v1595 = vsel %vm1539, %v1593, %v1594
        %v1596 = vrot.slane %v1384, 6
        %v1597 = vsel %vm1539, %v1594, %v1596
        %v1598 = vrot.slane %v1385, 6
        %v1599 = vsel %vm1539, %v1596, %v1598
        %v1600 = vrot.slane %v1386, 6
        %v1601 = vrot.slane %v1387, 6
        %v1602 = vsel %vm1539, %v1600, %v1601
        %v1603 = vrot.slane %v1388, 6
        %v1604 = vsel %vm1539, %v1601, %v1603
        %v1605 = vrot.slane %v1389, 6
        %v1606 = vrot.slane %v1390, 6
        %v1607 = vsel %vm1539, %v1605, %v1606
        %v1608 = vrot.slane %v1391, 6
        %v1609 = vsel %vm1539, %v1606, %v1608
        %v1610 = vrot.slane %v1392, 6
        %v1611 = vsel %vm1539, %v1608, %v1610
        %v1612 = vrot.slane %v1393, 6
        %v1613 = vrot.slane %v1394, 6
        %v1614 = vsel %vm1539, %v1612, %v1613
        %v1615 = vrot.slane %v1395, 6
        %v1616 = vsel %vm1539, %v1613, %v1615
        %v1617 = vrot.slane %v1396, 6
        %v1618 = vrot.slane %v1397, 6
        %v1619 = vsel %vm1539, %v1617, %v1618
        %v1620 = vrot.slane %v1398, 6
        %v1621 = vsel %vm1539, %v1618, %v1620
        %v1622 = vrot.slane %v1399, 6
        %v1623 = vsel %vm1539, %v1620, %v1622
        %v1624 = vrot.slane %v1400, 6
        %v1625 = vrot.slane %v1401, 6
        %v1626 = vsel %vm1539, %v1624, %v1625
        %v1627 = vrot.slane %v1402, 6
        %v1628 = vsel %vm1539, %v1625, %v1627
        %v1629 = vrot.slane %v1403, 6
        %v1630 = vrot.slane %v1404, 6
        %v1631 = vsel %vm1539, %v1629, %v1630
        %v1632 = vrot.slane %v1405, 6
        %v1633 = vsel %vm1539, %v1630, %v1632
        %v1634 = vrot.slane %v1406, 6
        %v1635 = vsel %vm1539, %v1632, %v1634
        %v1636 = vrot.slane %v1407, 6
        %v1637 = vrot.slane %v1408, 6
        %v1638 = vsel %vm1539, %v1636, %v1637
        %v1639 = vrot.slane %v1409, 6
        %v1640 = vsel %vm1539, %v1637, %v1639
        %v1641 = vrot.slane %v1410, 6
        %v1642 = vrot.slane %v1411, 6
        %v1643 = vsel %vm1539, %v1641, %v1642
        %v1644 = vrot.slane %v1412, 6
        %v1645 = vsel %vm1539, %v1642, %v1644
        %v1646 = vrot.slane %v1413, 6
        %v1647 = vsel %vm1539, %v1644, %v1646
        %v1648 = vrot.slane %v1414, 6
        %v1649 = vrot.slane %v1415, 6
        %v1650 = vsel %vm1539, %v1648, %v1649
        %v1651 = vrot.slane %v1416, 6
        %v1652 = vsel %vm1539, %v1649, %v1651
        %v1653 = vrot.slane %v1417, 6
        %v1654 = vrot.slane %v1418, 6
        %v1655 = vsel %vm1539, %v1653, %v1654
        %v1656 = vrot.slane %v1419, 6
        %v1657 = vsel %vm1539, %v1654, %v1656
        %v1658 = vrot.slane %v1420, 6
        %v1659 = vsel %vm1539, %v1656, %v1658
        %v1660 = vrot.slane %v1421, 6
        %v1661 = vrot.slane %v1422, 6
        %v1662 = vsel %vm1539, %v1660, %v1661
        %v1663 = vrot.slane %v1423, 6
        %v1664 = vsel %vm1539, %v1661, %v1663
        %v1665 = vrot.slane %v1424, 6
        %v1666 = vrot.slane %v1425, 6
        %v1667 = vsel %vm1539, %v1665, %v1666
        %v1668 = vrot.slane %v1426, 6
        %v1669 = vsel %vm1539, %v1666, %v1668
        %v1670 = vrot.slane %v1427, 6
        %v1671 = vsel %vm1539, %v1668, %v1670
        %v1672 = vrot.slane %v1428, 6
        %v1673 = vrot.slane %v1429, 6
        %v1674 = vsel %vm1539, %v1672, %v1673
        %v1675 = vrot.slane %v1430, 6
        %v1676 = vsel %vm1539, %v1673, %v1675
        %v1677 = vrot.slane %v1431, 6
        %v1678 = vrot.slane %v1432, 6
        %v1679 = vsel %vm1539, %v1677, %v1678
        %v1680 = vrot.slane %v1433, 6
        %v1681 = vsel %vm1539, %v1678, %v1680
        %v1682 = vrot.slane %v1434, 6
        %v1683 = vsel %vm1539, %v1680, %v1682
        %v1684 = vrot.slane %v1435, 6
        %v1685 = vrot.slane %v1436, 6
        %v1686 = vsel %vm1539, %v1684, %v1685
        %v1687 = vrot.slane %v1437, 6
        %v1688 = vsel %vm1539, %v1685, %v1687
        %v1689 = vrot.slane %v1438, 6
        %v1690 = vrot.slane %v1439, 6
        %v1691 = vsel %vm1539, %v1689, %v1690
        %v1692 = vrot.slane %v1440, 6
        %v1693 = vsel %vm1539, %v1690, %v1692
        %v1694 = vrot.slane %v1441, 6
        %v1695 = vsel %vm1539, %v1692, %v1694
        %v1696 = vrot.slane %v1442, 6
        %v1697 = vrot.slane %v1443, 6
        %v1698 = vsel %vm1539, %v1696, %v1697
        %v1699 = vrot.slane %v1444, 6
        %v1700 = vsel %vm1539, %v1697, %v1699
        %v1768 = vmax.f32 %v1350, %v1542
        %v1769 = vmax.f32 %v1351, %v1544
        %v1770 = vmax.f32 %v1353, %v1547
        %v1771 = vmax.f32 %v1354, %v1549
        %v1772 = vmax.f32 %v1355, %v1551
        %v1773 = vmax.f32 %v1357, %v1554
        %v1774 = vmax.f32 %v1358, %v1556
        %v1775 = vmax.f32 %v1360, %v1559
        %v1776 = vmax.f32 %v1361, %v1561
        %v1777 = vmax.f32 %v1362, %v1563
        %v1778 = vmax.f32 %v1364, %v1566
        %v1779 = vmax.f32 %v1365, %v1568
        %v1780 = vmax.f32 %v1367, %v1571
        %v1781 = vmax.f32 %v1368, %v1573
        %v1782 = vmax.f32 %v1369, %v1575
        %v1783 = vmax.f32 %v1371, %v1578
        %v1784 = vmax.f32 %v1372, %v1580
        %v1785 = vmax.f32 %v1374, %v1583
        %v1786 = vmax.f32 %v1375, %v1585
        %v1787 = vmax.f32 %v1376, %v1587
        %v1788 = vmax.f32 %v1378, %v1590
        %v1789 = vmax.f32 %v1379, %v1592
        %v1790 = vmax.f32 %v1381, %v1595
        %v1791 = vmax.f32 %v1382, %v1597
        %v1792 = vmax.f32 %v1383, %v1599
        %v1793 = vmax.f32 %v1385, %v1602
        %v1794 = vmax.f32 %v1386, %v1604
        %v1795 = vmax.f32 %v1388, %v1607
        %v1796 = vmax.f32 %v1389, %v1609
        %v1797 = vmax.f32 %v1390, %v1611
        %v1798 = vmax.f32 %v1392, %v1614
        %v1799 = vmax.f32 %v1393, %v1616
        %v1800 = vmax.f32 %v1395, %v1619
        %v1801 = vmax.f32 %v1396, %v1621
        %v1802 = vmax.f32 %v1397, %v1623
        %v1803 = vmax.f32 %v1399, %v1626
        %v1804 = vmax.f32 %v1400, %v1628
        %v1805 = vmax.f32 %v1402, %v1631
        %v1806 = vmax.f32 %v1403, %v1633
        %v1807 = vmax.f32 %v1404, %v1635
        %v1808 = vmax.f32 %v1406, %v1638
        %v1809 = vmax.f32 %v1407, %v1640
        %v1810 = vmax.f32 %v1409, %v1643
        %v1811 = vmax.f32 %v1410, %v1645
        %v1812 = vmax.f32 %v1411, %v1647
        %v1813 = vmax.f32 %v1413, %v1650
        %v1814 = vmax.f32 %v1414, %v1652
        %v1815 = vmax.f32 %v1416, %v1655
        %v1816 = vmax.f32 %v1417, %v1657
        %v1817 = vmax.f32 %v1418, %v1659
        %v1818 = vmax.f32 %v1420, %v1662
        %v1819 = vmax.f32 %v1421, %v1664
        %v1820 = vmax.f32 %v1423, %v1667
        %v1821 = vmax.f32 %v1424, %v1669
        %v1822 = vmax.f32 %v1425, %v1671
        %v1823 = vmax.f32 %v1427, %v1674
        %v1824 = vmax.f32 %v1428, %v1676
        %v1825 = vmax.f32 %v1430, %v1679
        %v1826 = vmax.f32 %v1431, %v1681
        %v1827 = vmax.f32 %v1432, %v1683
        %v1828 = vmax.f32 %v1434, %v1686
        %v1829 = vmax.f32 %v1435, %v1688
        %v1830 = vmax.f32 %v1437, %v1691
        %v1831 = vmax.f32 %v1438, %v1693
        %v1832 = vmax.f32 %v1439, %v1695
        %v1833 = vmax.f32 %v1441, %v1698
        %v1834 = vmax.f32 %v1442, %v1700
        %vm1836 = vcmask 1046528
        %v1837 = vrot.slane %v1350, 1
        %v1838 = vrot.slane %v1351, 1
        %v1839 = vsel %vm1836, %v1837, %v1838
        %v1840 = vrot.slane %v1352, 1
        %v1841 = vsel %vm1836, %v1838, %v1840
        %v1842 = vrot.slane %v1353, 1
        %v1843 = vrot.slane %v1354, 1
        %v1844 = vsel %vm1836, %v1842, %v1843
        %v1845 = vrot.slane %v1355, 1
        %v1846 = vsel %vm1836, %v1843, %v1845
        %v1847 = vrot.slane %v1356, 1
        %v1848 = vsel %vm1836, %v1845, %v1847
        %v1849 = vrot.slane %v1357, 1
        %v1850 = vrot.slane %v1358, 1
        %v1851 = vsel %vm1836, %v1849, %v1850
        %v1852 = vrot.slane %v1359, 1
        %v1853 = vsel %vm1836, %v1850, %v1852
        %v1854 = vrot.slane %v1360, 1
        %v1855 = vrot.slane %v1361, 1
        %v1856 = vsel %vm1836, %v1854, %v1855
        %v1857 = vrot.slane %v1362, 1
        %v1858 = vsel %vm1836, %v1855, %v1857
        %v1859 = vrot.slane %v1363, 1
        %v1860 = vsel %vm1836, %v1857, %v1859
        %v1861 = vrot.slane %v1364, 1
        %v1862 = vrot.slane %v1365, 1
        %v1863 = vsel %vm1836, %v1861, %v1862
        %v1864 = vrot.slane %v1366, 1
        %v1865 = vsel %vm1836, %v1862, %v1864
        %v1866 = vrot.slane %v1367, 1
        %v1867 = vrot.slane %v1368, 1
        %v1868 = vsel %vm1836, %v1866, %v1867
        %v1869 = vrot.slane %v1369, 1
        %v1870 = vsel %vm1836, %v1867, %v1869
        %v1871 = vrot.slane %v1370, 1
        %v1872 = vsel %vm1836, %v1869, %v1871
        %v1873 = vrot.slane %v1371, 1
        %v1874 = vrot.slane %v1372, 1
        %v1875 = vsel %vm1836, %v1873, %v1874
        %v1876 = vrot.slane %v1373, 1
        %v1877 = vsel %vm1836, %v1874, %v1876
        %v1878 = vrot.slane %v1374, 1
        %v1879 = vrot.slane %v1375, 1
        %v1880 = vsel %vm1836, %v1878, %v1879
        %v1881 = vrot.slane %v1376, 1
        %v1882 = vsel %vm1836, %v1879, %v1881
        %v1883 = vrot.slane %v1377, 1
        %v1884 = vsel %vm1836, %v1881, %v1883
        %v1885 = vrot.slane %v1378, 1
        %v1886 = vrot.slane %v1379, 1
        %v1887 = vsel %vm1836, %v1885, %v1886
        %v1888 = vrot.slane %v1380, 1
        %v1889 = vsel %vm1836, %v1886, %v1888
        %v1890 = vrot.slane %v1381, 1
        %v1891 = vrot.slane %v1382, 1
        %v1892 = vsel %vm1836, %v1890, %v1891
        %v1893 = vrot.slane %v1383, 1
        %v1894 = vsel %vm1836, %v1891, %v1893
        %v1895 = vrot.slane %v1384, 1
        %v1896 = vsel %vm1836, %v1893, %v1895
        %v1897 = vrot.slane %v1385, 1
        %v1898 = vrot.slane %v1386, 1
        %v1899 = vsel %vm1836, %v1897, %v1898
        %v1900 = vrot.slane %v1387, 1
        %v1901 = vsel %vm1836, %v1898, %v1900
        %v1902 = vrot.slane %v1388, 1
        %v1903 = vrot.slane %v1389, 1
        %v1904 = vsel %vm1836, %v1902, %v1903
        %v1905 = vrot.slane %v1390, 1
        %v1906 = vsel %vm1836, %v1903, %v1905
        %v1907 = vrot.slane %v1391, 1
        %v1908 = vsel %vm1836, %v1905, %v1907
        %v1909 = vrot.slane %v1392, 1
        %v1910 = vrot.slane %v1393, 1
        %v1911 = vsel %vm1836, %v1909, %v1910
        %v1912 = vrot.slane %v1394, 1
        %v1913 = vsel %vm1836, %v1910, %v1912
        %v1914 = vrot.slane %v1395, 1
        %v1915 = vrot.slane %v1396, 1
        %v1916 = vsel %vm1836, %v1914, %v1915
        %v1917 = vrot.slane %v1397, 1
        %v1918 = vsel %vm1836, %v1915, %v1917
        %v1919 = vrot.slane %v1398, 1
        %v1920 = vsel %vm1836, %v1917, %v1919
        %v1921 = vrot.slane %v1399, 1
        %v1922 = vrot.slane %v1400, 1
        %v1923 = vsel %vm1836, %v1921, %v1922
        %v1924 = vrot.slane %v1401, 1
        %v1925 = vsel %vm1836, %v1922, %v1924
        %v1926 = vrot.slane %v1402, 1
        %v1927 = vrot.slane %v1403, 1
        %v1928 = vsel %vm1836, %v1926, %v1927
        %v1929 = vrot.slane %v1404, 1
        %v1930 = vsel %vm1836, %v1927, %v1929
        %v1931 = vrot.slane %v1405, 1
        %v1932 = vsel %vm1836, %v1929, %v1931
        %v1933 = vrot.slane %v1406, 1
        %v1934 = vrot.slane %v1407, 1
        %v1935 = vsel %vm1836, %v1933, %v1934
        %v1936 = vrot.slane %v1408, 1
        %v1937 = vsel %vm1836, %v1934, %v1936
        %v1938 = vrot.slane %v1409, 1
        %v1939 = vrot.slane %v1410, 1
        %v1940 = vsel %vm1836, %v1938, %v1939
        %v1941 = vrot.slane %v1411, 1
        %v1942 = vsel %vm1836, %v1939, %v1941
        %v1943 = vrot.slane %v1412, 1
        %v1944 = vsel %vm1836, %v1941, %v1943
        %v1945 = vrot.slane %v1413, 1
        %v1946 = vrot.slane %v1414, 1
        %v1947 = vsel %vm1836, %v1945, %v1946
        %v1948 = vrot.slane %v1415, 1
        %v1949 = vsel %vm1836, %v1946, %v1948
        %v1950 = vrot.slane %v1416, 1
        %v1951 = vrot.slane %v1417, 1
        %v1952 = vsel %vm1836, %v1950, %v1951
        %v1953 = vrot.slane %v1418, 1
        %v1954 = vsel %vm1836, %v1951, %v1953
        %v1955 = vrot.slane %v1419, 1
        %v1956 = vsel %vm1836, %v1953, %v1955
        %v1957 = vrot.slane %v1420, 1
        %v1958 = vrot.slane %v1421, 1
        %v1959 = vsel %vm1836, %v1957, %v1958
        %v1960 = vrot.slane %v1422, 1
        %v1961 = vsel %vm1836, %v1958, %v1960
        %v1962 = vrot.slane %v1423, 1
        %v1963 = vrot.slane %v1424, 1
        %v1964 = vsel %vm1836, %v1962, %v1963
        %v1965 = vrot.slane %v1425, 1
        %v1966 = vsel %vm1836, %v1963, %v1965
        %v1967 = vrot.slane %v1426, 1
        %v1968 = vsel %vm1836, %v1965, %v1967
        %v1969 = vrot.slane %v1427, 1
        %v1970 = vrot.slane %v1428, 1
        %v1971 = vsel %vm1836, %v1969, %v1970
        %v1972 = vrot.slane %v1429, 1
        %v1973 = vsel %vm1836, %v1970, %v1972
        %v1974 = vrot.slane %v1430, 1
        %v1975 = vrot.slane %v1431, 1
        %v1976 = vsel %vm1836, %v1974, %v1975
        %v1977 = vrot.slane %v1432, 1
        %v1978 = vsel %vm1836, %v1975, %v1977
        %v1979 = vrot.slane %v1433, 1
        %v1980 = vsel %vm1836, %v1977, %v1979
        %v1981 = vrot.slane %v1434, 1
        %v1982 = vrot.slane %v1435, 1
        %v1983 = vsel %vm1836, %v1981, %v1982
        %v1984 = vrot.slane %v1436, 1
        %v1985 = vsel %vm1836, %v1982, %v1984
        %v1986 = vrot.slane %v1437, 1
        %v1987 = vrot.slane %v1438, 1
        %v1988 = vsel %vm1836, %v1986, %v1987
        %v1989 = vrot.slane %v1439, 1
        %v1990 = vsel %vm1836, %v1987, %v1989
        %v1991 = vrot.slane %v1440, 1
        %v1992 = vsel %vm1836, %v1989, %v1991
        %v1993 = vrot.slane %v1441, 1
        %v1994 = vrot.slane %v1442, 1
        %v1995 = vsel %vm1836, %v1993, %v1994
        %v2063 = vmax.f32 %v1768, %v1839
        %v2064 = vmax.f32 %v1769, %v1841
        %v2065 = vmax.f32 %v1770, %v1844
        %v2066 = vmax.f32 %v1771, %v1846
        %v2067 = vmax.f32 %v1772, %v1848
        %v2068 = vmax.f32 %v1773, %v1851
        %v2069 = vmax.f32 %v1774, %v1853
        %v2070 = vmax.f32 %v1775, %v1856
        %v2071 = vmax.f32 %v1776, %v1858
        %v2072 = vmax.f32 %v1777, %v1860
        %v2073 = vmax.f32 %v1778, %v1863
        %v2074 = vmax.f32 %v1779, %v1865
        %v2075 = vmax.f32 %v1780, %v1868
        %v2076 = vmax.f32 %v1781, %v1870
        %v2077 = vmax.f32 %v1782, %v1872
        %v2078 = vmax.f32 %v1783, %v1875
        %v2079 = vmax.f32 %v1784, %v1877
        %v2080 = vmax.f32 %v1785, %v1880
        %v2081 = vmax.f32 %v1786, %v1882
        %v2082 = vmax.f32 %v1787, %v1884
        %v2083 = vmax.f32 %v1788, %v1887
        %v2084 = vmax.f32 %v1789, %v1889
        %v2085 = vmax.f32 %v1790, %v1892
        %v2086 = vmax.f32 %v1791, %v1894
        %v2087 = vmax.f32 %v1792, %v1896
        %v2088 = vmax.f32 %v1793, %v1899
        %v2089 = vmax.f32 %v1794, %v1901
        %v2090 = vmax.f32 %v1795, %v1904
        %v2091 = vmax.f32 %v1796, %v1906
        %v2092 = vmax.f32 %v1797, %v1908
        %v2093 = vmax.f32 %v1798, %v1911
        %v2094 = vmax.f32 %v1799, %v1913
        %v2095 = vmax.f32 %v1800, %v1916
        %v2096 = vmax.f32 %v1801, %v1918
        %v2097 = vmax.f32 %v1802, %v1920
        %v2098 = vmax.f32 %v1803, %v1923
        %v2099 = vmax.f32 %v1804, %v1925
        %v2100 = vmax.f32 %v1805, %v1928
        %v2101 = vmax.f32 %v1806, %v1930
        %v2102 = vmax.f32 %v1807, %v1932
        %v2103 = vmax.f32 %v1808, %v1935
        %v2104 = vmax.f32 %v1809, %v1937
        %v2105 = vmax.f32 %v1810, %v1940
        %v2106 = vmax.f32 %v1811, %v1942
        %v2107 = vmax.f32 %v1812, %v1944
        %v2108 = vmax.f32 %v1813, %v1947
        %v2109 = vmax.f32 %v1814, %v1949
        %v2110 = vmax.f32 %v1815, %v1952
        %v2111 = vmax.f32 %v1816, %v1954
        %v2112 = vmax.f32 %v1817, %v1956
        %v2113 = vmax.f32 %v1818, %v1959
        %v2114 = vmax.f32 %v1819, %v1961
        %v2115 = vmax.f32 %v1820, %v1964
        %v2116 = vmax.f32 %v1821, %v1966
        %v2117 = vmax.f32 %v1822, %v1968
        %v2118 = vmax.f32 %v1823, %v1971
        %v2119 = vmax.f32 %v1824, %v1973
        %v2120 = vmax.f32 %v1825, %v1976
        %v2121 = vmax.f32 %v1826, %v1978
        %v2122 = vmax.f32 %v1827, %v1980
        %v2123 = vmax.f32 %v1828, %v1983
        %v2124 = vmax.f32 %v1829, %v1985
        %v2125 = vmax.f32 %v1830, %v1988
        %v2126 = vmax.f32 %v1831, %v1990
        %v2127 = vmax.f32 %v1832, %v1992
        %v2128 = vmax.f32 %v1833, %v1995
        %v2129 = vmax.f32 %v1834, %v1994
        %vm2169 = vcmask 1043456
        %v2170 = vrot.slane %v2065, 4
        %v2171 = vrot.slane %v2066, 4
        %v2172 = vsel %vm2169, %v2170, %v2171
        %v2173 = vrot.slane %v2067, 4
        %v2174 = vsel %vm2169, %v2171, %v2173
        %v2175 = vrot.slane %v2070, 4
        %v2176 = vrot.slane %v2071, 4
        %v2177 = vsel %vm2169, %v2175, %v2176
        %v2178 = vrot.slane %v2072, 4
        %v2179 = vsel %vm2169, %v2176, %v2178
        %v2180 = vrot.slane %v2075, 4
        %v2181 = vrot.slane %v2076, 4
        %v2182 = vsel %vm2169, %v2180, %v2181
        %v2183 = vrot.slane %v2077, 4
        %v2184 = vsel %vm2169, %v2181, %v2183
        %v2185 = vrot.slane %v2080, 4
        %v2186 = vrot.slane %v2081, 4
        %v2187 = vsel %vm2169, %v2185, %v2186
        %v2188 = vrot.slane %v2082, 4
        %v2189 = vsel %vm2169, %v2186, %v2188
        %v2190 = vrot.slane %v2085, 4
        %v2191 = vrot.slane %v2086, 4
        %v2192 = vsel %vm2169, %v2190, %v2191
        %v2193 = vrot.slane %v2087, 4
        %v2194 = vsel %vm2169, %v2191, %v2193
        %v2195 = vrot.slane %v2090, 4
        %v2196 = vrot.slane %v2091, 4
        %v2197 = vsel %vm2169, %v2195, %v2196
        %v2198 = vrot.slane %v2092, 4
        %v2199 = vsel %vm2169, %v2196, %v2198
        %v2200 = vrot.slane %v2095, 4
        %v2201 = vrot.slane %v2096, 4
        %v2202 = vsel %vm2169, %v2200, %v2201
        %v2203 = vrot.slane %v2097, 4
        %v2204 = vsel %vm2169, %v2201, %v2203
        %v2205 = vrot.slane %v2100, 4
        %v2206 = vrot.slane %v2101, 4
        %v2207 = vsel %vm2169, %v2205, %v2206
        %v2208 = vrot.slane %v2102, 4
        %v2209 = vsel %vm2169, %v2206, %v2208
        %v2210 = vrot.slane %v2105, 4
        %v2211 = vrot.slane %v2106, 4
        %v2212 = vsel %vm2169, %v2210, %v2211
        %v2213 = vrot.slane %v2107, 4
        %v2214 = vsel %vm2169, %v2211, %v2213
        %v2215 = vrot.slane %v2110, 4
        %v2216 = vrot.slane %v2111, 4
        %v2217 = vsel %vm2169, %v2215, %v2216
        %v2218 = vrot.slane %v2112, 4
        %v2219 = vsel %vm2169, %v2216, %v2218
        %v2220 = vrot.slane %v2115, 4
        %v2221 = vrot.slane %v2116, 4
        %v2222 = vsel %vm2169, %v2220, %v2221
        %v2223 = vrot.slane %v2117, 4
        %v2224 = vsel %vm2169, %v2221, %v2223
        %v2225 = vrot.slane %v2120, 4
        %v2226 = vrot.slane %v2121, 4
        %v2227 = vsel %vm2169, %v2225, %v2226
        %v2228 = vrot.slane %v2122, 4
        %v2229 = vsel %vm2169, %v2226, %v2228
        %v2230 = vrot.slane %v2125, 4
        %v2231 = vrot.slane %v2126, 4
        %v2232 = vsel %vm2169, %v2230, %v2231
        %v2233 = vrot.slane %v2127, 4
        %v2234 = vsel %vm2169, %v2231, %v2233
        %v2261 = vmax.f32 %v2063, %v2172
        %v2262 = vmax.f32 %v2064, %v2174
        %v2263 = vmax.f32 %v2068, %v2177
        %v2264 = vmax.f32 %v2069, %v2179
        %v2265 = vmax.f32 %v2073, %v2182
        %v2266 = vmax.f32 %v2074, %v2184
        %v2267 = vmax.f32 %v2078, %v2187
        %v2268 = vmax.f32 %v2079, %v2189
        %v2269 = vmax.f32 %v2083, %v2192
        %v2270 = vmax.f32 %v2084, %v2194
        %v2271 = vmax.f32 %v2088, %v2197
        %v2272 = vmax.f32 %v2089, %v2199
        %v2273 = vmax.f32 %v2093, %v2202
        %v2274 = vmax.f32 %v2094, %v2204
        %v2275 = vmax.f32 %v2098, %v2207
        %v2276 = vmax.f32 %v2099, %v2209
        %v2277 = vmax.f32 %v2103, %v2212
        %v2278 = vmax.f32 %v2104, %v2214
        %v2279 = vmax.f32 %v2108, %v2217
        %v2280 = vmax.f32 %v2109, %v2219
        %v2281 = vmax.f32 %v2113, %v2222
        %v2282 = vmax.f32 %v2114, %v2224
        %v2283 = vmax.f32 %v2118, %v2227
        %v2284 = vmax.f32 %v2119, %v2229
        %v2285 = vmax.f32 %v2123, %v2232
        %v2286 = vmax.f32 %v2124, %v2234
        %v2287 = vmax.f32 %v2261, %v2068
        %v2288 = vmax.f32 %v2262, %v2069
        %v2289 = vmax.f32 %v2263, %v2073
        %v2290 = vmax.f32 %v2264, %v2074
        %v2291 = vmax.f32 %v2265, %v2078
        %v2292 = vmax.f32 %v2266, %v2079
        %v2293 = vmax.f32 %v2267, %v2083
        %v2294 = vmax.f32 %v2268, %v2084
        %v2295 = vmax.f32 %v2269, %v2088
        %v2296 = vmax.f32 %v2270, %v2089
        %v2297 = vmax.f32 %v2271, %v2093
        %v2298 = vmax.f32 %v2272, %v2094
        %v2299 = vmax.f32 %v2273, %v2098
        %v2300 = vmax.f32 %v2274, %v2099
        %v2301 = vmax.f32 %v2275, %v2103
        %v2302 = vmax.f32 %v2276, %v2104
        %v2303 = vmax.f32 %v2277, %v2108
        %v2304 = vmax.f32 %v2278, %v2109
        %v2305 = vmax.f32 %v2279, %v2113
        %v2306 = vmax.f32 %v2280, %v2114
        %v2307 = vmax.f32 %v2281, %v2118
        %v2308 = vmax.f32 %v2282, %v2119
        %v2309 = vmax.f32 %v2283, %v2123
        %v2310 = vmax.f32 %v2284, %v2124
        %v2311 = vmax.f32 %v2285, %v2128
        %v2312 = vmax.f32 %v2286, %v2129
        %vm2313 = vcmask 523264
        %2314 = vst.msk [vmem:[#allocation2] sm:$0xff] %vm2313, 0.0
        %2315 = vst.msk [vmem:[#allocation2 + $0x8] sm:$0xff] %vm2313, 0.0
        %2316 = vst.msk [vmem:[#allocation2 + $0x10] sm:$0xff] %vm2313, 0.0
        %2317 = vst.msk [vmem:[#allocation2 + $0x18] sm:$0xff] %vm2313, 0.0
        %2318 = vst.msk [vmem:[#allocation2 + $0x20] sm:$0xff] %vm2313, 0.0
        %2319 = vst.msk [vmem:[#allocation2 + $0x28] sm:$0xff] %vm2313, 0.0
        %2320 = vst.msk [vmem:[#allocation2 + $0x30] sm:$0xff] %vm2313, 0.0
        %2321 = vst.msk [vmem:[#allocation2 + $0x38] sm:$0xff] %vm2313, 0.0
        %2322 = vst.msk [vmem:[#allocation2 + $0x40] sm:$0xff] %vm2313, 0.0
        %2323 = vst.msk [vmem:[#allocation2 + $0x48] sm:$0xff] %vm2313, 0.0
        %2324 = vst.msk [vmem:[#allocation2 + $0x50] sm:$0xff] %vm2313, 0.0
        %2325 = vst.msk [vmem:[#allocation2 + $0x58] sm:$0xff] %vm2313, 0.0
        %2326 = vst.msk [vmem:[#allocation2 + $0x60] sm:$0xff] %vm2313, 0.0
        %2327 = vst.msk [vmem:[#allocation2 + $0x68] sm:$0xff] %vm2313, 0.0
        %2328 = vst.msk [vmem:[#allocation2 + $0x70] sm:$0xff] %vm2313, 0.0
        %2329 = vst.msk [vmem:[#allocation2 + $0x78] sm:$0xff] %vm2313, 0.0
        %2330 = vst.msk [vmem:[#allocation2 + $0x80] sm:$0xff] %vm2313, 0.0
        %2331 = vst.msk [vmem:[#allocation2 + $0x88] sm:$0xff] %vm2313, 0.0
        %2332 = vst.msk [vmem:[#allocation2 + $0x90] sm:$0xff] %vm2313, 0.0
        %2333 = vst.msk [vmem:[#allocation2 + $0x98] sm:$0xff] %vm2313, 0.0
        %2334 = vst.msk [vmem:[#allocation2 + $0xa0] sm:$0xff] %vm2313, 0.0
        %2335 = vst.msk [vmem:[#allocation2 + $0xa8] sm:$0xff] %vm2313, 0.0
        %2336 = vst.msk [vmem:[#allocation2 + $0xb0] sm:$0xff] %vm2313, 0.0
        %2337 = vst.msk [vmem:[#allocation2 + $0xb8] sm:$0xff] %vm2313, 0.0
        %2338 = vst.msk [vmem:[#allocation2 + $0xc0] sm:$0xff] %vm2313, 0.0
        %2339 = vst.msk [vmem:[#allocation2 + $0xc8] sm:$0xff] %vm2313, 0.0
        %2340 = vst.msk [vmem:[#allocation2 + $0xd0] sm:$0xff] %vm2313, 0.0
        %2341 = vst.msk [vmem:[#allocation2 + $0xd8] sm:$0xff] %vm2313, 0.0
        %2342 = vst.msk [vmem:[#allocation2 + $0xe0] sm:$0xff] %vm2313, 0.0
        %2343 = vst.msk [vmem:[#allocation2] sm:$0xff] %vm2313, %v2287
        %vm2344 = vcmask 520192
        %2345 = vst.msk [vmem:[#allocation2 + $0x8] sm:$0x1f] %vm2344, %v2288
        %2346 = vst.msk [vmem:[#allocation2 + $0x11] sm:$0xff] %vm2313, %v2289
        %2347 = vst.msk [vmem:[#allocation2 + $0x19] sm:$0x1f] %vm2344, %v2290
        %2348 = vst.msk [vmem:[#allocation2 + $0x22] sm:$0xff] %vm2313, %v2291
        %2349 = vst.msk [vmem:[#allocation2 + $0x2a] sm:$0x1f] %vm2344, %v2292
        %2350 = vst.msk [vmem:[#allocation2 + $0x33] sm:$0xff] %vm2313, %v2293
        %2351 = vst.msk [vmem:[#allocation2 + $0x3b] sm:$0x1f] %vm2344, %v2294
        %2352 = vst.msk [vmem:[#allocation2 + $0x44] sm:$0xff] %vm2313, %v2295
        %2353 = vst.msk [vmem:[#allocation2 + $0x4c] sm:$0x1f] %vm2344, %v2296
        %2354 = vst.msk [vmem:[#allocation2 + $0x55] sm:$0xff] %vm2313, %v2297
        %2355 = vst.msk [vmem:[#allocation2 + $0x5d] sm:$0x1f] %vm2344, %v2298
        %2356 = vst.msk [vmem:[#allocation2 + $0x66] sm:$0xff] %vm2313, %v2299
        %2357 = vst.msk [vmem:[#allocation2 + $0x6e] sm:$0x1f] %vm2344, %v2300
        %2358 = vst.msk [vmem:[#allocation2 + $0x77] sm:$0xff] %vm2313, %v2301
        %2359 = vst.msk [vmem:[#allocation2 + $0x7f] sm:$0x1f] %vm2344, %v2302
        %2360 = vst.msk [vmem:[#allocation2 + $0x88] sm:$0xff] %vm2313, %v2303
        %2361 = vst.msk [vmem:[#allocation2 + $0x90] sm:$0x1f] %vm2344, %v2304
        %2362 = vst.msk [vmem:[#allocation2 + $0x99] sm:$0xff] %vm2313, %v2305
        %2363 = vst.msk [vmem:[#allocation2 + $0xa1] sm:$0x1f] %vm2344, %v2306
        %2364 = vst.msk [vmem:[#allocation2 + $0xaa] sm:$0xff] %vm2313, %v2307
        %2365 = vst.msk [vmem:[#allocation2 + $0xb2] sm:$0x1f] %vm2344, %v2308
        %2366 = vst.msk [vmem:[#allocation2 + $0xbb] sm:$0xff] %vm2313, %v2309
        %2367 = vst.msk [vmem:[#allocation2 + $0xc3] sm:$0x1f] %vm2344, %v2310
        %2368 = vst.msk [vmem:[#allocation2 + $0xcc] sm:$0xff] %vm2313, %v2311
        %2369 = vst.msk [vmem:[#allocation2 + $0xd4] sm:$0x1f] %vm2344, %v2312
        %v2370 = vld [vmem:[#allocation2] sm:$0xff]
        %v2371 = vld [vmem:[#allocation2 + $0x8] sm:$0xff]
        %v2372 = vld [vmem:[#allocation2 + $0x10] sm:$0xff]
        %v2373 = vld [vmem:[#allocation2 + $0x18] sm:$0xff]
        %v2374 = vld [vmem:[#allocation2 + $0x20] sm:$0xff]
        %v2375 = vld [vmem:[#allocation2 + $0x28] sm:$0xff]
        %v2376 = vld [vmem:[#allocation2 + $0x30] sm:$0xff]
        %v2377 = vld [vmem:[#allocation2 + $0x38] sm:$0xff]
        %v2378 = vld [vmem:[#allocation2 + $0x40] sm:$0xff]
        %v2379 = vld [vmem:[#allocation2 + $0x48] sm:$0xff]
        %v2380 = vld [vmem:[#allocation2 + $0x50] sm:$0xff]
        %v2381 = vld [vmem:[#allocation2 + $0x58] sm:$0xff]
        %v2382 = vld [vmem:[#allocation2 + $0x60] sm:$0xff]
        %v2383 = vld [vmem:[#allocation2 + $0x68] sm:$0xff]
        %v2384 = vld [vmem:[#allocation2 + $0x70] sm:$0xff]
        %v2385 = vld [vmem:[#allocation2 + $0x78] sm:$0xff]
        %v2386 = vld [vmem:[#allocation2 + $0x80] sm:$0xff]
        %v2387 = vld [vmem:[#allocation2 + $0x88] sm:$0xff]
        %v2388 = vld [vmem:[#allocation2 + $0x90] sm:$0xff]
        %v2389 = vld [vmem:[#allocation2 + $0x98] sm:$0x1]
        %v2390 = vld [vmem:[#allocation2 + $0x1] sm:$0xff]
        %v2391 = vld [vmem:[#allocation2 + $0x9] sm:$0xff]
        %v2392 = vld [vmem:[#allocation2 + $0x11] sm:$0xff]
        %v2393 = vld [vmem:[#allocation2 + $0x19] sm:$0xff]
        %v2394 = vld [vmem:[#allocation2 + $0x21] sm:$0xff]
        %v2395 = vld [vmem:[#allocation2 + $0x29] sm:$0xff]
        %v2396 = vld [vmem:[#allocation2 + $0x31] sm:$0xff]
        %v2397 = vld [vmem:[#allocation2 + $0x39] sm:$0xff]
        %v2398 = vld [vmem:[#allocation2 + $0x41] sm:$0xff]
        %v2399 = vld [vmem:[#allocation2 + $0x49] sm:$0xff]
        %v2400 = vld [vmem:[#allocation2 + $0x51] sm:$0xff]
        %v2401 = vld [vmem:[#allocation2 + $0x59] sm:$0xff]
        %v2402 = vld [vmem:[#allocation2 + $0x61] sm:$0xff]
        %v2403 = vld [vmem:[#allocation2 + $0x69] sm:$0xff]
        %v2404 = vld [vmem:[#allocation2 + $0x71] sm:$0xff]
        %v2405 = vld [vmem:[#allocation2 + $0x79] sm:$0xff]
        %v2406 = vld [vmem:[#allocation2 + $0x81] sm:$0xff]
        %v2407 = vld [vmem:[#allocation2 + $0x89] sm:$0xff]
        %v2408 = vld [vmem:[#allocation2 + $0x91] sm:$0xff]
        %v2409 = vld [vmem:[#allocation2 + $0x99] sm:$0x1]
        %v2410 = vld [vmem:[#allocation2 + $0x2] sm:$0xff]
        %v2411 = vld [vmem:[#allocation2 + $0xa] sm:$0xff]
        %v2412 = vld [vmem:[#allocation2 + $0x12] sm:$0xff]
        %v2413 = vld [vmem:[#allocation2 + $0x1a] sm:$0xff]
        %v2414 = vld [vmem:[#allocation2 + $0x22] sm:$0xff]
        %v2415 = vld [vmem:[#allocation2 + $0x2a] sm:$0xff]
        %v2416 = vld [vmem:[#allocation2 + $0x32] sm:$0xff]
        %v2417 = vld [vmem:[#allocation2 + $0x3a] sm:$0xff]
        %v2418 = vld [vmem:[#allocation2 + $0x42] sm:$0xff]
        %v2419 = vld [vmem:[#allocation2 + $0x4a] sm:$0xff]
        %v2420 = vld [vmem:[#allocation2 + $0x52] sm:$0xff]
        %v2421 = vld [vmem:[#allocation2 + $0x5a] sm:$0xff]
        %v2422 = vld [vmem:[#allocation2 + $0x62] sm:$0xff]
        %v2423 = vld [vmem:[#allocation2 + $0x6a] sm:$0xff]
        %v2424 = vld [vmem:[#allocation2 + $0x72] sm:$0xff]
        %v2425 = vld [vmem:[#allocation2 + $0x7a] sm:$0xff]
        %v2426 = vld [vmem:[#allocation2 + $0x82] sm:$0xff]
        %v2427 = vld [vmem:[#allocation2 + $0x8a] sm:$0xff]
        %v2428 = vld [vmem:[#allocation2 + $0x92] sm:$0xff]
        %v2429 = vld [vmem:[#allocation2 + $0x9a] sm:$0x1]
        %v2430 = vld [vmem:[#allocation2 + $0x3] sm:$0xff]
        %v2431 = vld [vmem:[#allocation2 + $0xb] sm:$0xff]
        %v2432 = vld [vmem:[#allocation2 + $0x13] sm:$0xff]
        %v2433 = vld [vmem:[#allocation2 + $0x1b] sm:$0xff]
        %v2434 = vld [vmem:[#allocation2 + $0x23] sm:$0xff]
        %v2435 = vld [vmem:[#allocation2 + $0x2b] sm:$0xff]
        %v2436 = vld [vmem:[#allocation2 + $0x33] sm:$0xff]
        %v2437 = vld [vmem:[#allocation2 + $0x3b] sm:$0xff]
        %v2438 = vld [vmem:[#allocation2 + $0x43] sm:$0xff]
        %v2439 = vld [vmem:[#allocation2 + $0x4b] sm:$0xff]
        %v2440 = vld [vmem:[#allocation2 + $0x53] sm:$0xff]
        %v2441 = vld [vmem:[#allocation2 + $0x5b] sm:$0xff]
        %v2442 = vld [vmem:[#allocation2 + $0x63] sm:$0xff]
        %v2443 = vld [vmem:[#allocation2 + $0x6b] sm:$0xff]
        %v2444 = vld [vmem:[#allocation2 + $0x73] sm:$0xff]
        %v2445 = vld [vmem:[#allocation2 + $0x7b] sm:$0xff]
        %v2446 = vld [vmem:[#allocation2 + $0x83] sm:$0xff]
        %v2447 = vld [vmem:[#allocation2 + $0x8b] sm:$0xff]
        %v2448 = vld [vmem:[#allocation2 + $0x93] sm:$0xff]
        %v2449 = vld [vmem:[#allocation2 + $0x9b] sm:$0x1]
        %v2450 = vld [vmem:[#allocation2 + $0x4] sm:$0xff]
        %v2451 = vld [vmem:[#allocation2 + $0xc] sm:$0xff]
        %v2452 = vld [vmem:[#allocation2 + $0x14] sm:$0xff]
        %v2453 = vld [vmem:[#allocation2 + $0x1c] sm:$0xff]
        %v2454 = vld [vmem:[#allocation2 + $0x24] sm:$0xff]
        %v2455 = vld [vmem:[#allocation2 + $0x2c] sm:$0xff]
        %v2456 = vld [vmem:[#allocation2 + $0x34] sm:$0xff]
        %v2457 = vld [vmem:[#allocation2 + $0x3c] sm:$0xff]
        %v2458 = vld [vmem:[#allocation2 + $0x44] sm:$0xff]
        %v2459 = vld [vmem:[#allocation2 + $0x4c] sm:$0xff]
        %v2460 = vld [vmem:[#allocation2 + $0x54] sm:$0xff]
        %v2461 = vld [vmem:[#allocation2 + $0x5c] sm:$0xff]
        %v2462 = vld [vmem:[#allocation2 + $0x64] sm:$0xff]
        %v2463 = vld [vmem:[#allocation2 + $0x6c] sm:$0xff]
        %v2464 = vld [vmem:[#allocation2 + $0x74] sm:$0xff]
        %v2465 = vld [vmem:[#allocation2 + $0x7c] sm:$0xff]
        %v2466 = vld [vmem:[#allocation2 + $0x84] sm:$0xff]
        %v2467 = vld [vmem:[#allocation2 + $0x8c] sm:$0xff]
        %v2468 = vld [vmem:[#allocation2 + $0x94] sm:$0xff]
        %v2469 = vld [vmem:[#allocation2 + $0x9c] sm:$0x1]
        %v2470 = vld [vmem:[#allocation2 + $0x99] sm:$0xff]
        %v2471 = vld [vmem:[#allocation2 + $0xa1] sm:$0xff]
        %v2472 = vld [vmem:[#allocation2 + $0xa9] sm:$0x1]
        %v2473 = vld [vmem:[#allocation2 + $0x9a] sm:$0xff]
        %v2474 = vld [vmem:[#allocation2 + $0xa2] sm:$0xff]
        %v2475 = vld [vmem:[#allocation2 + $0xaa] sm:$0x1]
        %v2476 = vld [vmem:[#allocation2 + $0x9b] sm:$0xff]
        %v2477 = vld [vmem:[#allocation2 + $0xa3] sm:$0xff]
        %v2478 = vld [vmem:[#allocation2 + $0xab] sm:$0x1]
        %v2479 = vld [vmem:[#allocation2 + $0x9c] sm:$0xff]
        %v2480 = vld [vmem:[#allocation2 + $0xa4] sm:$0xff]
        %v2481 = vld [vmem:[#allocation2 + $0xac] sm:$0x1]
        %v2482 = vld [vmem:[#allocation2 + $0x15] sm:$0xff]
        %v2483 = vld [vmem:[#allocation2 + $0x1d] sm:$0xff]
        %v2484 = vld [vmem:[#allocation2 + $0x25] sm:$0xff]
        %v2485 = vld [vmem:[#allocation2 + $0x2d] sm:$0xff]
        %v2486 = vld [vmem:[#allocation2 + $0x35] sm:$0xff]
        %v2487 = vld [vmem:[#allocation2 + $0x3d] sm:$0xff]
        %v2488 = vld [vmem:[#allocation2 + $0x45] sm:$0xff]
        %v2489 = vld [vmem:[#allocation2 + $0x4d] sm:$0xff]
        %v2490 = vld [vmem:[#allocation2 + $0x55] sm:$0xff]
        %v2491 = vld [vmem:[#allocation2 + $0x5d] sm:$0xff]
        %v2492 = vld [vmem:[#allocation2 + $0x65] sm:$0xff]
        %v2493 = vld [vmem:[#allocation2 + $0x6d] sm:$0xff]
        %v2494 = vld [vmem:[#allocation2 + $0x75] sm:$0xff]
        %v2495 = vld [vmem:[#allocation2 + $0x7d] sm:$0xff]
        %v2496 = vld [vmem:[#allocation2 + $0x85] sm:$0xff]
        %v2497 = vld [vmem:[#allocation2 + $0x8d] sm:$0xff]
        %v2498 = vld [vmem:[#allocation2 + $0x95] sm:$0xff]
        %v2499 = vld [vmem:[#allocation2 + $0x9d] sm:$0xff]
        %v2500 = vld [vmem:[#allocation2 + $0xa5] sm:$0xff]
        %v2501 = vld [vmem:[#allocation2 + $0xad] sm:$0x1]
        %v2502 = vld [vmem:[#allocation2 + $0xaa] sm:$0xff]
        %v2503 = vld [vmem:[#allocation2 + $0xb2] sm:$0xff]
        %v2504 = vld [vmem:[#allocation2 + $0xba] sm:$0x1]
        %v2505 = vld [vmem:[#allocation2 + $0xab] sm:$0xff]
        %v2506 = vld [vmem:[#allocation2 + $0xb3] sm:$0xff]
        %v2507 = vld [vmem:[#allocation2 + $0xbb] sm:$0x1]
        %v2508 = vld [vmem:[#allocation2 + $0xac] sm:$0xff]
        %v2509 = vld [vmem:[#allocation2 + $0xb4] sm:$0xff]
        %v2510 = vld [vmem:[#allocation2 + $0xbc] sm:$0x1]
        %v2511 = vld [vmem:[#allocation2 + $0xad] sm:$0xff]
        %v2512 = vld [vmem:[#allocation2 + $0xb5] sm:$0xff]
        %v2513 = vld [vmem:[#allocation2 + $0xbd] sm:$0x1]
        %v2514 = vld [vmem:[#allocation2 + $0x26] sm:$0xff]
        %v2515 = vld [vmem:[#allocation2 + $0x2e] sm:$0xff]
        %v2516 = vld [vmem:[#allocation2 + $0x36] sm:$0xff]
        %v2517 = vld [vmem:[#allocation2 + $0x3e] sm:$0xff]
        %v2518 = vld [vmem:[#allocation2 + $0x46] sm:$0xff]
        %v2519 = vld [vmem:[#allocation2 + $0x4e] sm:$0xff]
        %v2520 = vld [vmem:[#allocation2 + $0x56] sm:$0xff]
        %v2521 = vld [vmem:[#allocation2 + $0x5e] sm:$0xff]
        %v2522 = vld [vmem:[#allocation2 + $0x66] sm:$0xff]
        %v2523 = vld [vmem:[#allocation2 + $0x6e] sm:$0xff]
        %v2524 = vld [vmem:[#allocation2 + $0x76] sm:$0xff]
        %v2525 = vld [vmem:[#allocation2 + $0x7e] sm:$0xff]
        %v2526 = vld [vmem:[#allocation2 + $0x86] sm:$0xff]
        %v2527 = vld [vmem:[#allocation2 + $0x8e] sm:$0xff]
        %v2528 = vld [vmem:[#allocation2 + $0x96] sm:$0xff]
        %v2529 = vld [vmem:[#allocation2 + $0x9e] sm:$0xff]
        %v2530 = vld [vmem:[#allocation2 + $0xa6] sm:$0xff]
        %v2531 = vld [vmem:[#allocation2 + $0xae] sm:$0xff]
        %v2532 = vld [vmem:[#allocation2 + $0xb6] sm:$0xff]
        %v2533 = vld [vmem:[#allocation2 + $0xbe] sm:$0x1]
        %v2534 = vld [vmem:[#allocation2 + $0xbb] sm:$0xff]
        %v2535 = vld [vmem:[#allocation2 + $0xc3] sm:$0xff]
        %v2536 = vld [vmem:[#allocation2 + $0xcb] sm:$0x1]
        %v2537 = vld [vmem:[#allocation2 + $0xbc] sm:$0xff]
        %v2538 = vld [vmem:[#allocation2 + $0xc4] sm:$0xff]
        %v2539 = vld [vmem:[#allocation2 + $0xcc] sm:$0x1]
        %v2540 = vld [vmem:[#allocation2 + $0xbd] sm:$0xff]
        %v2541 = vld [vmem:[#allocation2 + $0xc5] sm:$0xff]
        %v2542 = vld [vmem:[#allocation2 + $0xcd] sm:$0x1]
        %v2543 = vld [vmem:[#allocation2 + $0xbe] sm:$0xff]
        %v2544 = vld [vmem:[#allocation2 + $0xc6] sm:$0xff]
        %v2545 = vld [vmem:[#allocation2 + $0xce] sm:$0x1]
        %v2546 = vld [vmem:[#allocation2 + $0x37] sm:$0xff]
        %v2547 = vld [vmem:[#allocation2 + $0x3f] sm:$0xff]
        %v2548 = vld [vmem:[#allocation2 + $0x47] sm:$0xff]
        %v2549 = vld [vmem:[#allocation2 + $0x4f] sm:$0xff]
        %v2550 = vld [vmem:[#allocation2 + $0x57] sm:$0xff]
        %v2551 = vld [vmem:[#allocation2 + $0x5f] sm:$0xff]
        %v2552 = vld [vmem:[#allocation2 + $0x67] sm:$0xff]
        %v2553 = vld [vmem:[#allocation2 + $0x6f] sm:$0xff]
        %v2554 = vld [vmem:[#allocation2 + $0x77] sm:$0xff]
        %v2555 = vld [vmem:[#allocation2 + $0x7f] sm:$0xff]
        %v2556 = vld [vmem:[#allocation2 + $0x87] sm:$0xff]
        %v2557 = vld [vmem:[#allocation2 + $0x8f] sm:$0xff]
        %v2558 = vld [vmem:[#allocation2 + $0x97] sm:$0xff]
        %v2559 = vld [vmem:[#allocation2 + $0x9f] sm:$0xff]
        %v2560 = vld [vmem:[#allocation2 + $0xa7] sm:$0xff]
        %v2561 = vld [vmem:[#allocation2 + $0xaf] sm:$0xff]
        %v2562 = vld [vmem:[#allocation2 + $0xb7] sm:$0xff]
        %v2563 = vld [vmem:[#allocation2 + $0xbf] sm:$0xff]
        %v2564 = vld [vmem:[#allocation2 + $0xc7] sm:$0xff]
        %v2565 = vld [vmem:[#allocation2 + $0xcf] sm:$0x1]
        %v2566 = vld [vmem:[#allocation2 + $0xcc] sm:$0xff]
        %v2567 = vld [vmem:[#allocation2 + $0xd4] sm:$0xff]
        %v2568 = vld [vmem:[#allocation2 + $0xdc] sm:$0x1]
        %v2569 = vld [vmem:[#allocation2 + $0xcd] sm:$0xff]
        %v2570 = vld [vmem:[#allocation2 + $0xd5] sm:$0xff]
        %v2571 = vld [vmem:[#allocation2 + $0xdd] sm:$0x1]
        %v2572 = vld [vmem:[#allocation2 + $0xce] sm:$0xff]
        %v2573 = vld [vmem:[#allocation2 + $0xd6] sm:$0xff]
        %v2574 = vld [vmem:[#allocation2 + $0xde] sm:$0x1]
        %v2575 = vld [vmem:[#allocation2 + $0xcf] sm:$0xff]
        %v2576 = vld [vmem:[#allocation2 + $0xd7] sm:$0xff]
        %v2577 = vld [vmem:[#allocation2 + $0xdf] sm:$0x1]
        %v2578 = vld [vmem:[#allocation2 + $0x98] sm:$0xff]
        %v2579 = vld [vmem:[#allocation2 + $0xa0] sm:$0xff]
        %v2580 = vld [vmem:[#allocation2 + $0xa8] sm:$0xff]
        %v2581 = vld [vmem:[#allocation2 + $0xb0] sm:$0xff]
        %v2582 = vld [vmem:[#allocation2 + $0xb8] sm:$0xff]
        %v2583 = vld [vmem:[#allocation2 + $0xc0] sm:$0xff]
        %v2584 = vld [vmem:[#allocation2 + $0xc8] sm:$0xff]
        %v2585 = vld [vmem:[#allocation2 + $0xd0] sm:$0xff]
        %v2586 = vld [vmem:[#allocation2 + $0xd8] sm:$0xff]
        %v2587 = vld [vmem:[#allocation2 + $0xe0] sm:$0x1]
        %2608 = vrot.lane.b32.xlu0 %v2390, 64
        %v2609 = vpop.permute.xlu0 %2608
        %2610 = vrot.lane.b32.xlu0 %v2391, 64
        %v2611 = vpop.permute.xlu0 %2610
        %2612 = vrot.lane.b32.xlu0 %v2392, 64
        %v2613 = vpop.permute.xlu0 %2612
        %2614 = vrot.lane.b32.xlu0 %v2393, 64
        %v2615 = vpop.permute.xlu0 %2614
        %2616 = vrot.lane.b32.xlu0 %v2394, 64
        %v2617 = vpop.permute.xlu0 %2616
        %2618 = vrot.lane.b32.xlu0 %v2395, 64
        %v2619 = vpop.permute.xlu0 %2618
        %2620 = vrot.lane.b32.xlu0 %v2396, 64
        %v2621 = vpop.permute.xlu0 %2620
        %2622 = vrot.lane.b32.xlu0 %v2397, 64
        %v2623 = vpop.permute.xlu0 %2622
        %2624 = vrot.lane.b32.xlu0 %v2398, 64
        %v2625 = vpop.permute.xlu0 %2624
        %2626 = vrot.lane.b32.xlu0 %v2399, 64
        %v2627 = vpop.permute.xlu0 %2626
        %2628 = vrot.lane.b32.xlu0 %v2400, 64
        %v2629 = vpop.permute.xlu0 %2628
        %2630 = vrot.lane.b32.xlu0 %v2401, 64
        %v2631 = vpop.permute.xlu0 %2630
        %2632 = vrot.lane.b32.xlu0 %v2402, 64
        %v2633 = vpop.permute.xlu0 %2632
        %2634 = vrot.lane.b32.xlu0 %v2403, 64
        %v2635 = vpop.permute.xlu0 %2634
        %2636 = vrot.lane.b32.xlu0 %v2404, 64
        %v2637 = vpop.permute.xlu0 %2636
        %2638 = vrot.lane.b32.xlu0 %v2405, 64
        %v2639 = vpop.permute.xlu0 %2638
        %2640 = vrot.lane.b32.xlu0 %v2406, 64
        %v2641 = vpop.permute.xlu0 %2640
        %2642 = vrot.lane.b32.xlu0 %v2407, 64
        %v2643 = vpop.permute.xlu0 %2642
        %2644 = vrot.lane.b32.xlu0 %v2408, 64
        %v2645 = vpop.permute.xlu0 %2644
        %2646 = vrot.lane.b32.xlu0 %v2409, 64
        %v2647 = vpop.permute.xlu0 %2646
        %2688 = vrot.lane.b32.xlu0 %v2430, 64
        %v2689 = vpop.permute.xlu0 %2688
        %2690 = vrot.lane.b32.xlu0 %v2431, 64
        %v2691 = vpop.permute.xlu0 %2690
        %2692 = vrot.lane.b32.xlu0 %v2432, 64
        %v2693 = vpop.permute.xlu0 %2692
        %2694 = vrot.lane.b32.xlu0 %v2433, 64
        %v2695 = vpop.permute.xlu0 %2694
        %2696 = vrot.lane.b32.xlu0 %v2434, 64
        %v2697 = vpop.permute.xlu0 %2696
        %2698 = vrot.lane.b32.xlu0 %v2435, 64
        %v2699 = vpop.permute.xlu0 %2698
        %2700 = vrot.lane.b32.xlu0 %v2436, 64
        %v2701 = vpop.permute.xlu0 %2700
        %2702 = vrot.lane.b32.xlu0 %v2437, 64
        %v2703 = vpop.permute.xlu0 %2702
        %2704 = vrot.lane.b32.xlu0 %v2438, 64
        %v2705 = vpop.permute.xlu0 %2704
        %2706 = vrot.lane.b32.xlu0 %v2439, 64
        %v2707 = vpop.permute.xlu0 %2706
        %2708 = vrot.lane.b32.xlu0 %v2440, 64
        %v2709 = vpop.permute.xlu0 %2708
        %2710 = vrot.lane.b32.xlu0 %v2441, 64
        %v2711 = vpop.permute.xlu0 %2710
        %2712 = vrot.lane.b32.xlu0 %v2442, 64
        %v2713 = vpop.permute.xlu0 %2712
        %2714 = vrot.lane.b32.xlu0 %v2443, 64
        %v2715 = vpop.permute.xlu0 %2714
        %2716 = vrot.lane.b32.xlu0 %v2444, 64
        %v2717 = vpop.permute.xlu0 %2716
        %2718 = vrot.lane.b32.xlu0 %v2445, 64
        %v2719 = vpop.permute.xlu0 %2718
        %2720 = vrot.lane.b32.xlu0 %v2446, 64
        %v2721 = vpop.permute.xlu0 %2720
        %2722 = vrot.lane.b32.xlu0 %v2447, 64
        %v2723 = vpop.permute.xlu0 %2722
        %2724 = vrot.lane.b32.xlu0 %v2448, 64
        %v2725 = vpop.permute.xlu0 %2724
        %2726 = vrot.lane.b32.xlu0 %v2449, 64
        %v2727 = vpop.permute.xlu0 %2726
        %2751 = vrot.lane.b32.xlu0 %v2470, 64
        %v2752 = vpop.permute.xlu0 %2751
        %2753 = vrot.lane.b32.xlu0 %v2471, 64
        %v2754 = vpop.permute.xlu0 %2753
        %2755 = vrot.lane.b32.xlu0 %v2472, 64
        %v2756 = vpop.permute.xlu0 %2755
        %2763 = vrot.lane.b32.xlu0 %v2476, 64
        %v2764 = vpop.permute.xlu0 %2763
        %2765 = vrot.lane.b32.xlu0 %v2477, 64
        %v2766 = vpop.permute.xlu0 %2765
        %2767 = vrot.lane.b32.xlu0 %v2478, 64
        %v2768 = vpop.permute.xlu0 %2767
        %2792 = vrot.lane.b32.xlu0 %v2482, 64
        %v2793 = vpop.permute.xlu0 %2792
        %2794 = vrot.lane.b32.xlu0 %v2483, 64
        %v2795 = vpop.permute.xlu0 %2794
        %2796 = vrot.lane.b32.xlu0 %v2484, 64
        %v2797 = vpop.permute.xlu0 %2796
        %2798 = vrot.lane.b32.xlu0 %v2485, 64
        %v2799 = vpop.permute.xlu0 %2798
        %2800 = vrot.lane.b32.xlu0 %v2486, 64
        %v2801 = vpop.permute.xlu0 %2800
        %2802 = vrot.lane.b32.xlu0 %v2487, 64
        %v2803 = vpop.permute.xlu0 %2802
        %2804 = vrot.lane.b32.xlu0 %v2488, 64
        %v2805 = vpop.permute.xlu0 %2804
        %2806 = vrot.lane.b32.xlu0 %v2489, 64
        %v2807 = vpop.permute.xlu0 %2806
        %2808 = vrot.lane.b32.xlu0 %v2490, 64
        %v2809 = vpop.permute.xlu0 %2808
        %2810 = vrot.lane.b32.xlu0 %v2491, 64
        %v2811 = vpop.permute.xlu0 %2810
        %2812 = vrot.lane.b32.xlu0 %v2492, 64
        %v2813 = vpop.permute.xlu0 %2812
        %2814 = vrot.lane.b32.xlu0 %v2493, 64
        %v2815 = vpop.permute.xlu0 %2814
        %2816 = vrot.lane.b32.xlu0 %v2494, 64
        %v2817 = vpop.permute.xlu0 %2816
        %2818 = vrot.lane.b32.xlu0 %v2495, 64
        %v2819 = vpop.permute.xlu0 %2818
        %2820 = vrot.lane.b32.xlu0 %v2496, 64
        %v2821 = vpop.permute.xlu0 %2820
        %2822 = vrot.lane.b32.xlu0 %v2497, 64
        %v2823 = vpop.permute.xlu0 %2822
        %2824 = vrot.lane.b32.xlu0 %v2498, 64
        %v2825 = vpop.permute.xlu0 %2824
        %2826 = vrot.lane.b32.xlu0 %v2499, 64
        %v2827 = vpop.permute.xlu0 %2826
        %2828 = vrot.lane.b32.xlu0 %v2500, 64
        %v2829 = vpop.permute.xlu0 %2828
        %2830 = vrot.lane.b32.xlu0 %v2501, 64
        %v2831 = vpop.permute.xlu0 %2830
        %2855 = vrot.lane.b32.xlu0 %v2505, 64
        %v2856 = vpop.permute.xlu0 %2855
        %2857 = vrot.lane.b32.xlu0 %v2506, 64
        %v2858 = vpop.permute.xlu0 %2857
        %2859 = vrot.lane.b32.xlu0 %v2507, 64
        %v2860 = vpop.permute.xlu0 %2859
        %2867 = vrot.lane.b32.xlu0 %v2511, 64
        %v2868 = vpop.permute.xlu0 %2867
        %2869 = vrot.lane.b32.xlu0 %v2512, 64
        %v2870 = vpop.permute.xlu0 %2869
        %2871 = vrot.lane.b32.xlu0 %v2513, 64
        %v2872 = vpop.permute.xlu0 %2871
        %2879 = vrot.lane.b32.xlu0 %v2534, 64
        %v2880 = vpop.permute.xlu0 %2879
        %2881 = vrot.lane.b32.xlu0 %v2535, 64
        %v2882 = vpop.permute.xlu0 %2881
        %2883 = vrot.lane.b32.xlu0 %v2536, 64
        %v2884 = vpop.permute.xlu0 %2883
        %v2888 = vsel %vm2313, %v2370, %v2609
        %v2889 = vsel %vm2313, %v2371, %v2611
        %v2890 = vsel %vm2313, %v2372, %v2613
        %v2891 = vsel %vm2313, %v2373, %v2615
        %v2892 = vsel %vm2313, %v2374, %v2617
        %v2893 = vsel %vm2313, %v2375, %v2619
        %v2894 = vsel %vm2313, %v2376, %v2621
        %v2895 = vsel %vm2313, %v2377, %v2623
        %v2896 = vsel %vm2313, %v2378, %v2625
        %v2897 = vsel %vm2313, %v2379, %v2627
        %v2898 = vsel %vm2313, %v2380, %v2629
        %v2899 = vsel %vm2313, %v2381, %v2631
        %v2900 = vsel %vm2313, %v2382, %v2633
        %v2901 = vsel %vm2313, %v2383, %v2635
        %v2902 = vsel %vm2313, %v2384, %v2637
        %v2903 = vsel %vm2313, %v2385, %v2639
        %v2904 = vsel %vm2313, %v2386, %v2641
        %v2905 = vsel %vm2313, %v2387, %v2643
        %v2906 = vsel %vm2313, %v2388, %v2645
        %v2907 = vsel %vm2313, %v2389, %v2647
        %v2908 = vsel %vm2313, %v2410, %v2689
        %v2909 = vsel %vm2313, %v2411, %v2691
        %v2910 = vsel %vm2313, %v2412, %v2693
        %v2911 = vsel %vm2313, %v2413, %v2695
        %v2912 = vsel %vm2313, %v2414, %v2697
        %v2913 = vsel %vm2313, %v2415, %v2699
        %v2914 = vsel %vm2313, %v2416, %v2701
        %v2915 = vsel %vm2313, %v2417, %v2703
        %v2916 = vsel %vm2313, %v2418, %v2705
        %v2917 = vsel %vm2313, %v2419, %v2707
        %v2918 = vsel %vm2313, %v2420, %v2709
        %v2919 = vsel %vm2313, %v2421, %v2711
        %v2920 = vsel %vm2313, %v2422, %v2713
        %v2921 = vsel %vm2313, %v2423, %v2715
        %v2922 = vsel %vm2313, %v2424, %v2717
        %v2923 = vsel %vm2313, %v2425, %v2719
        %v2924 = vsel %vm2313, %v2426, %v2721
        %v2925 = vsel %vm2313, %v2427, %v2723
        %v2926 = vsel %vm2313, %v2428, %v2725
        %v2927 = vsel %vm2313, %v2429, %v2727
        %v2928 = vsel %vm2313, %v2450, %v2613
        %v2929 = vsel %vm2313, %v2451, %v2615
        %v2930 = vsel %vm2313, %v2452, %v2617
        %v2931 = vsel %vm2313, %v2453, %v2619
        %v2932 = vsel %vm2313, %v2454, %v2621
        %v2933 = vsel %vm2313, %v2455, %v2623
        %v2934 = vsel %vm2313, %v2456, %v2625
        %v2935 = vsel %vm2313, %v2457, %v2627
        %v2936 = vsel %vm2313, %v2458, %v2629
        %v2937 = vsel %vm2313, %v2459, %v2631
        %v2938 = vsel %vm2313, %v2460, %v2633
        %v2939 = vsel %vm2313, %v2461, %v2635
        %v2940 = vsel %vm2313, %v2462, %v2637
        %v2941 = vsel %vm2313, %v2463, %v2639
        %v2942 = vsel %vm2313, %v2464, %v2641
        %v2943 = vsel %vm2313, %v2465, %v2643
        %v2944 = vsel %vm2313, %v2466, %v2645
        %v2945 = vsel %vm2313, %v2467, %v2752
        %v2946 = vsel %vm2313, %v2468, %v2754
        %v2947 = vsel %vm2313, %v2469, %v2756
        %v2948 = vsel %vm2313, %v2473, %v2764
        %v2949 = vsel %vm2313, %v2474, %v2766
        %v2950 = vsel %vm2313, %v2475, %v2768
        %v2951 = vsel %vm2313, %v2452, %v2793
        %v2952 = vsel %vm2313, %v2453, %v2795
        %v2953 = vsel %vm2313, %v2454, %v2797
        %v2954 = vsel %vm2313, %v2455, %v2799
        %v2955 = vsel %vm2313, %v2456, %v2801
        %v2956 = vsel %vm2313, %v2457, %v2803
        %v2957 = vsel %vm2313, %v2458, %v2805
        %v2958 = vsel %vm2313, %v2459, %v2807
        %v2959 = vsel %vm2313, %v2460, %v2809
        %v2960 = vsel %vm2313, %v2461, %v2811
        %v2961 = vsel %vm2313, %v2462, %v2813
        %v2962 = vsel %vm2313, %v2463, %v2815
        %v2963 = vsel %vm2313, %v2464, %v2817
        %v2964 = vsel %vm2313, %v2465, %v2819
        %v2965 = vsel %vm2313, %v2466, %v2821
        %v2966 = vsel %vm2313, %v2467, %v2823
        %v2967 = vsel %vm2313, %v2468, %v2825
        %v2968 = vsel %vm2313, %v2479, %v2827
        %v2969 = vsel %vm2313, %v2480, %v2829
        %v2970 = vsel %vm2313, %v2481, %v2831
        %v2971 = vsel %vm2313, %v2502, %v2856
        %v2972 = vsel %vm2313, %v2503, %v2858
        %v2973 = vsel %vm2313, %v2504, %v2860
        %v2974 = vsel %vm2313, %v2508, %v2868
        %v2975 = vsel %vm2313, %v2509, %v2870
        %v2976 = vsel %vm2313, %v2510, %v2872
        %v2977 = vsel %vm2313, %v2514, %v2701
        %v2978 = vsel %vm2313, %v2515, %v2703
        %v2979 = vsel %vm2313, %v2516, %v2705
        %v2980 = vsel %vm2313, %v2517, %v2707
        %v2981 = vsel %vm2313, %v2518, %v2709
        %v2982 = vsel %vm2313, %v2519, %v2711
        %v2983 = vsel %vm2313, %v2520, %v2713
        %v2984 = vsel %vm2313, %v2521, %v2715
        %v2985 = vsel %vm2313, %v2522, %v2717
        %v2986 = vsel %vm2313, %v2523, %v2719
        %v2987 = vsel %vm2313, %v2524, %v2721
        %v2988 = vsel %vm2313, %v2525, %v2723
        %v2989 = vsel %vm2313, %v2526, %v2725
        %v2990 = vsel %vm2313, %v2527, %v2764
        %v2991 = vsel %vm2313, %v2528, %v2766
        %v2992 = vsel %vm2313, %v2529, %v2856
        %v2993 = vsel %vm2313, %v2530, %v2858
        %v2994 = vsel %vm2313, %v2531, %v2880
        %v2995 = vsel %vm2313, %v2532, %v2882
        %v2996 = vsel %vm2313, %v2533, %v2884
        %3000 = vrot.lane.b32.xlu0 %v2540, 64
        %v3001 = vpop.permute.xlu0 %3000
        %3002 = vrot.lane.b32.xlu0 %v2541, 64
        %v3003 = vpop.permute.xlu0 %3002
        %3004 = vrot.lane.b32.xlu0 %v2542, 64
        %v3005 = vpop.permute.xlu0 %3004
        %3029 = vrot.lane.b32.xlu0 %v2546, 64
        %v3030 = vpop.permute.xlu0 %3029
        %3031 = vrot.lane.b32.xlu0 %v2547, 64
        %v3032 = vpop.permute.xlu0 %3031
        %3033 = vrot.lane.b32.xlu0 %v2548, 64
        %v3034 = vpop.permute.xlu0 %3033
        %3035 = vrot.lane.b32.xlu0 %v2549, 64
        %v3036 = vpop.permute.xlu0 %3035
        %3037 = vrot.lane.b32.xlu0 %v2550, 64
        %v3038 = vpop.permute.xlu0 %3037
        %3039 = vrot.lane.b32.xlu0 %v2551, 64
        %v3040 = vpop.permute.xlu0 %3039
        %3041 = vrot.lane.b32.xlu0 %v2552, 64
        %v3042 = vpop.permute.xlu0 %3041
        %3043 = vrot.lane.b32.xlu0 %v2553, 64
        %v3044 = vpop.permute.xlu0 %3043
        %3045 = vrot.lane.b32.xlu0 %v2554, 64
        %v3046 = vpop.permute.xlu0 %3045
        %3047 = vrot.lane.b32.xlu0 %v2555, 64
        %v3048 = vpop.permute.xlu0 %3047
        %3049 = vrot.lane.b32.xlu0 %v2556, 64
        %v3050 = vpop.permute.xlu0 %3049
        %3051 = vrot.lane.b32.xlu0 %v2557, 64
        %v3052 = vpop.permute.xlu0 %3051
        %3053 = vrot.lane.b32.xlu0 %v2558, 64
        %v3054 = vpop.permute.xlu0 %3053
        %3055 = vrot.lane.b32.xlu0 %v2559, 64
        %v3056 = vpop.permute.xlu0 %3055
        %3057 = vrot.lane.b32.xlu0 %v2560, 64
        %v3058 = vpop.permute.xlu0 %3057
        %3059 = vrot.lane.b32.xlu0 %v2561, 64
        %v3060 = vpop.permute.xlu0 %3059
        %3061 = vrot.lane.b32.xlu0 %v2562, 64
        %v3062 = vpop.permute.xlu0 %3061
        %3063 = vrot.lane.b32.xlu0 %v2563, 64
        %v3064 = vpop.permute.xlu0 %3063
        %3065 = vrot.lane.b32.xlu0 %v2564, 64
        %v3066 = vpop.permute.xlu0 %3065
        %3067 = vrot.lane.b32.xlu0 %v2565, 64
        %v3068 = vpop.permute.xlu0 %3067
        %3092 = vrot.lane.b32.xlu0 %v2569, 64
        %v3093 = vpop.permute.xlu0 %3092
        %3094 = vrot.lane.b32.xlu0 %v2570, 64
        %v3095 = vpop.permute.xlu0 %3094
        %3096 = vrot.lane.b32.xlu0 %v2571, 64
        %v3097 = vpop.permute.xlu0 %3096
        %3104 = vrot.lane.b32.xlu0 %v2575, 64
        %v3105 = vpop.permute.xlu0 %3104
        %3106 = vrot.lane.b32.xlu0 %v2576, 64
        %v3107 = vpop.permute.xlu0 %3106
        %3108 = vrot.lane.b32.xlu0 %v2577, 64
        %v3109 = vpop.permute.xlu0 %3108
        %v3113 = vsel %vm2313, %v2537, %v3001
        %v3114 = vsel %vm2313, %v2538, %v3003
        %v3115 = vsel %vm2313, %v2539, %v3005
        %v3116 = vsel %vm2313, %v2516, %v3030
        %v3117 = vsel %vm2313, %v2517, %v3032
        %v3118 = vsel %vm2313, %v2518, %v3034
        %v3119 = vsel %vm2313, %v2519, %v3036
        %v3120 = vsel %vm2313, %v2520, %v3038
        %v3121 = vsel %vm2313, %v2521, %v3040
        %v3122 = vsel %vm2313, %v2522, %v3042
        %v3123 = vsel %vm2313, %v2523, %v3044
        %v3124 = vsel %vm2313, %v2524, %v3046
        %v3125 = vsel %vm2313, %v2525, %v3048
        %v3126 = vsel %vm2313, %v2526, %v3050
        %v3127 = vsel %vm2313, %v2527, %v3052
        %v3128 = vsel %vm2313, %v2528, %v3054
        %v3129 = vsel %vm2313, %v2529, %v3056
        %v3130 = vsel %vm2313, %v2530, %v3058
        %v3131 = vsel %vm2313, %v2531, %v3060
        %v3132 = vsel %vm2313, %v2532, %v3062
        %v3133 = vsel %vm2313, %v2543, %v3064
        %v3134 = vsel %vm2313, %v2544, %v3066
        %v3135 = vsel %vm2313, %v2545, %v3068
        %v3136 = vsel %vm2313, %v2566, %v3093
        %v3137 = vsel %vm2313, %v2567, %v3095
        %v3138 = vsel %vm2313, %v2568, %v3097
        %v3139 = vsel %vm2313, %v2572, %v3105
        %v3140 = vsel %vm2313, %v2573, %v3107
        %v3141 = vsel %vm2313, %v2574, %v3109
        %v3142 = vld [vmem:[%s3] sm:$0xff]
        %v3143 = vld [vmem:[%s3 + $0x8] sm:$0xff]
        %v3144 = vld [vmem:[%s3 + $0x10] sm:$0xff]
        %v3145 = vld [vmem:[%s3 + $0x18] sm:$0xff]
        %v3146 = vld [vmem:[%s3 + $0x20] sm:$0xff]
        %v3147 = vld [vmem:[%s3 + $0x28] sm:$0xff]
        %v3148 = vld [vmem:[%s3 + $0x30] sm:$0xff]
        %v3149 = vld [vmem:[%s3 + $0x38] sm:$0xff]
        %v3150 = vld [vmem:[%s3 + $0x40] sm:$0xff]
        %v3151 = vld [vmem:[%s3 + $0x48] sm:$0xff]
        %v3152 = vld [vmem:[%s3 + $0x50] sm:$0xff]
        %v3153 = vld [vmem:[%s3 + $0x58] sm:$0xff]
        %v3154 = vld [vmem:[%s3 + $0x60] sm:$0xff]
        %v3155 = vld [vmem:[%s3 + $0x68] sm:$0xff]
        %v3156 = vld [vmem:[%s3 + $0x70] sm:$0xff]
        %v3157 = vld [vmem:[%s3 + $0x78] sm:$0xff]
        %v3158 = vld [vmem:[%s3 + $0x80] sm:$0xff]
        %v3159 = vld [vmem:[%s3 + $0x88] sm:$0xff]
        %v3160 = vld [vmem:[%s3 + $0x90] sm:$0xff]
        %v3161 = vld [vmem:[%s3 + $0x98] sm:$0xff]
        %v3162 = vld [vmem:[%s3 + $0xa0] sm:$0xff]
        %v3163 = vld [vmem:[%s3 + $0xa8] sm:$0xff]
        %v3164 = vld [vmem:[%s3 + $0xb0] sm:$0xff]
        %v3165 = vld [vmem:[%s3 + $0xb8] sm:$0xff]
        %v3166 = vld [vmem:[%s3 + $0xc0] sm:$0xff]
        %v3167 = vld [vmem:[%s3 + $0xc8] sm:$0xff]
        %v3168 = vld [vmem:[%s3 + $0xd0] sm:$0xff]
        %v3169 = vld [vmem:[%s3 + $0xd8] sm:$0xff]
        %v3170 = vld [vmem:[%s3 + $0xe0] sm:$0xff]
        %v3171 = vld [vmem:[%s3 + $0xe8] sm:$0xff]
        %v3172 = vld [vmem:[%s3 + $0xf0] sm:$0xff]
        %v3173 = vld [vmem:[%s3 + $0xf8] sm:$0xff]
        %v3174 = vld [vmem:[%s3 + $0x100] sm:$0xff]
        %v3175 = vld [vmem:[%s3 + $0x108] sm:$0xff]
        %v3176 = vld [vmem:[%s3 + $0x110] sm:$0xff]
        %v3177 = vld [vmem:[%s3 + $0x118] sm:$0xff]
        %v3178 = vld [vmem:[%s3 + $0x120] sm:$0xff]
        %v3179 = vld [vmem:[%s3 + $0x128] sm:$0xff]
        %v3180 = vld [vmem:[%s3 + $0x130] sm:$0xff]
        %v3181 = vld [vmem:[%s3 + $0x138] sm:$0xff]
        %v3182 = vld [vmem:[%s3 + $0x140] sm:$0xff]
        %v3183 = vld [vmem:[%s3 + $0x148] sm:$0xff]
        %v3184 = vld [vmem:[%s3 + $0x150] sm:$0xff]
        %v3185 = vld [vmem:[%s3 + $0x158] sm:$0xff]
        %v3186 = vld [vmem:[%s3 + $0x160] sm:$0xff]
        %v3187 = vld [vmem:[%s3 + $0x168] sm:$0xff]
        %v3188 = vld [vmem:[%s3 + $0x170] sm:$0xff]
        %v3189 = vld [vmem:[%s3 + $0x178] sm:$0xff]
        %v3190 = vld [vmem:[%s3 + $0x180] sm:$0xff]
        %v3191 = vld [vmem:[%s3 + $0x188] sm:$0xff]
        %v3192 = vld [vmem:[%s3 + $0x190] sm:$0xff]
        %v3193 = vld [vmem:[%s3 + $0x198] sm:$0xff]
        %v3194 = vld [vmem:[%s3 + $0x1a0] sm:$0xff]
        %v3195 = vld [vmem:[%s3 + $0x1a8] sm:$0xff]
        %v3196 = vld [vmem:[%s3 + $0x1b0] sm:$0xff]
        %v3197 = vld [vmem:[%s3 + $0x1b8] sm:$0xff]
        %v3198 = vld [vmem:[%s3 + $0x1c0] sm:$0xff]
        %v3199 = vld [vmem:[%s3 + $0x1c8] sm:$0xff]
        %v3200 = vld [vmem:[%s3 + $0x1d0] sm:$0xff]
        %v3201 = vld [vmem:[%s3 + $0x1d8] sm:$0xff]
        %v3202 = vld [vmem:[%s3 + $0x1e0] sm:$0xff]
        %v3203 = vld [vmem:[%s3 + $0x1e8] sm:$0xff]
        %v3204 = vld [vmem:[%s3 + $0x1f0] sm:$0xff]
        %v3205 = vld [vmem:[%s3 + $0x1f8] sm:$0xff]
        %v3206 = vld [vmem:[%s3 + $0x200] sm:$0xff]
        %v3207 = vld [vmem:[%s3 + $0x208] sm:$0xff]
        %v3208 = vld [vmem:[%s3 + $0x210] sm:$0xff]
        %v3209 = vld [vmem:[%s3 + $0x218] sm:$0xff]
        %v3210 = vld [vmem:[%s3 + $0x220] sm:$0xff]
        %v3211 = vld [vmem:[%s3 + $0x228] sm:$0xff]
        %v3212 = vld [vmem:[%s3 + $0x230] sm:$0xff]
        %v3213 = vld [vmem:[%s3 + $0x238] sm:$0xff]
        %v3214 = vld [vmem:[%s3 + $0x240] sm:$0xff]
        %v3215 = vld [vmem:[%s3 + $0x248] sm:$0xff]
        %v3216 = vld [vmem:[%s3 + $0x250] sm:$0xff]
        %v3217 = vld [vmem:[%s3 + $0x258] sm:$0xff]
        %v3218 = vld [vmem:[%s3 + $0x260] sm:$0xff]
        %v3219 = vld [vmem:[%s3 + $0x268] sm:$0xff]
        %v3220 = vld [vmem:[%s3 + $0x270] sm:$0xff]
        %v3221 = vld [vmem:[%s3 + $0x278] sm:$0xff]
        %v3222 = vld [vmem:[%s3 + $0x280] sm:$0xff]
        %v3223 = vld [vmem:[%s3 + $0x288] sm:$0xff]
        %v3224 = vld [vmem:[%s3 + $0x290] sm:$0xff]
        %v3225 = vld [vmem:[%s3 + $0x298] sm:$0xff]
        %v3226 = vld [vmem:[%s3 + $0x2a0] sm:$0xff]
        %v3227 = vld [vmem:[%s3 + $0x2a8] sm:$0xff]
        %v3228 = vld [vmem:[%s3 + $0x2b0] sm:$0xff]
        %v3229 = vld [vmem:[%s3 + $0x2b8] sm:$0xff]
        %v3230 = vld [vmem:[%s3 + $0x2c0] sm:$0xff]
        %v3231 = vld [vmem:[%s3 + $0x2c8] sm:$0xff]
        %v3232 = vld [vmem:[%s3 + $0x2d0] sm:$0xff]
        %v3233 = vld [vmem:[%s3 + $0x2d8] sm:$0xff]
        %v3234 = vld [vmem:[%s3 + $0x2e0] sm:$0xff]
        %v3235 = vld [vmem:[%s3 + $0x2e8] sm:$0xff]
        %v3236 = vld [vmem:[%s3 + $0x2f0] sm:$0xff]
        %v3237 = vld [vmem:[%s3 + $0x2f8] sm:$0xff]
        %v3238 = vld [vmem:[%s3 + $0x300] sm:$0xff]
        %v3239 = vld [vmem:[%s3 + $0x308] sm:$0xff]
        %v3240 = vld [vmem:[%s3 + $0x310] sm:$0xff]
        %v3241 = vld [vmem:[%s3 + $0x318] sm:$0xff]
        %v3242 = vld [vmem:[%s3 + $0x320] sm:$0xff]
        %v3243 = vld [vmem:[%s3 + $0x328] sm:$0xff]
        %v3244 = vld [vmem:[%s3 + $0x330] sm:$0xff]
        %v3245 = vld [vmem:[%s3 + $0x338] sm:$0xff]
        %v3246 = vld [vmem:[%s3 + $0x340] sm:$0xff]
        %v3247 = vld [vmem:[%s3 + $0x348] sm:$0xff]
        %v3248 = vld [vmem:[%s3 + $0x350] sm:$0xff]
        %v3249 = vld [vmem:[%s3 + $0x358] sm:$0xff]
        %v3250 = vld [vmem:[%s3 + $0x360] sm:$0xff]
        %v3251 = vld [vmem:[%s3 + $0x368] sm:$0xff]
        %v3252 = vld [vmem:[%s3 + $0x370] sm:$0xff]
        %v3253 = vld [vmem:[%s3 + $0x378] sm:$0xff]
        %v3254 = vld [vmem:[%s3 + $0x380] sm:$0xff]
        %v3255 = vld [vmem:[%s3 + $0x388] sm:$0xff]
        %v3256 = vld [vmem:[%s3 + $0x390] sm:$0xff]
        %v3257 = vld [vmem:[%s3 + $0x398] sm:$0xff]
        %v3258 = vld [vmem:[%s3 + $0x3a0] sm:$0xff]
        %v3259 = vld [vmem:[%s3 + $0x3a8] sm:$0xff]
        %v3260 = vld [vmem:[%s3 + $0x3b0] sm:$0xff]
        %v3261 = vld [vmem:[%s3 + $0x3b8] sm:$0xff]
        %v3262 = vld [vmem:[%s3 + $0x3c0] sm:$0xff]
        %v3263 = vld [vmem:[%s3 + $0x3c8] sm:$0xff]
        %v3264 = vld [vmem:[%s3 + $0x3d0] sm:$0xff]
        %v3265 = vld [vmem:[%s3 + $0x3d8] sm:$0xff]
        %v3266 = vld [vmem:[%s3 + $0x3e0] sm:$0xff]
        %v3267 = vld [vmem:[%s3 + $0x3e8] sm:$0xff]
        %v3268 = vld [vmem:[%s3 + $0x3f0] sm:$0xff]
        %v3269 = vld [vmem:[%s3 + $0x3f8] sm:$0xff]
        %v3270 = vld [vmem:[%s3 + $0x400] sm:$0xff]
        %v3271 = vld [vmem:[%s3 + $0x408] sm:$0xff]
        %v3272 = vld [vmem:[%s3 + $0x410] sm:$0xff]
        %v3273 = vld [vmem:[%s3 + $0x418] sm:$0xff]
        %v3274 = vld [vmem:[%s3 + $0x420] sm:$0xff]
        %v3275 = vld [vmem:[%s3 + $0x428] sm:$0xff]
        %v3276 = vld [vmem:[%s3 + $0x430] sm:$0xff]
        %v3277 = vld [vmem:[%s3 + $0x438] sm:$0xff]
        %v3278 = vld [vmem:[%s3 + $0x440] sm:$0xff]
        %v3279 = vld [vmem:[%s3 + $0x448] sm:$0xff]
        %v3280 = vld [vmem:[%s3 + $0x450] sm:$0xff]
        %v3281 = vld [vmem:[%s3 + $0x458] sm:$0xff]
        %v3282 = vld [vmem:[%s3 + $0x460] sm:$0xff]
        %v3283 = vld [vmem:[%s3 + $0x468] sm:$0xff]
        %v3284 = vld [vmem:[%s3 + $0x470] sm:$0xff]
        %v3285 = vld [vmem:[%s3 + $0x478] sm:$0xff]
        %v3286 = vld [vmem:[%s3 + $0x480] sm:$0xff]
        %v3287 = vld [vmem:[%s3 + $0x488] sm:$0xff]
        %v3288 = vld [vmem:[%s3 + $0x490] sm:$0xff]
        %v3289 = vld [vmem:[%s3 + $0x498] sm:$0xff]
        %v3290 = vld [vmem:[%s3 + $0x4a0] sm:$0xff]
        %v3291 = vld [vmem:[%s3 + $0x4a8] sm:$0xff]
        %v3292 = vld [vmem:[%s3 + $0x4b0] sm:$0xff]
        %v3293 = vld [vmem:[%s3 + $0x4b8] sm:$0xff]
        %v3294 = vld [vmem:[%s3 + $0x4c0] sm:$0xff]
        %v3295 = vld [vmem:[%s3 + $0x4c8] sm:$0xff]
        %v3296 = vld [vmem:[%s3 + $0x4d0] sm:$0xff]
        %v3297 = vld [vmem:[%s3 + $0x4d8] sm:$0xff]
        %v3298 = vld [vmem:[%s3 + $0x4e0] sm:$0xff]
        %v3299 = vld [vmem:[%s3 + $0x4e8] sm:$0xff]
        %v3300 = vld [vmem:[%s3 + $0x4f0] sm:$0xff]
        %v3301 = vld [vmem:[%s3 + $0x4f8] sm:$0xff]
        %v3302 = vld [vmem:[%s3 + $0x500] sm:$0xff]
        %v3303 = vld [vmem:[%s3 + $0x508] sm:$0xff]
        %v3304 = vld [vmem:[%s3 + $0x510] sm:$0xff]
        %v3305 = vld [vmem:[%s3 + $0x518] sm:$0xff]
        %v3306 = vld [vmem:[%s3 + $0x520] sm:$0xff]
        %v3307 = vld [vmem:[%s3 + $0x528] sm:$0xff]
        %v3308 = vld [vmem:[%s3 + $0x530] sm:$0xff]
        %v3309 = vld [vmem:[%s3 + $0x538] sm:$0xff]
        %v3310 = vld [vmem:[%s3 + $0x540] sm:$0xff]
        %v3311 = vld [vmem:[%s3 + $0x548] sm:$0xff]
        %v3312 = vld [vmem:[%s3 + $0x550] sm:$0xff]
        %v3313 = vld [vmem:[%s3 + $0x558] sm:$0xff]
        %v3314 = vld [vmem:[%s3 + $0x560] sm:$0xff]
        %v3315 = vld [vmem:[%s3 + $0x568] sm:$0xff]
        %v3316 = vld [vmem:[%s3 + $0x570] sm:$0xff]
        %v3317 = vld [vmem:[%s3 + $0x578] sm:$0xff]
        %v3318 = vld [vmem:[%s3 + $0x580] sm:$0xff]
        %v3319 = vld [vmem:[%s3 + $0x588] sm:$0xff]
        %v3320 = vld [vmem:[%s3 + $0x590] sm:$0xff]
        %v3321 = vld [vmem:[%s3 + $0x598] sm:$0xff]
        %v3322 = vld [vmem:[%s3 + $0x5a0] sm:$0xff]
        %v3323 = vld [vmem:[%s3 + $0x5a8] sm:$0xff]
        %v3324 = vld [vmem:[%s3 + $0x5b0] sm:$0xff]
        %v3325 = vld [vmem:[%s3 + $0x5b8] sm:$0xff]
        %v3326 = vld [vmem:[%s3 + $0x5c0] sm:$0xff]
        %v3327 = vld [vmem:[%s3 + $0x5c8] sm:$0xff]
        %v3328 = vld [vmem:[%s3 + $0x5d0] sm:$0xff]
        %v3329 = vld [vmem:[%s3 + $0x5d8] sm:$0xff]
        %v3330 = vld [vmem:[%s3 + $0x5e0] sm:$0xff]
        %v3331 = vld [vmem:[%s3 + $0x5e8] sm:$0xff]
        %v3332 = vld [vmem:[%s3 + $0x5f0] sm:$0xff]
        %v3333 = vld [vmem:[%s3 + $0x5f8] sm:$0xff]
        %v3334 = vld [vmem:[%s3 + $0x600] sm:$0xff]
        %v3335 = vld [vmem:[%s3 + $0x608] sm:$0xff]
        %v3336 = vld [vmem:[%s3 + $0x610] sm:$0xff]
        %v3337 = vld [vmem:[%s3 + $0x618] sm:$0xff]
        %v3338 = vld [vmem:[%s3 + $0x620] sm:$0xff]
        %v3339 = vld [vmem:[%s3 + $0x628] sm:$0xff]
        %v3340 = vld [vmem:[%s3 + $0x630] sm:$0xff]
        %v3341 = vld [vmem:[%s3 + $0x638] sm:$0xff]
        %v3342 = vld [vmem:[%s4] sm:$0x1]
        %v3344 = vlaneseq
        %v3345 = vshrl.u32 %v3344, 7
        %v3346 = vsub.s32 0, %v3345
        %v3347 = vrot.slane %v3342, %v3346
        %v3350 = vsel %vm2313, %v2379, 0
        %v3353 = vsel %vm2313, %v2380, 0
        %v3356 = vsel %vm2313, %v2381, 0
        %v3359 = vsel %vm2313, %v2382, 0
        %v3362 = vsel %vm2313, %v2383, 0
        %v3365 = vsel %vm2313, %v2384, 0
        %v3368 = vsel %vm2313, %v2385, 0
        %v3371 = vsel %vm2313, %v2386, 0
        %v3374 = vsel %vm2313, %v2387, 0
        %v3377 = vsel %vm2313, %v2388, 0
        %v3380 = vsel %vm2313, %v2578, 0
        %v3383 = vsel %vm2313, %v2579, 0
        %v3386 = vsel %vm2313, %v2580, 0
        %v3389 = vsel %vm2313, %v2581, 0
        %v3392 = vsel %vm2313, %v2582, 0
        %v3395 = vsel %vm2313, %v2583, 0
        %v3398 = vsel %vm2313, %v2584, 0
        %v3401 = vsel %vm2313, %v2585, 0
        %v3404 = vsel %vm2313, %v2586, 0
        %v3407 = vsel %vm2313, %v2587, 0
        %3409 = vmatprep.subr.mxu0 0.0
        %3410 = vmatpush1.msra.mxu0 %v3142
        %3411 = vmatprep.subr.mxu0 0.0
        %3412 = vmatpush1.msra.mxu0 %v3143
        %3413 = vmatprep.subr.mxu0 0.0
        %3414 = vmatpush1.msra.mxu0 %v3144
        %3415 = vmatprep.subr.mxu0 0.0
        %3416 = vmatpush1.msra.mxu0 %v3145
        %3417 = vmatprep.subr.mxu0 0.0
        %3418 = vmatpush1.msra.mxu0 %v3146
        %3419 = vmatprep.subr.mxu0 0.0
        %3420 = vmatpush1.msra.mxu0 %v3147
        %3421 = vmatprep.subr.mxu0 0.0
        %3422 = vmatpush1.msra.mxu0 %v3148
        %3423 = vmatprep.subr.mxu0 0.0
        %3424 = vmatpush1.msra.mxu0 %v3149
        %3425 = vmatprep.subr.mxu0 0.0
        %3426 = vmatpush1.msra.mxu0 %v3150
        %3427 = vmatprep.subr.mxu0 0.0
        %3428 = vmatpush1.msra.mxu0 %v3151
        %3429 = vmatprep.subr.mxu0 0.0
        %3430 = vmatpush1.msra.mxu0 %v3152
        %3431 = vmatprep.subr.mxu0 0.0
        %3432 = vmatpush1.msra.mxu0 %v3153
        %3433 = vmatprep.subr.mxu0 0.0
        %3434 = vmatpush1.msra.mxu0 %v3154
        %3435 = vmatprep.subr.mxu0 0.0
        %3436 = vmatpush1.msra.mxu0 %v3155
        %3437 = vmatprep.subr.mxu0 0.0
        %3438 = vmatpush1.msra.mxu0 %v3156
        %3439 = vmatprep.subr.mxu0 0.0
        %3440 = vmatpush1.msra.mxu0 %v3157
        %3441 = vmatprep.subr.mxu0 0.0
        %3442 = vmatpush1.msra.mxu0 %v3158
        %3443 = vmatprep.subr.mxu0 0.0
        %3444 = vmatpush1.msra.mxu0 %v3159
        %3445 = vmatprep.subr.mxu0 0.0
        %3446 = vmatpush1.msra.mxu0 %v3160
        %3447 = vmatprep.subr.mxu0 0.0
        %3448 = vmatpush1.msra.mxu0 %v3161
        %3449 = vmatprep.subr.mxu0 0.0
        %3450 = vmatpush1.msra.mxu0 %v3162
        %3451 = vmatprep.subr.mxu0 0.0
        %3452 = vmatpush1.msra.mxu0 %v3163
        %3453 = vmatprep.subr.mxu0 0.0
        %3454 = vmatpush1.msra.mxu0 %v3164
        %3455 = vmatprep.subr.mxu0 0.0
        %3456 = vmatpush1.msra.mxu0 %v3165
        %3457 = vmatprep.subr.mxu0 0.0
        %3458 = vmatpush1.msra.mxu0 %v3166
        %3459 = vmatprep.subr.mxu0 0.0
        %3460 = vmatpush1.msra.mxu0 %v3167
        %3461 = vmatprep.subr.mxu0 0.0
        %3462 = vmatpush1.msra.mxu0 %v3168
        %3463 = vmatprep.subr.mxu0 0.0
        %3464 = vmatpush1.msra.mxu0 %v3169
        %3465 = vmatprep.subr.mxu0 0.0
        %3466 = vmatpush1.msra.mxu0 %v3170
        %3467 = vmatprep.subr.mxu0 0.0
        %3468 = vmatpush1.msra.mxu0 %v3171
        %3469 = vmatprep.subr.mxu0 0.0
        %3470 = vmatpush1.msra.mxu0 %v3172
        %3471 = vmatprep.subr.mxu0 0.0
        %3472 = vmatpush1.msra.mxu0 %v3173
        %3473 = vmatprep.mubr.f32.mxu0 %v2908
        %3474 = vmatmul.mubr.f32.gmra.mrb[0].mxu0 %v2888
        %v3475 = vpop.f32.mrb[0].mxu0
        %v3476 = vadd.f32 %v3347, %v3475
        %v3477 = vpop.f32.mrb[0].mxu0
        %3478 = vmatprep.mubr.f32.mxu0 %v2909
        %3479 = vmatmul.mubr.f32.gmra.mrb[0].mxu0 %v2889
        %v3480 = vpop.f32.mrb[0].mxu0
        %v3481 = vadd.f32 %v3347, %v3480
        %v3482 = vpop.f32.mrb[0].mxu0
        %3483 = vmatprep.mubr.f32.mxu0 %v2910
        %3484 = vmatmul.mubr.f32.gmra.mrb[0].mxu0 %v2890
        %v3485 = vpop.f32.mrb[0].mxu0
        %v3486 = vadd.f32 %v3347, %v3485
        %v3487 = vpop.f32.mrb[0].mxu0
        %3488 = vmatprep.mubr.f32.mxu0 %v2911
        %3489 = vmatmul.mubr.f32.gmra.mrb[0].mxu0 %v2891
        %v3490 = vpop.f32.mrb[0].mxu0
        %v3491 = vadd.f32 %v3347, %v3490
        %v3492 = vpop.f32.mrb[0].mxu0
        %3493 = vmatprep.mubr.f32.mxu0 %v2912
        %3494 = vmatmul.mubr.f32.gmra.mrb[0].mxu0 %v2892
        %v3495 = vpop.f32.mrb[0].mxu0
        %v3496 = vadd.f32 %v3347, %v3495
        %v3497 = vpop.f32.mrb[0].mxu0
        %3498 = vmatprep.mubr.f32.mxu0 %v2913
        %3499 = vmatmul.mubr.f32.gmra.mrb[0].mxu0 %v2893
        %v3500 = vpop.f32.mrb[0].mxu0
        %v3501 = vadd.f32 %v3347, %v3500
        %v3502 = vpop.f32.mrb[0].mxu0
        %3503 = vmatprep.mubr.f32.mxu0 %v2914
        %3504 = vmatmul.mubr.f32.gmra.mrb[0].mxu0 %v2894
        %v3505 = vpop.f32.mrb[0].mxu0
        %v3506 = vadd.f32 %v3347, %v3505
        %v3507 = vpop.f32.mrb[0].mxu0
        %3508 = vmatprep.mubr.f32.mxu0 %v2915
        %3509 = vmatmul.mubr.f32.gmra.mrb[0].mxu0 %v2895
        %v3510 = vpop.f32.mrb[0].mxu0
        %v3511 = vadd.f32 %v3347, %v3510
        %v3512 = vpop.f32.mrb[0].mxu0
        %3513 = vmatprep.mubr.f32.mxu0 %v2916
        %3514 = vmatmul.mubr.f32.gmra.mrb[0].mxu0 %v2896
        %v3515 = vpop.f32.mrb[0].mxu0
        %v3516 = vadd.f32 %v3347, %v3515
        %v3517 = vpop.f32.mrb[0].mxu0
        %3518 = vmatprep.mubr.f32.mxu0 %v2917
        %3519 = vmatmul.mubr.f32.gmra.mrb[0].mxu0 %v2897
        %v3520 = vpop.f32.mrb[0].mxu0
        %v3521 = vadd.f32 %v3347, %v3520
        %v3522 = vpop.f32.mrb[0].mxu0
        %3523 = vmatprep.mubr.f32.mxu0 %v2918
        %3524 = vmatmul.mubr.f32.gmra.mrb[0].mxu0 %v2898
        %v3525 = vpop.f32.mrb[0].mxu0
        %v3526 = vadd.f32 %v3347, %v3525
        %v3527 = vpop.f32.mrb[0].mxu0
        %3528 = vmatprep.mubr.f32.mxu0 %v2919
        %3529 = vmatmul.mubr.f32.gmra.mrb[0].mxu0 %v2899
        %v3530 = vpop.f32.mrb[0].mxu0
        %v3531 = vadd.f32 %v3347, %v3530
        %v3532 = vpop.f32.mrb[0].mxu0
        %3533 = vmatprep.mubr.f32.mxu0 %v2920
        %3534 = vmatmul.mubr.f32.gmra.mrb[0].mxu0 %v2900
        %v3535 = vpop.f32.mrb[0].mxu0
        %v3536 = vadd.f32 %v3347, %v3535
        %v3537 = vpop.f32.mrb[0].mxu0
        %3538 = vmatprep.mubr.f32.mxu0 %v2921
        %3539 = vmatmul.mubr.f32.gmra.mrb[0].mxu0 %v2901
        %v3540 = vpop.f32.mrb[0].mxu0
        %v3541 = vadd.f32 %v3347, %v3540
        %v3542 = vpop.f32.mrb[0].mxu0
        %3543 = vmatprep.mubr.f32.mxu0 %v2922
        %3544 = vmatmul.mubr.f32.gmra.mrb[0].mxu0 %v2902
        %v3545 = vpop.f32.mrb[0].mxu0
        %v3546 = vadd.f32 %v3347, %v3545
        %v3547 = vpop.f32.mrb[0].mxu0
        %3548 = vmatprep.mubr.f32.mxu0 %v2923
        %3549 = vmatmul.mubr.f32.gmra.mrb[0].mxu0 %v2903
        %v3550 = vpop.f32.mrb[0].mxu0
        %v3551 = vadd.f32 %v3347, %v3550
        %v3552 = vpop.f32.mrb[0].mxu0
        %3553 = vmatprep.mubr.f32.mxu0 %v2924
        %3554 = vmatmul.mubr.f32.gmra.mrb[0].mxu0 %v2904
        %v3555 = vpop.f32.mrb[0].mxu0
        %v3556 = vadd.f32 %v3347, %v3555
        %v3557 = vpop.f32.mrb[0].mxu0
        %3558 = vmatprep.mubr.f32.mxu0 %v2925
        %3559 = vmatmul.mubr.f32.gmra.mrb[0].mxu0 %v2905
        %v3560 = vpop.f32.mrb[0].mxu0
        %v3561 = vadd.f32 %v3347, %v3560
        %v3562 = vpop.f32.mrb[0].mxu0
        %3563 = vmatprep.mubr.f32.mxu0 %v2926
        %3564 = vmatmul.mubr.f32.gmra.mrb[0].mxu0 %v2906
        %v3565 = vpop.f32.mrb[0].mxu0
        %v3566 = vadd.f32 %v3347, %v3565
        %v3567 = vpop.f32.mrb[0].mxu0
        %3568 = vmatprep.mubr.f32.mxu0 %v2927
        %3569 = vmatmul.mubr.f32.gmra.mrb[0].mxu0 %v2907
        %v3570 = vpop.f32.mrb[0].mxu0
        %v3571 = vadd.f32 %v3347, %v3570
        %v3572 = vpop.f32.mrb[0].mxu0
        %3573 = vdwg.mxu0
        %3574 = vmatprep.subr.mxu0 0.0
        %3575 = vmatpush1.msra.mxu0 %v3174
        %3576 = vmatprep.subr.mxu0 0.0
        %3577 = vmatpush1.msra.mxu0 %v3175
        %3578 = vmatprep.subr.mxu0 0.0
        %3579 = vmatpush1.msra.mxu0 %v3176
        %3580 = vmatprep.subr.mxu0 0.0
        %3581 = vmatpush1.msra.mxu0 %v3177
        %3582 = vmatprep.subr.mxu0 0.0
        %3583 = vmatpush1.msra.mxu0 %v3178
        %3584 = vmatprep.subr.mxu0 0.0
        %3585 = vmatpush1.msra.mxu0 %v3179
        %3586 = vmatprep.subr.mxu0 0.0
        %3587 = vmatpush1.msra.mxu0 %v3180
        %3588 = vmatprep.subr.mxu0 0.0
        %3589 = vmatpush1.msra.mxu0 %v3181
        %3590 = vmatprep.subr.mxu0 0.0
        %3591 = vmatpush1.msra.mxu0 %v3182
        %3592 = vmatprep.subr.mxu0 0.0
        %3593 = vmatpush1.msra.mxu0 %v3183
        %3594 = vmatprep.subr.mxu0 0.0
        %3595 = vmatpush1.msra.mxu0 %v3184
        %3596 = vmatprep.subr.mxu0 0.0
        %3597 = vmatpush1.msra.mxu0 %v3185
        %3598 = vmatprep.subr.mxu0 0.0
        %3599 = vmatpush1.msra.mxu0 %v3186
        %3600 = vmatprep.subr.mxu0 0.0
        %3601 = vmatpush1.msra.mxu0 %v3187
        %3602 = vmatprep.subr.mxu0 0.0
        %3603 = vmatpush1.msra.mxu0 %v3188
        %3604 = vmatprep.subr.mxu0 0.0
        %3605 = vmatpush1.msra.mxu0 %v3189
        %3606 = vmatprep.subr.mxu0 0.0
        %3607 = vmatpush1.msra.mxu0 %v3190
        %3608 = vmatprep.subr.mxu0 0.0
        %3609 = vmatpush1.msra.mxu0 %v3191
        %3610 = vmatprep.subr.mxu0 0.0
        %3611 = vmatpush1.msra.mxu0 %v3192
        %3612 = vmatprep.subr.mxu0 0.0
        %3613 = vmatpush1.msra.mxu0 %v3193
        %3614 = vmatprep.subr.mxu0 0.0
        %3615 = vmatpush1.msra.mxu0 %v3194
        %3616 = vmatprep.subr.mxu0 0.0
        %3617 = vmatpush1.msra.mxu0 %v3195
        %3618 = vmatprep.subr.mxu0 0.0
        %3619 = vmatpush1.msra.mxu0 %v3196
        %3620 = vmatprep.subr.mxu0 0.0
        %3621 = vmatpush1.msra.mxu0 %v3197
        %3622 = vmatprep.subr.mxu0 0.0
        %3623 = vmatpush1.msra.mxu0 %v3198
        %3624 = vmatprep.subr.mxu0 0.0
        %3625 = vmatpush1.msra.mxu0 %v3199
        %3626 = vmatprep.subr.mxu0 0.0
        %3627 = vmatpush1.msra.mxu0 %v3200
        %3628 = vmatprep.subr.mxu0 0.0
        %3629 = vmatpush1.msra.mxu0 %v3201
        %3630 = vmatprep.subr.mxu0 0.0
        %3631 = vmatpush1.msra.mxu0 %v3202
        %3632 = vmatprep.subr.mxu0 0.0
        %3633 = vmatpush1.msra.mxu0 %v3203
        %3634 = vmatprep.subr.mxu0 0.0
        %3635 = vmatpush1.msra.mxu0 %v3204
        %3636 = vmatprep.subr.mxu0 0.0
        %3637 = vmatpush1.msra.mxu0 %v3205
        %3638 = vmatprep.mubr.f32.mxu0 %v2910
        %3639 = vmatmul.mubr.f32.gmra.mrb[0].mxu0 %v2928
        %v3640 = vpop.f32.mrb[0].mxu0
        %v3641 = vadd.f32 %v3476, %v3640
        %v3642 = vpop.f32.mrb[0].mxu0
        %3643 = vmatprep.mubr.f32.mxu0 %v2911
        %3644 = vmatmul.mubr.f32.gmra.mrb[0].mxu0 %v2929
        %v3645 = vpop.f32.mrb[0].mxu0
        %v3646 = vadd.f32 %v3481, %v3645
        %v3647 = vpop.f32.mrb[0].mxu0
        %3648 = vmatprep.mubr.f32.mxu0 %v2912
        %3649 = vmatmul.mubr.f32.gmra.mrb[0].mxu0 %v2930
        %v3650 = vpop.f32.mrb[0].mxu0
        %v3651 = vadd.f32 %v3486, %v3650
        %v3652 = vpop.f32.mrb[0].mxu0
        %3653 = vmatprep.mubr.f32.mxu0 %v2913
        %3654 = vmatmul.mubr.f32.gmra.mrb[0].mxu0 %v2931
        %v3655 = vpop.f32.mrb[0].mxu0
        %v3656 = vadd.f32 %v3491, %v3655
        %v3657 = vpop.f32.mrb[0].mxu0
        %3658 = vmatprep.mubr.f32.mxu0 %v2914
        %3659 = vmatmul.mubr.f32.gmra.mrb[0].mxu0 %v2932
        %v3660 = vpop.f32.mrb[0].mxu0
        %v3661 = vadd.f32 %v3496, %v3660
        %v3662 = vpop.f32.mrb[0].mxu0
        %3663 = vmatprep.mubr.f32.mxu0 %v2915
        %3664 = vmatmul.mubr.f32.gmra.mrb[0].mxu0 %v2933
        %v3665 = vpop.f32.mrb[0].mxu0
        %v3666 = vadd.f32 %v3501, %v3665
        %v3667 = vpop.f32.mrb[0].mxu0
        %3668 = vmatprep.mubr.f32.mxu0 %v2916
        %3669 = vmatmul.mubr.f32.gmra.mrb[0].mxu0 %v2934
        %v3670 = vpop.f32.mrb[0].mxu0
        %v3671 = vadd.f32 %v3506, %v3670
        %v3672 = vpop.f32.mrb[0].mxu0
        %3673 = vmatprep.mubr.f32.mxu0 %v2917
        %3674 = vmatmul.mubr.f32.gmra.mrb[0].mxu0 %v2935
        %v3675 = vpop.f32.mrb[0].mxu0
        %v3676 = vadd.f32 %v3511, %v3675
        %v3677 = vpop.f32.mrb[0].mxu0
        %3678 = vmatprep.mubr.f32.mxu0 %v2918
        %3679 = vmatmul.mubr.f32.gmra.mrb[0].mxu0 %v2936
        %v3680 = vpop.f32.mrb[0].mxu0
        %v3681 = vadd.f32 %v3516, %v3680
        %v3682 = vpop.f32.mrb[0].mxu0
        %3683 = vmatprep.mubr.f32.mxu0 %v2919
        %3684 = vmatmul.mubr.f32.gmra.mrb[0].mxu0 %v2937
        %v3685 = vpop.f32.mrb[0].mxu0
        %v3686 = vadd.f32 %v3521, %v3685
        %v3687 = vpop.f32.mrb[0].mxu0
        %3688 = vmatprep.mubr.f32.mxu0 %v2920
        %3689 = vmatmul.mubr.f32.gmra.mrb[0].mxu0 %v2938
        %v3690 = vpop.f32.mrb[0].mxu0
        %v3691 = vadd.f32 %v3526, %v3690
        %v3692 = vpop.f32.mrb[0].mxu0
        %3693 = vmatprep.mubr.f32.mxu0 %v2921
        %3694 = vmatmul.mubr.f32.gmra.mrb[0].mxu0 %v2939
        %v3695 = vpop.f32.mrb[0].mxu0
        %v3696 = vadd.f32 %v3531, %v3695
        %v3697 = vpop.f32.mrb[0].mxu0
        %3698 = vmatprep.mubr.f32.mxu0 %v2922
        %3699 = vmatmul.mubr.f32.gmra.mrb[0].mxu0 %v2940
        %v3700 = vpop.f32.mrb[0].mxu0
        %v3701 = vadd.f32 %v3536, %v3700
        %v3702 = vpop.f32.mrb[0].mxu0
        %3703 = vmatprep.mubr.f32.mxu0 %v2923
        %3704 = vmatmul.mubr.f32.gmra.mrb[0].mxu0 %v2941
        %v3705 = vpop.f32.mrb[0].mxu0
        %v3706 = vadd.f32 %v3541, %v3705
        %v3707 = vpop.f32.mrb[0].mxu0
        %3708 = vmatprep.mubr.f32.mxu0 %v2924
        %3709 = vmatmul.mubr.f32.gmra.mrb[0].mxu0 %v2942
        %v3710 = vpop.f32.mrb[0].mxu0
        %v3711 = vadd.f32 %v3546, %v3710
        %v3712 = vpop.f32.mrb[0].mxu0
        %3713 = vmatprep.mubr.f32.mxu0 %v2925
        %3714 = vmatmul.mubr.f32.gmra.mrb[0].mxu0 %v2943
        %v3715 = vpop.f32.mrb[0].mxu0
        %v3716 = vadd.f32 %v3551, %v3715
        %v3717 = vpop.f32.mrb[0].mxu0
        %3718 = vmatprep.mubr.f32.mxu0 %v2926
        %3719 = vmatmul.mubr.f32.gmra.mrb[0].mxu0 %v2944
        %v3720 = vpop.f32.mrb[0].mxu0
        %v3721 = vadd.f32 %v3556, %v3720
        %v3722 = vpop.f32.mrb[0].mxu0
        %3723 = vmatprep.mubr.f32.mxu0 %v2948
        %3724 = vmatmul.mubr.f32.gmra.mrb[0].mxu0 %v2945
        %v3725 = vpop.f32.mrb[0].mxu0
        %v3726 = vadd.f32 %v3561, %v3725
        %v3727 = vpop.f32.mrb[0].mxu0
        %3728 = vmatprep.mubr.f32.mxu0 %v2949
        %3729 = vmatmul.mubr.f32.gmra.mrb[0].mxu0 %v2946
        %v3730 = vpop.f32.mrb[0].mxu0
        %v3731 = vadd.f32 %v3566, %v3730
        %v3732 = vpop.f32.mrb[0].mxu0
        %3733 = vmatprep.mubr.f32.mxu0 %v2950
        %3734 = vmatmul.mubr.f32.gmra.mrb[0].mxu0 %v2947
        %v3735 = vpop.f32.mrb[0].mxu0
        %v3736 = vadd.f32 %v3571, %v3735
        %v3737 = vpop.f32.mrb[0].mxu0
        %3738 = vdwg.mxu0
        %3739 = vmatprep.subr.mxu0 0.0
        %3740 = vmatpush1.msra.mxu0 %v3206
        %3741 = vmatprep.subr.mxu0 0.0
        %3742 = vmatpush1.msra.mxu0 %v3207
        %3743 = vmatprep.subr.mxu0 0.0
        %3744 = vmatpush1.msra.mxu0 %v3208
        %3745 = vmatprep.subr.mxu0 0.0
        %3746 = vmatpush1.msra.mxu0 %v3209
        %3747 = vmatprep.subr.mxu0 0.0
        %3748 = vmatpush1.msra.mxu0 %v3210
        %3749 = vmatprep.subr.mxu0 0.0
        %3750 = vmatpush1.msra.mxu0 %v3211
        %3751 = vmatprep.subr.mxu0 0.0
        %3752 = vmatpush1.msra.mxu0 %v3212
        %3753 = vmatprep.subr.mxu0 0.0
        %3754 = vmatpush1.msra.mxu0 %v3213
        %3755 = vmatprep.subr.mxu0 0.0
        %3756 = vmatpush1.msra.mxu0 %v3214
        %3757 = vmatprep.subr.mxu0 0.0
        %3758 = vmatpush1.msra.mxu0 %v3215
        %3759 = vmatprep.subr.mxu0 0.0
        %3760 = vmatpush1.msra.mxu0 %v3216
        %3761 = vmatprep.subr.mxu0 0.0
        %3762 = vmatpush1.msra.mxu0 %v3217
        %3763 = vmatprep.subr.mxu0 0.0
        %3764 = vmatpush1.msra.mxu0 %v3218
        %3765 = vmatprep.subr.mxu0 0.0
        %3766 = vmatpush1.msra.mxu0 %v3219
        %3767 = vmatprep.subr.mxu0 0.0
        %3768 = vmatpush1.msra.mxu0 %v3220
        %3769 = vmatprep.subr.mxu0 0.0
        %3770 = vmatpush1.msra.mxu0 %v3221
        %3771 = vmatprep.subr.mxu0 0.0
        %3772 = vmatpush1.msra.mxu0 %v3222
        %3773 = vmatprep.subr.mxu0 0.0
        %3774 = vmatpush1.msra.mxu0 %v3223
        %3775 = vmatprep.subr.mxu0 0.0
        %3776 = vmatpush1.msra.mxu0 %v3224
        %3777 = vmatprep.subr.mxu0 0.0
        %3778 = vmatpush1.msra.mxu0 %v3225
        %3779 = vmatprep.subr.mxu0 0.0
        %3780 = vmatpush1.msra.mxu0 %v3226
        %3781 = vmatprep.subr.mxu0 0.0
        %3782 = vmatpush1.msra.mxu0 %v3227
        %3783 = vmatprep.subr.mxu0 0.0
        %3784 = vmatpush1.msra.mxu0 %v3228
        %3785 = vmatprep.subr.mxu0 0.0
        %3786 = vmatpush1.msra.mxu0 %v3229
        %3787 = vmatprep.subr.mxu0 0.0
        %3788 = vmatpush1.msra.mxu0 %v3230
        %3789 = vmatprep.subr.mxu0 0.0
        %3790 = vmatpush1.msra.mxu0 %v3231
        %3791 = vmatprep.subr.mxu0 0.0
        %3792 = vmatpush1.msra.mxu0 %v3232
        %3793 = vmatprep.subr.mxu0 0.0
        %3794 = vmatpush1.msra.mxu0 %v3233
        %3795 = vmatprep.subr.mxu0 0.0
        %3796 = vmatpush1.msra.mxu0 %v3234
        %3797 = vmatprep.subr.mxu0 0.0
        %3798 = vmatpush1.msra.mxu0 %v3235
        %3799 = vmatprep.subr.mxu0 0.0
        %3800 = vmatpush1.msra.mxu0 %v3236
        %3801 = vmatprep.subr.mxu0 0.0
        %3802 = vmatpush1.msra.mxu0 %v3237
        %3803 = vmatprep.mubr.f32.mxu0 %v2912
        %3804 = vmatmul.mubr.f32.gmra.mrb[0].mxu0 %v2951
        %v3805 = vpop.f32.mrb[0].mxu0
        %v3806 = vadd.f32 %v3641, %v3805
        %v3807 = vpop.f32.mrb[0].mxu0
        %3808 = vmatprep.mubr.f32.mxu0 %v2913
        %3809 = vmatmul.mubr.f32.gmra.mrb[0].mxu0 %v2952
        %v3810 = vpop.f32.mrb[0].mxu0
        %v3811 = vadd.f32 %v3646, %v3810
        %v3812 = vpop.f32.mrb[0].mxu0
        %3813 = vmatprep.mubr.f32.mxu0 %v2914
        %3814 = vmatmul.mubr.f32.gmra.mrb[0].mxu0 %v2953
        %v3815 = vpop.f32.mrb[0].mxu0
        %v3816 = vadd.f32 %v3651, %v3815
        %v3817 = vpop.f32.mrb[0].mxu0
        %3818 = vmatprep.mubr.f32.mxu0 %v2915
        %3819 = vmatmul.mubr.f32.gmra.mrb[0].mxu0 %v2954
        %v3820 = vpop.f32.mrb[0].mxu0
        %v3821 = vadd.f32 %v3656, %v3820
        %v3822 = vpop.f32.mrb[0].mxu0
        %3823 = vmatprep.mubr.f32.mxu0 %v2916
        %3824 = vmatmul.mubr.f32.gmra.mrb[0].mxu0 %v2955
        %v3825 = vpop.f32.mrb[0].mxu0
        %v3826 = vadd.f32 %v3661, %v3825
        %v3827 = vpop.f32.mrb[0].mxu0
        %3828 = vmatprep.mubr.f32.mxu0 %v2917
        %3829 = vmatmul.mubr.f32.gmra.mrb[0].mxu0 %v2956
        %v3830 = vpop.f32.mrb[0].mxu0
        %v3831 = vadd.f32 %v3666, %v3830
        %v3832 = vpop.f32.mrb[0].mxu0
        %3833 = vmatprep.mubr.f32.mxu0 %v2918
        %3834 = vmatmul.mubr.f32.gmra.mrb[0].mxu0 %v2957
        %v3835 = vpop.f32.mrb[0].mxu0
        %v3836 = vadd.f32 %v3671, %v3835
        %v3837 = vpop.f32.mrb[0].mxu0
        %3838 = vmatprep.mubr.f32.mxu0 %v2919
        %3839 = vmatmul.mubr.f32.gmra.mrb[0].mxu0 %v2958
        %v3840 = vpop.f32.mrb[0].mxu0
        %v3841 = vadd.f32 %v3676, %v3840
        %v3842 = vpop.f32.mrb[0].mxu0
        %3843 = vmatprep.mubr.f32.mxu0 %v2920
        %3844 = vmatmul.mubr.f32.gmra.mrb[0].mxu0 %v2959
        %v3845 = vpop.f32.mrb[0].mxu0
        %v3846 = vadd.f32 %v3681, %v3845
        %v3847 = vpop.f32.mrb[0].mxu0
        %3848 = vmatprep.mubr.f32.mxu0 %v2921
        %3849 = vmatmul.mubr.f32.gmra.mrb[0].mxu0 %v2960
        %v3850 = vpop.f32.mrb[0].mxu0
        %v3851 = vadd.f32 %v3686, %v3850
        %v3852 = vpop.f32.mrb[0].mxu0
        %3853 = vmatprep.mubr.f32.mxu0 %v2922
        %3854 = vmatmul.mubr.f32.gmra.mrb[0].mxu0 %v2961
        %v3855 = vpop.f32.mrb[0].mxu0
        %v3856 = vadd.f32 %v3691, %v3855
        %v3857 = vpop.f32.mrb[0].mxu0
        %3858 = vmatprep.mubr.f32.mxu0 %v2923
        %3859 = vmatmul.mubr.f32.gmra.mrb[0].mxu0 %v2962
        %v3860 = vpop.f32.mrb[0].mxu0
        %v3861 = vadd.f32 %v3696, %v3860
        %v3862 = vpop.f32.mrb[0].mxu0
        %3863 = vmatprep.mubr.f32.mxu0 %v2924
        %3864 = vmatmul.mubr.f32.gmra.mrb[0].mxu0 %v2963
        %v3865 = vpop.f32.mrb[0].mxu0
        %v3866 = vadd.f32 %v3701, %v3865
        %v3867 = vpop.f32.mrb[0].mxu0
        %3868 = vmatprep.mubr.f32.mxu0 %v2925
        %3869 = vmatmul.mubr.f32.gmra.mrb[0].mxu0 %v2964
        %v3870 = vpop.f32.mrb[0].mxu0
        %v3871 = vadd.f32 %v3706, %v3870
        %v3872 = vpop.f32.mrb[0].mxu0
        %3873 = vmatprep.mubr.f32.mxu0 %v2926
        %3874 = vmatmul.mubr.f32.gmra.mrb[0].mxu0 %v2965
        %v3875 = vpop.f32.mrb[0].mxu0
        %v3876 = vadd.f32 %v3711, %v3875
        %v3877 = vpop.f32.mrb[0].mxu0
        %3878 = vmatprep.mubr.f32.mxu0 %v2948
        %3879 = vmatmul.mubr.f32.gmra.mrb[0].mxu0 %v2966
        %v3880 = vpop.f32.mrb[0].mxu0
        %v3881 = vadd.f32 %v3716, %v3880
        %v3882 = vpop.f32.mrb[0].mxu0
        %3883 = vmatprep.mubr.f32.mxu0 %v2949
        %3884 = vmatmul.mubr.f32.gmra.mrb[0].mxu0 %v2967
        %v3885 = vpop.f32.mrb[0].mxu0
        %v3886 = vadd.f32 %v3721, %v3885
        %v3887 = vpop.f32.mrb[0].mxu0
        %3888 = vmatprep.mubr.f32.mxu0 %v2971
        %3889 = vmatmul.mubr.f32.gmra.mrb[0].mxu0 %v2968
        %v3890 = vpop.f32.mrb[0].mxu0
        %v3891 = vadd.f32 %v3726, %v3890
        %v3892 = vpop.f32.mrb[0].mxu0
        %3893 = vmatprep.mubr.f32.mxu0 %v2972
        %3894 = vmatmul.mubr.f32.gmra.mrb[0].mxu0 %v2969
        %v3895 = vpop.f32.mrb[0].mxu0
        %v3896 = vadd.f32 %v3731, %v3895
        %v3897 = vpop.f32.mrb[0].mxu0
        %3898 = vmatprep.mubr.f32.mxu0 %v2973
        %3899 = vmatmul.mubr.f32.gmra.mrb[0].mxu0 %v2970
        %v3900 = vpop.f32.mrb[0].mxu0
        %v3901 = vadd.f32 %v3736, %v3900
        %v3902 = vpop.f32.mrb[0].mxu0
        %3903 = vdwg.mxu0
        %3904 = vmatprep.subr.mxu0 0.0
        %3905 = vmatpush1.msra.mxu0 %v3238
        %3906 = vmatprep.subr.mxu0 0.0
        %3907 = vmatpush1.msra.mxu0 %v3239
        %3908 = vmatprep.subr.mxu0 0.0
        %3909 = vmatpush1.msra.mxu0 %v3240
        %3910 = vmatprep.subr.mxu0 0.0
        %3911 = vmatpush1.msra.mxu0 %v3241
        %3912 = vmatprep.subr.mxu0 0.0
        %3913 = vmatpush1.msra.mxu0 %v3242
        %3914 = vmatprep.subr.mxu0 0.0
        %3915 = vmatpush1.msra.mxu0 %v3243
        %3916 = vmatprep.subr.mxu0 0.0
        %3917 = vmatpush1.msra.mxu0 %v3244
        %3918 = vmatprep.subr.mxu0 0.0
        %3919 = vmatpush1.msra.mxu0 %v3245
        %3920 = vmatprep.subr.mxu0 0.0
        %3921 = vmatpush1.msra.mxu0 %v3246
        %3922 = vmatprep.subr.mxu0 0.0
        %3923 = vmatpush1.msra.mxu0 %v3247
        %3924 = vmatprep.subr.mxu0 0.0
        %3925 = vmatpush1.msra.mxu0 %v3248
        %3926 = vmatprep.subr.mxu0 0.0
        %3927 = vmatpush1.msra.mxu0 %v3249
        %3928 = vmatprep.subr.mxu0 0.0
        %3929 = vmatpush1.msra.mxu0 %v3250
        %3930 = vmatprep.subr.mxu0 0.0
        %3931 = vmatpush1.msra.mxu0 %v3251
        %3932 = vmatprep.subr.mxu0 0.0
        %3933 = vmatpush1.msra.mxu0 %v3252
        %3934 = vmatprep.subr.mxu0 0.0
        %3935 = vmatpush1.msra.mxu0 %v3253
        %3936 = vmatprep.subr.mxu0 0.0
        %3937 = vmatpush1.msra.mxu0 %v3254
        %3938 = vmatprep.subr.mxu0 0.0
        %3939 = vmatpush1.msra.mxu0 %v3255
        %3940 = vmatprep.subr.mxu0 0.0
        %3941 = vmatpush1.msra.mxu0 %v3256
        %3942 = vmatprep.subr.mxu0 0.0
        %3943 = vmatpush1.msra.mxu0 %v3257
        %3944 = vmatprep.subr.mxu0 0.0
        %3945 = vmatpush1.msra.mxu0 %v3258
        %3946 = vmatprep.subr.mxu0 0.0
        %3947 = vmatpush1.msra.mxu0 %v3259
        %3948 = vmatprep.subr.mxu0 0.0
        %3949 = vmatpush1.msra.mxu0 %v3260
        %3950 = vmatprep.subr.mxu0 0.0
        %3951 = vmatpush1.msra.mxu0 %v3261
        %3952 = vmatprep.subr.mxu0 0.0
        %3953 = vmatpush1.msra.mxu0 %v3262
        %3954 = vmatprep.subr.mxu0 0.0
        %3955 = vmatpush1.msra.mxu0 %v3263
        %3956 = vmatprep.subr.mxu0 0.0
        %3957 = vmatpush1.msra.mxu0 %v3264
        %3958 = vmatprep.subr.mxu0 0.0
        %3959 = vmatpush1.msra.mxu0 %v3265
        %3960 = vmatprep.subr.mxu0 0.0
        %3961 = vmatpush1.msra.mxu0 %v3266
        %3962 = vmatprep.subr.mxu0 0.0
        %3963 = vmatpush1.msra.mxu0 %v3267
        %3964 = vmatprep.subr.mxu0 0.0
        %3965 = vmatpush1.msra.mxu0 %v3268
        %3966 = vmatprep.subr.mxu0 0.0
        %3967 = vmatpush1.msra.mxu0 %v3269
        %3968 = vmatprep.mubr.f32.mxu0 %v2977
        %3969 = vmatmul.mubr.f32.gmra.mrb[0].mxu0 %v2953
        %v3970 = vpop.f32.mrb[0].mxu0
        %v3971 = vadd.f32 %v3806, %v3970
        %v3972 = vpop.f32.mrb[0].mxu0
        %3973 = vmatprep.mubr.f32.mxu0 %v2978
        %3974 = vmatmul.mubr.f32.gmra.mrb[0].mxu0 %v2954
        %v3975 = vpop.f32.mrb[0].mxu0
        %v3976 = vadd.f32 %v3811, %v3975
        %v3977 = vpop.f32.mrb[0].mxu0
        %3978 = vmatprep.mubr.f32.mxu0 %v2979
        %3979 = vmatmul.mubr.f32.gmra.mrb[0].mxu0 %v2955
        %v3980 = vpop.f32.mrb[0].mxu0
        %v3981 = vadd.f32 %v3816, %v3980
        %v3982 = vpop.f32.mrb[0].mxu0
        %3983 = vmatprep.mubr.f32.mxu0 %v2980
        %3984 = vmatmul.mubr.f32.gmra.mrb[0].mxu0 %v2956
        %v3985 = vpop.f32.mrb[0].mxu0
        %v3986 = vadd.f32 %v3821, %v3985
        %v3987 = vpop.f32.mrb[0].mxu0
        %3988 = vmatprep.mubr.f32.mxu0 %v2981
        %3989 = vmatmul.mubr.f32.gmra.mrb[0].mxu0 %v2957
        %v3990 = vpop.f32.mrb[0].mxu0
        %v3991 = vadd.f32 %v3826, %v3990
        %v3992 = vpop.f32.mrb[0].mxu0
        %3993 = vmatprep.mubr.f32.mxu0 %v2982
        %3994 = vmatmul.mubr.f32.gmra.mrb[0].mxu0 %v2958
        %v3995 = vpop.f32.mrb[0].mxu0
        %v3996 = vadd.f32 %v3831, %v3995
        %v3997 = vpop.f32.mrb[0].mxu0
        %3998 = vmatprep.mubr.f32.mxu0 %v2983
        %3999 = vmatmul.mubr.f32.gmra.mrb[0].mxu0 %v2959
        %v4000 = vpop.f32.mrb[0].mxu0
        %v4001 = vadd.f32 %v3836, %v4000
        %v4002 = vpop.f32.mrb[0].mxu0
        %4003 = vmatprep.mubr.f32.mxu0 %v2984
        %4004 = vmatmul.mubr.f32.gmra.mrb[0].mxu0 %v2960
        %v4005 = vpop.f32.mrb[0].mxu0
        %v4006 = vadd.f32 %v3841, %v4005
        %v4007 = vpop.f32.mrb[0].mxu0
        %4008 = vmatprep.mubr.f32.mxu0 %v2985
        %4009 = vmatmul.mubr.f32.gmra.mrb[0].mxu0 %v2961
        %v4010 = vpop.f32.mrb[0].mxu0
        %v4011 = vadd.f32 %v3846, %v4010
        %v4012 = vpop.f32.mrb[0].mxu0
        %4013 = vmatprep.mubr.f32.mxu0 %v2986
        %4014 = vmatmul.mubr.f32.gmra.mrb[0].mxu0 %v2962
        %v4015 = vpop.f32.mrb[0].mxu0
        %v4016 = vadd.f32 %v3851, %v4015
        %v4017 = vpop.f32.mrb[0].mxu0
        %4018 = vmatprep.mubr.f32.mxu0 %v2987
        %4019 = vmatmul.mubr.f32.gmra.mrb[0].mxu0 %v2963
        %v4020 = vpop.f32.mrb[0].mxu0
        %v4021 = vadd.f32 %v3856, %v4020
        %v4022 = vpop.f32.mrb[0].mxu0
        %4023 = vmatprep.mubr.f32.mxu0 %v2988
        %4024 = vmatmul.mubr.f32.gmra.mrb[0].mxu0 %v2964
        %v4025 = vpop.f32.mrb[0].mxu0
        %v4026 = vadd.f32 %v3861, %v4025
        %v4027 = vpop.f32.mrb[0].mxu0
        %4028 = vmatprep.mubr.f32.mxu0 %v2989
        %4029 = vmatmul.mubr.f32.gmra.mrb[0].mxu0 %v2965
        %v4030 = vpop.f32.mrb[0].mxu0
        %v4031 = vadd.f32 %v3866, %v4030
        %v4032 = vpop.f32.mrb[0].mxu0
        %4033 = vmatprep.mubr.f32.mxu0 %v2990
        %4034 = vmatmul.mubr.f32.gmra.mrb[0].mxu0 %v2966
        %v4035 = vpop.f32.mrb[0].mxu0
        %v4036 = vadd.f32 %v3871, %v4035
        %v4037 = vpop.f32.mrb[0].mxu0
        %4038 = vmatprep.mubr.f32.mxu0 %v2991
        %4039 = vmatmul.mubr.f32.gmra.mrb[0].mxu0 %v2967
        %v4040 = vpop.f32.mrb[0].mxu0
        %v4041 = vadd.f32 %v3876, %v4040
        %v4042 = vpop.f32.mrb[0].mxu0
        %4043 = vmatprep.mubr.f32.mxu0 %v2992
        %4044 = vmatmul.mubr.f32.gmra.mrb[0].mxu0 %v2968
        %v4045 = vpop.f32.mrb[0].mxu0
        %v4046 = vadd.f32 %v3881, %v4045
        %v4047 = vpop.f32.mrb[0].mxu0
        %4048 = vmatprep.mubr.f32.mxu0 %v2993
        %4049 = vmatmul.mubr.f32.gmra.mrb[0].mxu0 %v2969
        %v4050 = vpop.f32.mrb[0].mxu0
        %v4051 = vadd.f32 %v3886, %v4050
        %v4052 = vpop.f32.mrb[0].mxu0
        %4053 = vmatprep.mubr.f32.mxu0 %v2994
        %4054 = vmatmul.mubr.f32.gmra.mrb[0].mxu0 %v2974
        %v4055 = vpop.f32.mrb[0].mxu0
        %v4056 = vadd.f32 %v3891, %v4055
        %v4057 = vpop.f32.mrb[0].mxu0
        %4058 = vmatprep.mubr.f32.mxu0 %v2995
        %4059 = vmatmul.mubr.f32.gmra.mrb[0].mxu0 %v2975
        %v4060 = vpop.f32.mrb[0].mxu0
        %v4061 = vadd.f32 %v3896, %v4060
        %v4062 = vpop.f32.mrb[0].mxu0
        %4063 = vmatprep.mubr.f32.mxu0 %v2996
        %4064 = vmatmul.mubr.f32.gmra.mrb[0].mxu0 %v2976
        %v4065 = vpop.f32.mrb[0].mxu0
        %v4066 = vadd.f32 %v3901, %v4065
        %v4067 = vpop.f32.mrb[0].mxu0
        %4068 = vdwg.mxu0
        %4069 = vmatprep.subr.mxu0 0.0
        %4070 = vmatpush1.msra.mxu0 %v3270
        %4071 = vmatprep.subr.mxu0 0.0
        %4072 = vmatpush1.msra.mxu0 %v3271
        %4073 = vmatprep.subr.mxu0 0.0
        %4074 = vmatpush1.msra.mxu0 %v3272
        %4075 = vmatprep.subr.mxu0 0.0
        %4076 = vmatpush1.msra.mxu0 %v3273
        %4077 = vmatprep.subr.mxu0 0.0
        %4078 = vmatpush1.msra.mxu0 %v3274
        %4079 = vmatprep.subr.mxu0 0.0
        %4080 = vmatpush1.msra.mxu0 %v3275
        %4081 = vmatprep.subr.mxu0 0.0
        %4082 = vmatpush1.msra.mxu0 %v3276
        %4083 = vmatprep.subr.mxu0 0.0
        %4084 = vmatpush1.msra.mxu0 %v3277
        %4085 = vmatprep.subr.mxu0 0.0
        %4086 = vmatpush1.msra.mxu0 %v3278
        %4087 = vmatprep.subr.mxu0 0.0
        %4088 = vmatpush1.msra.mxu0 %v3279
        %4089 = vmatprep.subr.mxu0 0.0
        %4090 = vmatpush1.msra.mxu0 %v3280
        %4091 = vmatprep.subr.mxu0 0.0
        %4092 = vmatpush1.msra.mxu0 %v3281
        %4093 = vmatprep.subr.mxu0 0.0
        %4094 = vmatpush1.msra.mxu0 %v3282
        %4095 = vmatprep.subr.mxu0 0.0
        %4096 = vmatpush1.msra.mxu0 %v3283
        %4097 = vmatprep.subr.mxu0 0.0
        %4098 = vmatpush1.msra.mxu0 %v3284
        %4099 = vmatprep.subr.mxu0 0.0
        %4100 = vmatpush1.msra.mxu0 %v3285
        %4101 = vmatprep.subr.mxu0 0.0
        %4102 = vmatpush1.msra.mxu0 %v3286
        %4103 = vmatprep.subr.mxu0 0.0
        %4104 = vmatpush1.msra.mxu0 %v3287
        %4105 = vmatprep.subr.mxu0 0.0
        %4106 = vmatpush1.msra.mxu0 %v3288
        %4107 = vmatprep.subr.mxu0 0.0
        %4108 = vmatpush1.msra.mxu0 %v3289
        %4109 = vmatprep.subr.mxu0 0.0
        %4110 = vmatpush1.msra.mxu0 %v3290
        %4111 = vmatprep.subr.mxu0 0.0
        %4112 = vmatpush1.msra.mxu0 %v3291
        %4113 = vmatprep.subr.mxu0 0.0
        %4114 = vmatpush1.msra.mxu0 %v3292
        %4115 = vmatprep.subr.mxu0 0.0
        %4116 = vmatpush1.msra.mxu0 %v3293
        %4117 = vmatprep.subr.mxu0 0.0
        %4118 = vmatpush1.msra.mxu0 %v3294
        %4119 = vmatprep.subr.mxu0 0.0
        %4120 = vmatpush1.msra.mxu0 %v3295
        %4121 = vmatprep.subr.mxu0 0.0
        %4122 = vmatpush1.msra.mxu0 %v3296
        %4123 = vmatprep.subr.mxu0 0.0
        %4124 = vmatpush1.msra.mxu0 %v3297
        %4125 = vmatprep.subr.mxu0 0.0
        %4126 = vmatpush1.msra.mxu0 %v3298
        %4127 = vmatprep.subr.mxu0 0.0
        %4128 = vmatpush1.msra.mxu0 %v3299
        %4129 = vmatprep.subr.mxu0 0.0
        %4130 = vmatpush1.msra.mxu0 %v3300
        %4131 = vmatprep.subr.mxu0 0.0
        %4132 = vmatpush1.msra.mxu0 %v3301
        %4133 = vmatprep.mubr.f32.mxu0 %v3116
        %4134 = vmatmul.mubr.f32.gmra.mrb[0].mxu0 %v2955
        %v4135 = vpop.f32.mrb[0].mxu0
        %v4136 = vadd.f32 %v3971, %v4135
        %v4137 = vpop.f32.mrb[0].mxu0
        %4138 = vmatprep.mubr.f32.mxu0 %v3117
        %4139 = vmatmul.mubr.f32.gmra.mrb[0].mxu0 %v2956
        %v4140 = vpop.f32.mrb[0].mxu0
        %v4141 = vadd.f32 %v3976, %v4140
        %v4142 = vpop.f32.mrb[0].mxu0
        %4143 = vmatprep.mubr.f32.mxu0 %v3118
        %4144 = vmatmul.mubr.f32.gmra.mrb[0].mxu0 %v2957
        %v4145 = vpop.f32.mrb[0].mxu0
        %v4146 = vadd.f32 %v3981, %v4145
        %v4147 = vpop.f32.mrb[0].mxu0
        %4148 = vmatprep.mubr.f32.mxu0 %v3119
        %4149 = vmatmul.mubr.f32.gmra.mrb[0].mxu0 %v2958
        %v4150 = vpop.f32.mrb[0].mxu0
        %v4151 = vadd.f32 %v3986, %v4150
        %v4152 = vpop.f32.mrb[0].mxu0
        %4153 = vmatprep.mubr.f32.mxu0 %v3120
        %4154 = vmatmul.mubr.f32.gmra.mrb[0].mxu0 %v2959
        %v4155 = vpop.f32.mrb[0].mxu0
        %v4156 = vadd.f32 %v3991, %v4155
        %v4157 = vpop.f32.mrb[0].mxu0
        %4158 = vmatprep.mubr.f32.mxu0 %v3121
        %4159 = vmatmul.mubr.f32.gmra.mrb[0].mxu0 %v2960
        %v4160 = vpop.f32.mrb[0].mxu0
        %v4161 = vadd.f32 %v3996, %v4160
        %v4162 = vpop.f32.mrb[0].mxu0
        %4163 = vmatprep.mubr.f32.mxu0 %v3122
        %4164 = vmatmul.mubr.f32.gmra.mrb[0].mxu0 %v2961
        %v4165 = vpop.f32.mrb[0].mxu0
        %v4166 = vadd.f32 %v4001, %v4165
        %v4167 = vpop.f32.mrb[0].mxu0
        %4168 = vmatprep.mubr.f32.mxu0 %v3123
        %4169 = vmatmul.mubr.f32.gmra.mrb[0].mxu0 %v2962
        %v4170 = vpop.f32.mrb[0].mxu0
        %v4171 = vadd.f32 %v4006, %v4170
        %v4172 = vpop.f32.mrb[0].mxu0
        %4173 = vmatprep.mubr.f32.mxu0 %v3124
        %4174 = vmatmul.mubr.f32.gmra.mrb[0].mxu0 %v2963
        %v4175 = vpop.f32.mrb[0].mxu0
        %v4176 = vadd.f32 %v4011, %v4175
        %v4177 = vpop.f32.mrb[0].mxu0
        %4178 = vmatprep.mubr.f32.mxu0 %v3125
        %4179 = vmatmul.mubr.f32.gmra.mrb[0].mxu0 %v2964
        %v4180 = vpop.f32.mrb[0].mxu0
        %v4181 = vadd.f32 %v4016, %v4180
        %v4182 = vpop.f32.mrb[0].mxu0
        %4183 = vmatprep.mubr.f32.mxu0 %v3126
        %4184 = vmatmul.mubr.f32.gmra.mrb[0].mxu0 %v2965
        %v4185 = vpop.f32.mrb[0].mxu0
        %v4186 = vadd.f32 %v4021, %v4185
        %v4187 = vpop.f32.mrb[0].mxu0
        %4188 = vmatprep.mubr.f32.mxu0 %v3127
        %4189 = vmatmul.mubr.f32.gmra.mrb[0].mxu0 %v2966
        %v4190 = vpop.f32.mrb[0].mxu0
        %v4191 = vadd.f32 %v4026, %v4190
        %v4192 = vpop.f32.mrb[0].mxu0
        %4193 = vmatprep.mubr.f32.mxu0 %v3128
        %4194 = vmatmul.mubr.f32.gmra.mrb[0].mxu0 %v2967
        %v4195 = vpop.f32.mrb[0].mxu0
        %v4196 = vadd.f32 %v4031, %v4195
        %v4197 = vpop.f32.mrb[0].mxu0
        %4198 = vmatprep.mubr.f32.mxu0 %v3129
        %4199 = vmatmul.mubr.f32.gmra.mrb[0].mxu0 %v2968
        %v4200 = vpop.f32.mrb[0].mxu0
        %v4201 = vadd.f32 %v4036, %v4200
        %v4202 = vpop.f32.mrb[0].mxu0
        %4203 = vmatprep.mubr.f32.mxu0 %v3130
        %4204 = vmatmul.mubr.f32.gmra.mrb[0].mxu0 %v2969
        %v4205 = vpop.f32.mrb[0].mxu0
        %v4206 = vadd.f32 %v4041, %v4205
        %v4207 = vpop.f32.mrb[0].mxu0
        %4208 = vmatprep.mubr.f32.mxu0 %v3131
        %4209 = vmatmul.mubr.f32.gmra.mrb[0].mxu0 %v2974
        %v4210 = vpop.f32.mrb[0].mxu0
        %v4211 = vadd.f32 %v4046, %v4210
        %v4212 = vpop.f32.mrb[0].mxu0
        %4213 = vmatprep.mubr.f32.mxu0 %v3132
        %4214 = vmatmul.mubr.f32.gmra.mrb[0].mxu0 %v2975
        %v4215 = vpop.f32.mrb[0].mxu0
        %v4216 = vadd.f32 %v4051, %v4215
        %v4217 = vpop.f32.mrb[0].mxu0
        %4218 = vmatprep.mubr.f32.mxu0 %v3133
        %4219 = vmatmul.mubr.f32.gmra.mrb[0].mxu0 %v3113
        %v4220 = vpop.f32.mrb[0].mxu0
        %v4221 = vadd.f32 %v4056, %v4220
        %v4222 = vpop.f32.mrb[0].mxu0
        %4223 = vmatprep.mubr.f32.mxu0 %v3134
        %4224 = vmatmul.mubr.f32.gmra.mrb[0].mxu0 %v3114
        %v4225 = vpop.f32.mrb[0].mxu0
        %v4226 = vadd.f32 %v4061, %v4225
        %v4227 = vpop.f32.mrb[0].mxu0
        %4228 = vmatprep.mubr.f32.mxu0 %v3135
        %4229 = vmatmul.mubr.f32.gmra.mrb[0].mxu0 %v3115
        %v4230 = vpop.f32.mrb[0].mxu0
        %v4231 = vadd.f32 %v4066, %v4230
        %v4232 = vpop.f32.mrb[0].mxu0
        %4233 = vdwg.mxu0
        %4234 = vmatprep.subr.mxu0 0.0
        %4235 = vmatpush1.msra.mxu0 %v3302
        %4236 = vmatprep.subr.mxu0 0.0
        %4237 = vmatpush1.msra.mxu0 %v3303
        %4238 = vmatprep.subr.mxu0 0.0
        %4239 = vmatpush1.msra.mxu0 %v3304
        %4240 = vmatprep.subr.mxu0 0.0
        %4241 = vmatpush1.msra.mxu0 %v3305
        %4242 = vmatprep.subr.mxu0 0.0
        %4243 = vmatpush1.msra.mxu0 %v3306
        %4244 = vmatprep.subr.mxu0 0.0
        %4245 = vmatpush1.msra.mxu0 %v3307
        %4246 = vmatprep.subr.mxu0 0.0
        %4247 = vmatpush1.msra.mxu0 %v3308
        %4248 = vmatprep.subr.mxu0 0.0
        %4249 = vmatpush1.msra.mxu0 %v3309
        %4250 = vmatprep.subr.mxu0 0.0
        %4251 = vmatpush1.msra.mxu0 %v3310
        %4252 = vmatprep.subr.mxu0 0.0
        %4253 = vmatpush1.msra.mxu0 %v3311
        %4254 = vmatprep.subr.mxu0 0.0
        %4255 = vmatpush1.msra.mxu0 %v3312
        %4256 = vmatprep.subr.mxu0 0.0
        %4257 = vmatpush1.msra.mxu0 %v3313
        %4258 = vmatprep.subr.mxu0 0.0
        %4259 = vmatpush1.msra.mxu0 %v3314
        %4260 = vmatprep.subr.mxu0 0.0
        %4261 = vmatpush1.msra.mxu0 %v3315
        %4262 = vmatprep.subr.mxu0 0.0
        %4263 = vmatpush1.msra.mxu0 %v3316
        %4264 = vmatprep.subr.mxu0 0.0
        %4265 = vmatpush1.msra.mxu0 %v3317
        %4266 = vmatprep.subr.mxu0 0.0
        %4267 = vmatpush1.msra.mxu0 %v3318
        %4268 = vmatprep.subr.mxu0 0.0
        %4269 = vmatpush1.msra.mxu0 %v3319
        %4270 = vmatprep.subr.mxu0 0.0
        %4271 = vmatpush1.msra.mxu0 %v3320
        %4272 = vmatprep.subr.mxu0 0.0
        %4273 = vmatpush1.msra.mxu0 %v3321
        %4274 = vmatprep.subr.mxu0 0.0
        %4275 = vmatpush1.msra.mxu0 %v3322
        %4276 = vmatprep.subr.mxu0 0.0
        %4277 = vmatpush1.msra.mxu0 %v3323
        %4278 = vmatprep.subr.mxu0 0.0
        %4279 = vmatpush1.msra.mxu0 %v3324
        %4280 = vmatprep.subr.mxu0 0.0
        %4281 = vmatpush1.msra.mxu0 %v3325
        %4282 = vmatprep.subr.mxu0 0.0
        %4283 = vmatpush1.msra.mxu0 %v3326
        %4284 = vmatprep.subr.mxu0 0.0
        %4285 = vmatpush1.msra.mxu0 %v3327
        %4286 = vmatprep.subr.mxu0 0.0
        %4287 = vmatpush1.msra.mxu0 %v3328
        %4288 = vmatprep.subr.mxu0 0.0
        %4289 = vmatpush1.msra.mxu0 %v3329
        %4290 = vmatprep.subr.mxu0 0.0
        %4291 = vmatpush1.msra.mxu0 %v3330
        %4292 = vmatprep.subr.mxu0 0.0
        %4293 = vmatpush1.msra.mxu0 %v3331
        %4294 = vmatprep.subr.mxu0 0.0
        %4295 = vmatpush1.msra.mxu0 %v3332
        %4296 = vmatprep.subr.mxu0 0.0
        %4297 = vmatpush1.msra.mxu0 %v3333
        %4298 = vmatprep.mubr.f32.mxu0 %v3118
        %4299 = vmatmul.mubr.f32.gmra.mrb[0].mxu0 %v2957
        %v4300 = vpop.f32.mrb[0].mxu0
        %v4301 = vadd.f32 %v4136, %v4300
        %v4302 = vpop.f32.mrb[0].mxu0
        %4303 = vmatprep.mubr.f32.mxu0 %v3119
        %4304 = vmatmul.mubr.f32.gmra.mrb[0].mxu0 %v2958
        %v4305 = vpop.f32.mrb[0].mxu0
        %v4306 = vadd.f32 %v4141, %v4305
        %v4307 = vpop.f32.mrb[0].mxu0
        %4308 = vmatprep.mubr.f32.mxu0 %v3120
        %4309 = vmatmul.mubr.f32.gmra.mrb[0].mxu0 %v2959
        %v4310 = vpop.f32.mrb[0].mxu0
        %v4311 = vadd.f32 %v4146, %v4310
        %v4312 = vpop.f32.mrb[0].mxu0
        %4313 = vmatprep.mubr.f32.mxu0 %v3121
        %4314 = vmatmul.mubr.f32.gmra.mrb[0].mxu0 %v2960
        %v4315 = vpop.f32.mrb[0].mxu0
        %v4316 = vadd.f32 %v4151, %v4315
        %v4317 = vpop.f32.mrb[0].mxu0
        %4318 = vmatprep.mubr.f32.mxu0 %v3122
        %4319 = vmatmul.mubr.f32.gmra.mrb[0].mxu0 %v2961
        %v4320 = vpop.f32.mrb[0].mxu0
        %v4321 = vadd.f32 %v4156, %v4320
        %v4322 = vpop.f32.mrb[0].mxu0
        %4323 = vmatprep.mubr.f32.mxu0 %v3123
        %4324 = vmatmul.mubr.f32.gmra.mrb[0].mxu0 %v2962
        %v4325 = vpop.f32.mrb[0].mxu0
        %v4326 = vadd.f32 %v4161, %v4325
        %v4327 = vpop.f32.mrb[0].mxu0
        %4328 = vmatprep.mubr.f32.mxu0 %v3124
        %4329 = vmatmul.mubr.f32.gmra.mrb[0].mxu0 %v2963
        %v4330 = vpop.f32.mrb[0].mxu0
        %v4331 = vadd.f32 %v4166, %v4330
        %v4332 = vpop.f32.mrb[0].mxu0
        %4333 = vmatprep.mubr.f32.mxu0 %v3125
        %4334 = vmatmul.mubr.f32.gmra.mrb[0].mxu0 %v2964
        %v4335 = vpop.f32.mrb[0].mxu0
        %v4336 = vadd.f32 %v4171, %v4335
        %v4337 = vpop.f32.mrb[0].mxu0
        %4338 = vmatprep.mubr.f32.mxu0 %v3126
        %4339 = vmatmul.mubr.f32.gmra.mrb[0].mxu0 %v2965
        %v4340 = vpop.f32.mrb[0].mxu0
        %v4341 = vadd.f32 %v4176, %v4340
        %v4342 = vpop.f32.mrb[0].mxu0
        %4343 = vmatprep.mubr.f32.mxu0 %v3127
        %4344 = vmatmul.mubr.f32.gmra.mrb[0].mxu0 %v2966
        %v4345 = vpop.f32.mrb[0].mxu0
        %v4346 = vadd.f32 %v4181, %v4345
        %v4347 = vpop.f32.mrb[0].mxu0
        %4348 = vmatprep.mubr.f32.mxu0 %v3128
        %4349 = vmatmul.mubr.f32.gmra.mrb[0].mxu0 %v2967
        %v4350 = vpop.f32.mrb[0].mxu0
        %v4351 = vadd.f32 %v4186, %v4350
        %v4352 = vpop.f32.mrb[0].mxu0
        %4353 = vmatprep.mubr.f32.mxu0 %v3129
        %4354 = vmatmul.mubr.f32.gmra.mrb[0].mxu0 %v2968
        %v4355 = vpop.f32.mrb[0].mxu0
        %v4356 = vadd.f32 %v4191, %v4355
        %v4357 = vpop.f32.mrb[0].mxu0
        %4358 = vmatprep.mubr.f32.mxu0 %v3130
        %4359 = vmatmul.mubr.f32.gmra.mrb[0].mxu0 %v2969
        %v4360 = vpop.f32.mrb[0].mxu0
        %v4361 = vadd.f32 %v4196, %v4360
        %v4362 = vpop.f32.mrb[0].mxu0
        %4363 = vmatprep.mubr.f32.mxu0 %v3131
        %4364 = vmatmul.mubr.f32.gmra.mrb[0].mxu0 %v2974
        %v4365 = vpop.f32.mrb[0].mxu0
        %v4366 = vadd.f32 %v4201, %v4365
        %v4367 = vpop.f32.mrb[0].mxu0
        %4368 = vmatprep.mubr.f32.mxu0 %v3132
        %4369 = vmatmul.mubr.f32.gmra.mrb[0].mxu0 %v2975
        %v4370 = vpop.f32.mrb[0].mxu0
        %v4371 = vadd.f32 %v4206, %v4370
        %v4372 = vpop.f32.mrb[0].mxu0
        %4373 = vmatprep.mubr.f32.mxu0 %v3133
        %4374 = vmatmul.mubr.f32.gmra.mrb[0].mxu0 %v3113
        %v4375 = vpop.f32.mrb[0].mxu0
        %v4376 = vadd.f32 %v4211, %v4375
        %v4377 = vpop.f32.mrb[0].mxu0
        %4378 = vmatprep.mubr.f32.mxu0 %v3134
        %4379 = vmatmul.mubr.f32.gmra.mrb[0].mxu0 %v3114
        %v4380 = vpop.f32.mrb[0].mxu0
        %v4381 = vadd.f32 %v4216, %v4380
        %v4382 = vpop.f32.mrb[0].mxu0
        %4383 = vmatprep.mubr.f32.mxu0 %v3139
        %4384 = vmatmul.mubr.f32.gmra.mrb[0].mxu0 %v3136
        %v4385 = vpop.f32.mrb[0].mxu0
        %v4386 = vadd.f32 %v4221, %v4385
        %v4387 = vpop.f32.mrb[0].mxu0
        %4388 = vmatprep.mubr.f32.mxu0 %v3140
        %4389 = vmatmul.mubr.f32.gmra.mrb[0].mxu0 %v3137
        %v4390 = vpop.f32.mrb[0].mxu0
        %v4391 = vadd.f32 %v4226, %v4390
        %v4392 = vpop.f32.mrb[0].mxu0
        %4393 = vmatprep.mubr.f32.mxu0 %v3141
        %4394 = vmatmul.mubr.f32.gmra.mrb[0].mxu0 %v3138
        %v4395 = vpop.f32.mrb[0].mxu0
        %v4396 = vadd.f32 %v4231, %v4395
        %v4397 = vpop.f32.mrb[0].mxu0
        %4398 = vdwg.mxu0
        %4399 = vmatprep.subr.mxu0 0.0
        %4400 = vmatpush1.msra.mxu0 %v3334
        %4401 = vmatprep.subr.mxu0 0.0
        %4402 = vmatpush1.msra.mxu0 %v3335
        %4403 = vmatprep.subr.mxu0 0.0
        %4404 = vmatpush1.msra.mxu0 %v3336
        %4405 = vmatprep.subr.mxu0 0.0
        %4406 = vmatpush1.msra.mxu0 %v3337
        %4407 = vmatprep.subr.mxu0 0.0
        %4408 = vmatpush1.msra.mxu0 %v3338
        %4409 = vmatprep.subr.mxu0 0.0
        %4410 = vmatpush1.msra.mxu0 %v3339
        %4411 = vmatprep.subr.mxu0 0.0
        %4412 = vmatpush1.msra.mxu0 %v3340
        %4413 = vmatprep.subr.mxu0 0.0
        %4414 = vmatpush1.msra.mxu0 %v3341
        %4415 = vmatprep.subr.mxu0 0.0
        %4416 = vmatpush1.msra.mxu0 0.0
        %4417 = vmatprep.subr.mxu0 0.0
        %4418 = vmatpush1.msra.mxu0 0.0
        %4419 = vmatprep.subr.mxu0 0.0
        %4420 = vmatpush1.msra.mxu0 0.0
        %4421 = vmatprep.subr.mxu0 0.0
        %4422 = vmatpush1.msra.mxu0 0.0
        %4423 = vmatprep.subr.mxu0 0.0
        %4424 = vmatpush1.msra.mxu0 0.0
        %4425 = vmatprep.subr.mxu0 0.0
        %4426 = vmatpush1.msra.mxu0 0.0
        %4427 = vmatprep.subr.mxu0 0.0
        %4428 = vmatpush1.msra.mxu0 0.0
        %4429 = vmatprep.subr.mxu0 0.0
        %4430 = vmatpush1.msra.mxu0 0.0
        %4431 = vmatprep.subr.mxu0 0.0
        %4432 = vmatpush1.msra.mxu0 0.0
        %4433 = vmatprep.subr.mxu0 0.0
        %4434 = vmatpush1.msra.mxu0 0.0
        %4435 = vmatprep.subr.mxu0 0.0
        %4436 = vmatpush1.msra.mxu0 0.0
        %4437 = vmatprep.subr.mxu0 0.0
        %4438 = vmatpush1.msra.mxu0 0.0
        %4439 = vmatprep.subr.mxu0 0.0
        %4440 = vmatpush1.msra.mxu0 0.0
        %4441 = vmatprep.subr.mxu0 0.0
        %4442 = vmatpush1.msra.mxu0 0.0
        %4443 = vmatprep.subr.mxu0 0.0
        %4444 = vmatpush1.msra.mxu0 0.0
        %4445 = vmatprep.subr.mxu0 0.0
        %4446 = vmatpush1.msra.mxu0 0.0
        %4447 = vmatprep.subr.mxu0 0.0
        %4448 = vmatpush1.msra.mxu0 0.0
        %4449 = vmatprep.subr.mxu0 0.0
        %4450 = vmatpush1.msra.mxu0 0.0
        %4451 = vmatprep.subr.mxu0 0.0
        %4452 = vmatpush1.msra.mxu0 0.0
        %4453 = vmatprep.subr.mxu0 0.0
        %4454 = vmatpush1.msra.mxu0 0.0
        %4455 = vmatprep.subr.mxu0 0.0
        %4456 = vmatpush1.msra.mxu0 0.0
        %4457 = vmatprep.subr.mxu0 0.0
        %4458 = vmatpush1.msra.mxu0 0.0
        %4459 = vmatprep.subr.mxu0 0.0
        %4460 = vmatpush1.msra.mxu0 0.0
        %4461 = vmatprep.subr.mxu0 0.0
        %4462 = vmatpush1.msra.mxu0 0.0
        %4463 = vmatprep.mubr.f32.mxu0 0.0
        %4464 = vmatmul.mubr.f32.gmra.mrb[0].mxu0 %v3350
        %v4465 = vpop.f32.mrb[0].mxu0
        %v4466 = vadd.f32 %v4301, %v4465
        %v4467 = vpop.f32.mrb[0].mxu0
        %4468 = vmatprep.mubr.f32.mxu0 0.0
        %4469 = vmatmul.mubr.f32.gmra.mrb[0].mxu0 %v3353
        %v4470 = vpop.f32.mrb[0].mxu0
        %v4471 = vadd.f32 %v4306, %v4470
        %v4472 = vpop.f32.mrb[0].mxu0
        %4473 = vmatprep.mubr.f32.mxu0 0.0
        %4474 = vmatmul.mubr.f32.gmra.mrb[0].mxu0 %v3356
        %v4475 = vpop.f32.mrb[0].mxu0
        %v4476 = vadd.f32 %v4311, %v4475
        %v4477 = vpop.f32.mrb[0].mxu0
        %4478 = vmatprep.mubr.f32.mxu0 0.0
        %4479 = vmatmul.mubr.f32.gmra.mrb[0].mxu0 %v3359
        %v4480 = vpop.f32.mrb[0].mxu0
        %v4481 = vadd.f32 %v4316, %v4480
        %v4482 = vpop.f32.mrb[0].mxu0
        %4483 = vmatprep.mubr.f32.mxu0 0.0
        %4484 = vmatmul.mubr.f32.gmra.mrb[0].mxu0 %v3362
        %v4485 = vpop.f32.mrb[0].mxu0
        %v4486 = vadd.f32 %v4321, %v4485
        %v4487 = vpop.f32.mrb[0].mxu0
        %4488 = vmatprep.mubr.f32.mxu0 0.0
        %4489 = vmatmul.mubr.f32.gmra.mrb[0].mxu0 %v3365
        %v4490 = vpop.f32.mrb[0].mxu0
        %v4491 = vadd.f32 %v4326, %v4490
        %v4492 = vpop.f32.mrb[0].mxu0
        %4493 = vmatprep.mubr.f32.mxu0 0.0
        %4494 = vmatmul.mubr.f32.gmra.mrb[0].mxu0 %v3368
        %v4495 = vpop.f32.mrb[0].mxu0
        %v4496 = vadd.f32 %v4331, %v4495
        %v4497 = vpop.f32.mrb[0].mxu0
        %4498 = vmatprep.mubr.f32.mxu0 0.0
        %4499 = vmatmul.mubr.f32.gmra.mrb[0].mxu0 %v3371
        %v4500 = vpop.f32.mrb[0].mxu0
        %v4501 = vadd.f32 %v4336, %v4500
        %v4502 = vpop.f32.mrb[0].mxu0
        %4503 = vmatprep.mubr.f32.mxu0 0.0
        %4504 = vmatmul.mubr.f32.gmra.mrb[0].mxu0 %v3374
        %v4505 = vpop.f32.mrb[0].mxu0
        %v4506 = vadd.f32 %v4341, %v4505
        %v4507 = vpop.f32.mrb[0].mxu0
        %4508 = vmatprep.mubr.f32.mxu0 0.0
        %4509 = vmatmul.mubr.f32.gmra.mrb[0].mxu0 %v3377
        %v4510 = vpop.f32.mrb[0].mxu0
        %v4511 = vadd.f32 %v4346, %v4510
        %v4512 = vpop.f32.mrb[0].mxu0
        %4513 = vmatprep.mubr.f32.mxu0 0.0
        %4514 = vmatmul.mubr.f32.gmra.mrb[0].mxu0 %v3380
        %v4515 = vpop.f32.mrb[0].mxu0
        %v4516 = vadd.f32 %v4351, %v4515
        %v4517 = vpop.f32.mrb[0].mxu0
        %4518 = vmatprep.mubr.f32.mxu0 0.0
        %4519 = vmatmul.mubr.f32.gmra.mrb[0].mxu0 %v3383
        %v4520 = vpop.f32.mrb[0].mxu0
        %v4521 = vadd.f32 %v4356, %v4520
        %v4522 = vpop.f32.mrb[0].mxu0
        %4523 = vmatprep.mubr.f32.mxu0 0.0
        %4524 = vmatmul.mubr.f32.gmra.mrb[0].mxu0 %v3386
        %v4525 = vpop.f32.mrb[0].mxu0
        %v4526 = vadd.f32 %v4361, %v4525
        %v4527 = vpop.f32.mrb[0].mxu0
        %4528 = vmatprep.mubr.f32.mxu0 0.0
        %4529 = vmatmul.mubr.f32.gmra.mrb[0].mxu0 %v3389
        %v4530 = vpop.f32.mrb[0].mxu0
        %v4531 = vadd.f32 %v4366, %v4530
        %v4532 = vpop.f32.mrb[0].mxu0
        %4533 = vmatprep.mubr.f32.mxu0 0.0
        %4534 = vmatmul.mubr.f32.gmra.mrb[0].mxu0 %v3392
        %v4535 = vpop.f32.mrb[0].mxu0
        %v4536 = vadd.f32 %v4371, %v4535
        %v4537 = vpop.f32.mrb[0].mxu0
        %4538 = vmatprep.mubr.f32.mxu0 0.0
        %4539 = vmatmul.mubr.f32.gmra.mrb[0].mxu0 %v3395
        %v4540 = vpop.f32.mrb[0].mxu0
        %v4541 = vadd.f32 %v4376, %v4540
        %v4542 = vpop.f32.mrb[0].mxu0
        %4543 = vmatprep.mubr.f32.mxu0 0.0
        %4544 = vmatmul.mubr.f32.gmra.mrb[0].mxu0 %v3398
        %v4545 = vpop.f32.mrb[0].mxu0
        %v4546 = vadd.f32 %v4381, %v4545
        %v4547 = vpop.f32.mrb[0].mxu0
        %4548 = vmatprep.mubr.f32.mxu0 0.0
        %4549 = vmatmul.mubr.f32.gmra.mrb[0].mxu0 %v3401
        %v4550 = vpop.f32.mrb[0].mxu0
        %v4551 = vadd.f32 %v4386, %v4550
        %v4552 = vpop.f32.mrb[0].mxu0
        %4553 = vmatprep.mubr.f32.mxu0 0.0
        %4554 = vmatmul.mubr.f32.gmra.mrb[0].mxu0 %v3404
        %v4555 = vpop.f32.mrb[0].mxu0
        %v4556 = vadd.f32 %v4391, %v4555
        %v4557 = vpop.f32.mrb[0].mxu0
        %4558 = vmatprep.mubr.f32.mxu0 0.0
        %4559 = vmatmul.mubr.f32.gmra.mrb[0].mxu0 %v3407
        %v4560 = vpop.f32.mrb[0].mxu0
        %v4561 = vadd.f32 %v4396, %v4560
        %v4562 = vpop.f32.mrb[0].mxu0
        %4563 = vdwg.mxu0
        %v4564 = vmax.f32 %v4466, 0.0
        %v4565 = vmax.f32 %v4471, 0.0
        %v4566 = vmax.f32 %v4476, 0.0
        %v4567 = vmax.f32 %v4481, 0.0
        %v4568 = vmax.f32 %v4486, 0.0
        %v4569 = vmax.f32 %v4491, 0.0
        %v4570 = vmax.f32 %v4496, 0.0
        %v4571 = vmax.f32 %v4501, 0.0
        %v4572 = vmax.f32 %v4506, 0.0
        %v4573 = vmax.f32 %v4511, 0.0
        %v4574 = vmax.f32 %v4516, 0.0
        %v4575 = vmax.f32 %v4521, 0.0
        %v4576 = vmax.f32 %v4526, 0.0
        %v4577 = vmax.f32 %v4531, 0.0
        %v4578 = vmax.f32 %v4536, 0.0
        %v4579 = vmax.f32 %v4541, 0.0
        %v4580 = vmax.f32 %v4546, 0.0
        %v4581 = vmax.f32 %v4551, 0.0
        %v4582 = vmax.f32 %v4556, 0.0
        %v4583 = vmax.f32 %v4561, 0.0
        %v4598 = vrot.slane %v4566, 1
        %v4599 = vrot.slane %v4567, 1
        %v4600 = vsel %vm1836, %v4598, %v4599
        %v4601 = vrot.slane %v4568, 1
        %v4602 = vsel %vm1836, %v4599, %v4601
        %v4603 = vrot.slane %v4570, 1
        %v4604 = vrot.slane %v4571, 1
        %v4605 = vsel %vm1836, %v4603, %v4604
        %v4606 = vrot.slane %v4572, 1
        %v4607 = vsel %vm1836, %v4604, %v4606
        %v4608 = vrot.slane %v4573, 1
        %v4609 = vsel %vm1836, %v4606, %v4608
        %v4610 = vrot.slane %v4574, 1
        %v4611 = vrot.slane %v4575, 1
        %v4612 = vsel %vm1836, %v4610, %v4611
        %v4613 = vrot.slane %v4576, 1
        %v4614 = vsel %vm1836, %v4611, %v4613
        %v4615 = vrot.slane %v4577, 1
        %v4616 = vsel %vm1836, %v4613, %v4615
        %v4617 = vrot.slane %v4578, 1
        %v4618 = vrot.slane %v4579, 1
        %v4619 = vsel %vm1836, %v4617, %v4618
        %v4620 = vrot.slane %v4580, 1
        %v4621 = vsel %vm1836, %v4618, %v4620
        %v4633 = vmax.f32 %v4564, %v4600
        %v4634 = vmax.f32 %v4565, %v4602
        %v4635 = vmax.f32 %v4568, %v4605
        %v4636 = vmax.f32 %v4569, %v4607
        %v4637 = vmax.f32 %v4570, %v4609
        %v4638 = vmax.f32 %v4572, %v4612
        %v4639 = vmax.f32 %v4573, %v4614
        %v4640 = vmax.f32 %v4574, %v4616
        %v4641 = vmax.f32 %v4576, %v4619
        %v4642 = vmax.f32 %v4577, %v4621
        %v4643 = vmax.f32 %v4578, %v4620
        %vm4648 = vcmask 1045504
        %v4649 = vrot.slane %v4568, 2
        %v4650 = vrot.slane %v4569, 2
        %v4651 = vsel %vm4648, %v4649, %v4650
        %v4652 = vrot.slane %v4570, 2
        %v4653 = vsel %vm4648, %v4650, %v4652
        %v4654 = vrot.slane %v4572, 2
        %v4655 = vrot.slane %v4573, 2
        %v4656 = vsel %vm4648, %v4654, %v4655
        %v4657 = vrot.slane %v4574, 2
        %v4658 = vsel %vm4648, %v4655, %v4657
        %v4659 = vrot.slane %v4575, 2
        %v4660 = vsel %vm4648, %v4657, %v4659
        %v4661 = vrot.slane %v4576, 2
        %v4662 = vrot.slane %v4577, 2
        %v4663 = vsel %vm4648, %v4661, %v4662
        %v4664 = vrot.slane %v4578, 2
        %v4665 = vsel %vm4648, %v4662, %v4664
        %v4666 = vrot.slane %v4579, 2
        %v4667 = vsel %vm4648, %v4664, %v4666
        %v4668 = vrot.slane %v4580, 2
        %v4669 = vrot.slane %v4581, 2
        %v4670 = vsel %vm4648, %v4668, %v4669
        %v4671 = vrot.slane %v4582, 2
        %v4672 = vsel %vm4648, %v4669, %v4671
        %v4673 = vrot.slane %v4583, 2
        %v4674 = vsel %vm4648, %v4671, %v4673
        %v4686 = vmax.f32 %v4633, %v4651
        %v4687 = vmax.f32 %v4634, %v4653
        %v4688 = vmax.f32 %v4635, %v4656
        %v4689 = vmax.f32 %v4636, %v4658
        %v4690 = vmax.f32 %v4637, %v4660
        %v4691 = vmax.f32 %v4638, %v4663
        %v4692 = vmax.f32 %v4639, %v4665
        %v4693 = vmax.f32 %v4640, %v4667
        %v4694 = vmax.f32 %v4641, %v4670
        %v4695 = vmax.f32 %v4642, %v4672
        %v4696 = vmax.f32 %v4643, %v4674
        %v4708 = vrot.slane %v4686, 1
        %v4709 = vrot.slane %v4687, 1
        %v4710 = vsel %vm1836, %v4708, %v4709
        %v4711 = vrot.slane %v4688, 1
        %v4712 = vrot.slane %v4689, 1
        %v4713 = vsel %vm1836, %v4711, %v4712
        %v4714 = vrot.slane %v4690, 1
        %v4715 = vsel %vm1836, %v4712, %v4714
        %v4716 = vrot.slane %v4691, 1
        %v4717 = vrot.slane %v4692, 1
        %v4718 = vsel %vm1836, %v4716, %v4717
        %v4719 = vrot.slane %v4693, 1
        %v4720 = vsel %vm1836, %v4717, %v4719
        %v4721 = vrot.slane %v4694, 1
        %v4722 = vrot.slane %v4695, 1
        %v4723 = vsel %vm1836, %v4721, %v4722
        %v4724 = vrot.slane %v4696, 1
        %v4725 = vsel %vm1836, %v4722, %v4724
        %v4733 = vmax.f32 %v4686, %v4710
        %v4734 = vmax.f32 %v4688, %v4713
        %v4735 = vmax.f32 %v4689, %v4715
        %v4736 = vmax.f32 %v4691, %v4718
        %v4737 = vmax.f32 %v4692, %v4720
        %v4738 = vmax.f32 %v4694, %v4723
        %v4739 = vmax.f32 %v4695, %v4725
        %v4740 = vrot.slane %v4686, 2
        %v4741 = vrot.slane %v4687, 2
        %v4742 = vsel %vm4648, %v4740, %v4741
        %v4743 = vrot.slane %v4688, 2
        %v4744 = vrot.slane %v4689, 2
        %v4745 = vsel %vm4648, %v4743, %v4744
        %v4746 = vrot.slane %v4690, 2
        %v4747 = vsel %vm4648, %v4744, %v4746
        %v4748 = vrot.slane %v4691, 2
        %v4749 = vrot.slane %v4692, 2
        %v4750 = vsel %vm4648, %v4748, %v4749
        %v4751 = vrot.slane %v4693, 2
        %v4752 = vsel %vm4648, %v4749, %v4751
        %v4753 = vrot.slane %v4694, 2
        %v4754 = vrot.slane %v4695, 2
        %v4755 = vsel %vm4648, %v4753, %v4754
        %v4756 = vrot.slane %v4696, 2
        %v4757 = vsel %vm4648, %v4754, %v4756
        %v4765 = vmax.f32 %v4733, %v4742
        %v4766 = vmax.f32 %v4734, %v4745
        %v4767 = vmax.f32 %v4735, %v4747
        %v4768 = vmax.f32 %v4736, %v4750
        %v4769 = vmax.f32 %v4737, %v4752
        %v4770 = vmax.f32 %v4738, %v4755
        %v4771 = vmax.f32 %v4739, %v4757
        %v4773 = vrot.slane %v4765, 2
        %4774 = vrot.lane.b32.xlu0 %v4773, 64
        %v4775 = vpop.permute.xlu0 %4774
        %v4777 = vrot.slane %v4765, 4
        %v4779 = vrot.slane %v4765, 6
        %4780 = vrot.lane.b32.xlu0 %v4779, 64
        %v4781 = vpop.permute.xlu0 %4780
        %v4784 = vrot.slane %v4766, 2
        %v4786 = vrot.slane %v4766, 4
        %4787 = vrot.lane.b32.xlu0 %v4786, 64
        %v4788 = vpop.permute.xlu0 %4787
        %v4790 = vrot.slane %v4766, 6
        %4793 = vrot.lane.b32.xlu0 %v4767, 64
        %v4794 = vpop.permute.xlu0 %4793
        %v4797 = vrot.slane %v4768, 4
        %v4799 = vrot.slane %v4768, 6
        %4800 = vrot.lane.b32.xlu0 %v4799, 64
        %v4801 = vpop.permute.xlu0 %4800
        %v4804 = vrot.slane %v4769, 2
        %4805 = vrot.lane.b32.xlu0 %v4804, 64
        %v4806 = vpop.permute.xlu0 %4805
        %v4809 = vrot.slane %v4770, 6
        %4812 = vrot.lane.b32.xlu0 %v4771, 64
        %v4813 = vpop.permute.xlu0 %4812
        %v4815 = vrot.slane %v4771, 2
        %v4817 = vrot.slane %v4771, 4
        %4818 = vrot.lane.b32.xlu0 %v4817, 64
        %v4819 = vpop.permute.xlu0 %4818
        %v4821 = vsel %vm2313, %v4765, %v4775
        %v4822 = vsel %vm2313, %v4777, %v4781
        %v4823 = vsel %vm2313, %v4784, %v4788
        %v4824 = vsel %vm2313, %v4790, %v4794
        %v4825 = vsel %vm2313, %v4797, %v4801
        %v4826 = vsel %vm2313, %v4769, %v4806
        %v4827 = vsel %vm2313, %v4809, %v4813
        %v4828 = vsel %vm2313, %v4815, %v4819
        %v4829 = vld [vmem:[%s5] sm:$0xff]
        %v4830 = vld [vmem:[%s5 + $0x8] sm:$0xff]
        %v4831 = vld [vmem:[%s5 + $0x10] sm:$0xff]
        %v4832 = vld [vmem:[%s5 + $0x18] sm:$0xff]
        %v4833 = vld [vmem:[%s5 + $0x20] sm:$0xff]
        %v4834 = vld [vmem:[%s5 + $0x28] sm:$0xff]
        %v4835 = vld [vmem:[%s5 + $0x30] sm:$0xff]
        %v4836 = vld [vmem:[%s5 + $0x38] sm:$0xff]
        %v4837 = vld [vmem:[%s5 + $0x40] sm:$0xff]
        %v4838 = vld [vmem:[%s5 + $0x48] sm:$0xff]
        %v4839 = vld [vmem:[%s5 + $0x50] sm:$0xff]
        %v4840 = vld [vmem:[%s5 + $0x58] sm:$0xff]
        %v4841 = vld [vmem:[%s5 + $0x60] sm:$0xff]
        %v4842 = vld [vmem:[%s5 + $0x68] sm:$0xff]
        %v4843 = vld [vmem:[%s5 + $0x70] sm:$0xff]
        %v4844 = vld [vmem:[%s5 + $0x78] sm:$0xff]
        %v4845 = vld [vmem:[%s5 + $0x80] sm:$0xff]
        %v4846 = vld [vmem:[%s5 + $0x88] sm:$0xff]
        %v4847 = vld [vmem:[%s5 + $0x90] sm:$0xff]
        %v4848 = vld [vmem:[%s5 + $0x98] sm:$0xff]
        %v4849 = vld [vmem:[%s5 + $0xa0] sm:$0xff]
        %v4850 = vld [vmem:[%s5 + $0xa8] sm:$0xff]
        %v4851 = vld [vmem:[%s5 + $0xb0] sm:$0xff]
        %v4852 = vld [vmem:[%s5 + $0xb8] sm:$0xff]
        %v4853 = vld [vmem:[%s5 + $0xc0] sm:$0xff]
        %v4854 = vld [vmem:[%s5 + $0xc8] sm:$0xff]
        %v4855 = vld [vmem:[%s5 + $0xd0] sm:$0xff]
        %v4856 = vld [vmem:[%s5 + $0xd8] sm:$0xff]
        %v4857 = vld [vmem:[%s5 + $0xe0] sm:$0xff]
        %v4858 = vld [vmem:[%s5 + $0xe8] sm:$0xff]
        %v4859 = vld [vmem:[%s5 + $0xf0] sm:$0xff]
        %v4860 = vld [vmem:[%s5 + $0xf8] sm:$0xff]
        %v4861 = vld [vmem:[%s5 + $0x100] sm:$0xff]
        %v4862 = vld [vmem:[%s5 + $0x108] sm:$0xff]
        %v4863 = vld [vmem:[%s5 + $0x110] sm:$0xff]
        %v4864 = vld [vmem:[%s5 + $0x118] sm:$0xff]
        %v4865 = vld [vmem:[%s5 + $0x120] sm:$0xff]
        %v4866 = vld [vmem:[%s5 + $0x128] sm:$0xff]
        %v4867 = vld [vmem:[%s5 + $0x130] sm:$0xff]
        %v4868 = vld [vmem:[%s5 + $0x138] sm:$0xff]
        %v4869 = vld [vmem:[%s5 + $0x140] sm:$0xff]
        %v4870 = vld [vmem:[%s5 + $0x148] sm:$0xff]
        %v4871 = vld [vmem:[%s5 + $0x150] sm:$0xff]
        %v4872 = vld [vmem:[%s5 + $0x158] sm:$0xff]
        %v4873 = vld [vmem:[%s5 + $0x160] sm:$0xff]
        %v4874 = vld [vmem:[%s5 + $0x168] sm:$0xff]
        %v4875 = vld [vmem:[%s5 + $0x170] sm:$0xff]
        %v4876 = vld [vmem:[%s5 + $0x178] sm:$0xff]
        %v4877 = vld [vmem:[%s5 + $0x180] sm:$0xff]
        %v4878 = vld [vmem:[%s5 + $0x188] sm:$0xff]
        %v4879 = vld [vmem:[%s5 + $0x190] sm:$0xff]
        %v4880 = vld [vmem:[%s5 + $0x198] sm:$0xff]
        %v4881 = vld [vmem:[%s5 + $0x1a0] sm:$0xff]
        %v4882 = vld [vmem:[%s5 + $0x1a8] sm:$0xff]
        %v4883 = vld [vmem:[%s5 + $0x1b0] sm:$0xff]
        %v4884 = vld [vmem:[%s5 + $0x1b8] sm:$0xff]
        %v4885 = vld [vmem:[%s5 + $0x1c0] sm:$0xff]
        %v4886 = vld [vmem:[%s5 + $0x1c8] sm:$0xff]
        %v4887 = vld [vmem:[%s5 + $0x1d0] sm:$0xff]
        %v4888 = vld [vmem:[%s5 + $0x1d8] sm:$0xff]
        %v4889 = vld [vmem:[%s5 + $0x1e0] sm:$0xff]
        %v4890 = vld [vmem:[%s5 + $0x1e8] sm:$0xff]
        %v4891 = vld [vmem:[%s5 + $0x1f0] sm:$0xff]
        %v4892 = vld [vmem:[%s5 + $0x1f8] sm:$0xff]
        %v4893 = vld [vmem:[%s5 + $0x200] sm:$0xff]
        %v4894 = vld [vmem:[%s5 + $0x208] sm:$0xff]
        %v4895 = vld [vmem:[%s5 + $0x210] sm:$0xff]
        %v4896 = vld [vmem:[%s5 + $0x218] sm:$0xff]
        %v4897 = vld [vmem:[%s5 + $0x220] sm:$0xff]
        %v4898 = vld [vmem:[%s5 + $0x228] sm:$0xff]
        %v4899 = vld [vmem:[%s5 + $0x230] sm:$0xff]
        %v4900 = vld [vmem:[%s5 + $0x238] sm:$0xff]
        %v4901 = vld [vmem:[%s5 + $0x240] sm:$0xff]
        %v4902 = vld [vmem:[%s5 + $0x248] sm:$0xff]
        %v4903 = vld [vmem:[%s5 + $0x250] sm:$0xff]
        %v4904 = vld [vmem:[%s5 + $0x258] sm:$0xff]
        %v4905 = vld [vmem:[%s5 + $0x260] sm:$0xff]
        %v4906 = vld [vmem:[%s5 + $0x268] sm:$0xff]
        %v4907 = vld [vmem:[%s5 + $0x270] sm:$0xff]
        %v4908 = vld [vmem:[%s5 + $0x278] sm:$0xff]
        %v4909 = vld [vmem:[%s5 + $0x280] sm:$0xff]
        %v4910 = vld [vmem:[%s5 + $0x288] sm:$0xff]
        %v4911 = vld [vmem:[%s5 + $0x290] sm:$0xff]
        %v4912 = vld [vmem:[%s5 + $0x298] sm:$0xff]
        %v4913 = vld [vmem:[%s5 + $0x2a0] sm:$0xff]
        %v4914 = vld [vmem:[%s5 + $0x2a8] sm:$0xff]
        %v4915 = vld [vmem:[%s5 + $0x2b0] sm:$0xff]
        %v4916 = vld [vmem:[%s5 + $0x2b8] sm:$0xff]
        %v4917 = vld [vmem:[%s5 + $0x2c0] sm:$0xff]
        %v4918 = vld [vmem:[%s5 + $0x2c8] sm:$0xff]
        %v4919 = vld [vmem:[%s5 + $0x2d0] sm:$0xff]
        %v4920 = vld [vmem:[%s5 + $0x2d8] sm:$0xff]
        %v4921 = vld [vmem:[%s5 + $0x2e0] sm:$0xff]
        %v4922 = vld [vmem:[%s5 + $0x2e8] sm:$0xff]
        %v4923 = vld [vmem:[%s5 + $0x2f0] sm:$0xff]
        %v4924 = vld [vmem:[%s5 + $0x2f8] sm:$0xff]
        %v4925 = vld [vmem:[%s5 + $0x300] sm:$0xff]
        %v4926 = vld [vmem:[%s5 + $0x308] sm:$0xff]
        %v4927 = vld [vmem:[%s5 + $0x310] sm:$0xff]
        %v4928 = vld [vmem:[%s5 + $0x318] sm:$0xff]
        %v4929 = vld [vmem:[%s5 + $0x320] sm:$0xff]
        %v4930 = vld [vmem:[%s5 + $0x328] sm:$0xff]
        %v4931 = vld [vmem:[%s5 + $0x330] sm:$0xff]
        %v4932 = vld [vmem:[%s5 + $0x338] sm:$0xff]
        %v4933 = vld [vmem:[%s5 + $0x340] sm:$0xff]
        %v4934 = vld [vmem:[%s5 + $0x348] sm:$0xff]
        %v4935 = vld [vmem:[%s5 + $0x350] sm:$0xff]
        %v4936 = vld [vmem:[%s5 + $0x358] sm:$0xff]
        %v4937 = vld [vmem:[%s5 + $0x360] sm:$0xff]
        %v4938 = vld [vmem:[%s5 + $0x368] sm:$0xff]
        %v4939 = vld [vmem:[%s5 + $0x370] sm:$0xff]
        %v4940 = vld [vmem:[%s5 + $0x378] sm:$0xff]
        %v4941 = vld [vmem:[%s5 + $0x380] sm:$0xff]
        %v4942 = vld [vmem:[%s5 + $0x388] sm:$0xff]
        %v4943 = vld [vmem:[%s5 + $0x390] sm:$0xff]
        %v4944 = vld [vmem:[%s5 + $0x398] sm:$0xff]
        %v4945 = vld [vmem:[%s5 + $0x3a0] sm:$0xff]
        %v4946 = vld [vmem:[%s5 + $0x3a8] sm:$0xff]
        %v4947 = vld [vmem:[%s5 + $0x3b0] sm:$0xff]
        %v4948 = vld [vmem:[%s5 + $0x3b8] sm:$0xff]
        %v4949 = vld [vmem:[%s5 + $0x3c0] sm:$0xff]
        %v4950 = vld [vmem:[%s5 + $0x3c8] sm:$0xff]
        %v4951 = vld [vmem:[%s5 + $0x3d0] sm:$0xff]
        %v4952 = vld [vmem:[%s5 + $0x3d8] sm:$0xff]
        %v4953 = vld [vmem:[%s5 + $0x3e0] sm:$0xff]
        %v4954 = vld [vmem:[%s5 + $0x3e8] sm:$0xff]
        %v4955 = vld [vmem:[%s5 + $0x3f0] sm:$0xff]
        %v4956 = vld [vmem:[%s5 + $0x3f8] sm:$0xff]
        %v4957 = vld [vmem:[%s5 + $0x400] sm:$0xff]
        %v4958 = vld [vmem:[%s5 + $0x408] sm:$0xff]
        %v4959 = vld [vmem:[%s5 + $0x410] sm:$0xff]
        %v4960 = vld [vmem:[%s5 + $0x418] sm:$0xff]
        %v4961 = vld [vmem:[%s5 + $0x420] sm:$0xff]
        %v4962 = vld [vmem:[%s5 + $0x428] sm:$0xff]
        %v4963 = vld [vmem:[%s5 + $0x430] sm:$0xff]
        %v4964 = vld [vmem:[%s5 + $0x438] sm:$0xff]
        %v4965 = vld [vmem:[%s5 + $0x440] sm:$0xff]
        %v4966 = vld [vmem:[%s5 + $0x448] sm:$0xff]
        %v4967 = vld [vmem:[%s5 + $0x450] sm:$0xff]
        %v4968 = vld [vmem:[%s5 + $0x458] sm:$0xff]
        %v4969 = vld [vmem:[%s5 + $0x460] sm:$0xff]
        %v4970 = vld [vmem:[%s5 + $0x468] sm:$0xff]
        %v4971 = vld [vmem:[%s5 + $0x470] sm:$0xff]
        %v4972 = vld [vmem:[%s5 + $0x478] sm:$0xff]
        %v4973 = vld [vmem:[%s5 + $0x480] sm:$0xff]
        %v4974 = vld [vmem:[%s5 + $0x488] sm:$0xff]
        %v4975 = vld [vmem:[%s5 + $0x490] sm:$0xff]
        %v4976 = vld [vmem:[%s5 + $0x498] sm:$0xff]
        %v4977 = vld [vmem:[%s5 + $0x4a0] sm:$0xff]
        %v4978 = vld [vmem:[%s5 + $0x4a8] sm:$0xff]
        %v4979 = vld [vmem:[%s5 + $0x4b0] sm:$0xff]
        %v4980 = vld [vmem:[%s5 + $0x4b8] sm:$0xff]
        %v4981 = vld [vmem:[%s5 + $0x4c0] sm:$0xff]
        %v4982 = vld [vmem:[%s5 + $0x4c8] sm:$0xff]
        %v4983 = vld [vmem:[%s5 + $0x4d0] sm:$0xff]
        %v4984 = vld [vmem:[%s5 + $0x4d8] sm:$0xff]
        %v4985 = vld [vmem:[%s5 + $0x4e0] sm:$0xff]
        %v4986 = vld [vmem:[%s5 + $0x4e8] sm:$0xff]
        %v4987 = vld [vmem:[%s5 + $0x4f0] sm:$0xff]
        %v4988 = vld [vmem:[%s5 + $0x4f8] sm:$0xff]
        %v4989 = vld [vmem:[%s5 + $0x500] sm:$0xff]
        %v4990 = vld [vmem:[%s5 + $0x508] sm:$0xff]
        %v4991 = vld [vmem:[%s5 + $0x510] sm:$0xff]
        %v4992 = vld [vmem:[%s5 + $0x518] sm:$0xff]
        %v4993 = vld [vmem:[%s5 + $0x520] sm:$0xff]
        %v4994 = vld [vmem:[%s5 + $0x528] sm:$0xff]
        %v4995 = vld [vmem:[%s5 + $0x530] sm:$0xff]
        %v4996 = vld [vmem:[%s5 + $0x538] sm:$0xff]
        %v4997 = vld [vmem:[%s5 + $0x540] sm:$0xff]
        %v4998 = vld [vmem:[%s5 + $0x548] sm:$0xff]
        %v4999 = vld [vmem:[%s5 + $0x550] sm:$0xff]
        %v5000 = vld [vmem:[%s5 + $0x558] sm:$0xff]
        %v5001 = vld [vmem:[%s5 + $0x560] sm:$0xff]
        %v5002 = vld [vmem:[%s5 + $0x568] sm:$0xff]
        %v5003 = vld [vmem:[%s5 + $0x570] sm:$0xff]
        %v5004 = vld [vmem:[%s5 + $0x578] sm:$0xff]
        %v5005 = vld [vmem:[%s5 + $0x580] sm:$0xff]
        %v5006 = vld [vmem:[%s5 + $0x588] sm:$0xff]
        %v5007 = vld [vmem:[%s5 + $0x590] sm:$0xff]
        %v5008 = vld [vmem:[%s5 + $0x598] sm:$0xff]
        %v5009 = vld [vmem:[%s5 + $0x5a0] sm:$0xff]
        %v5010 = vld [vmem:[%s5 + $0x5a8] sm:$0xff]
        %v5011 = vld [vmem:[%s5 + $0x5b0] sm:$0xff]
        %v5012 = vld [vmem:[%s5 + $0x5b8] sm:$0xff]
        %v5013 = vld [vmem:[%s5 + $0x5c0] sm:$0xff]
        %v5014 = vld [vmem:[%s5 + $0x5c8] sm:$0xff]
        %v5015 = vld [vmem:[%s5 + $0x5d0] sm:$0xff]
        %v5016 = vld [vmem:[%s5 + $0x5d8] sm:$0xff]
        %v5017 = vld [vmem:[%s5 + $0x5e0] sm:$0xff]
        %v5018 = vld [vmem:[%s5 + $0x5e8] sm:$0xff]
        %v5019 = vld [vmem:[%s5 + $0x5f0] sm:$0xff]
        %v5020 = vld [vmem:[%s5 + $0x5f8] sm:$0xff]
        %v5021 = vld [vmem:[%s5 + $0x600] sm:$0xff]
        %v5022 = vld [vmem:[%s5 + $0x608] sm:$0xff]
        %v5023 = vld [vmem:[%s5 + $0x610] sm:$0xff]
        %v5024 = vld [vmem:[%s5 + $0x618] sm:$0xff]
        %v5025 = vld [vmem:[%s5 + $0x620] sm:$0xff]
        %v5026 = vld [vmem:[%s5 + $0x628] sm:$0xff]
        %v5027 = vld [vmem:[%s5 + $0x630] sm:$0xff]
        %v5028 = vld [vmem:[%s5 + $0x638] sm:$0xff]
        %v5029 = vld [vmem:[%s5 + $0x640] sm:$0xff]
        %v5030 = vld [vmem:[%s5 + $0x648] sm:$0xff]
        %v5031 = vld [vmem:[%s5 + $0x650] sm:$0xff]
        %v5032 = vld [vmem:[%s5 + $0x658] sm:$0xff]
        %v5033 = vld [vmem:[%s5 + $0x660] sm:$0xff]
        %v5034 = vld [vmem:[%s5 + $0x668] sm:$0xff]
        %v5035 = vld [vmem:[%s5 + $0x670] sm:$0xff]
        %v5036 = vld [vmem:[%s5 + $0x678] sm:$0xff]
        %v5037 = vld [vmem:[%s5 + $0x680] sm:$0xff]
        %v5038 = vld [vmem:[%s5 + $0x688] sm:$0xff]
        %v5039 = vld [vmem:[%s5 + $0x690] sm:$0xff]
        %v5040 = vld [vmem:[%s5 + $0x698] sm:$0xff]
        %v5041 = vld [vmem:[%s5 + $0x6a0] sm:$0xff]
        %v5042 = vld [vmem:[%s5 + $0x6a8] sm:$0xff]
        %v5043 = vld [vmem:[%s5 + $0x6b0] sm:$0xff]
        %v5044 = vld [vmem:[%s5 + $0x6b8] sm:$0xff]
        %v5045 = vld [vmem:[%s5 + $0x6c0] sm:$0xff]
        %v5046 = vld [vmem:[%s5 + $0x6c8] sm:$0xff]
        %v5047 = vld [vmem:[%s5 + $0x6d0] sm:$0xff]
        %v5048 = vld [vmem:[%s5 + $0x6d8] sm:$0xff]
        %v5049 = vld [vmem:[%s5 + $0x6e0] sm:$0xff]
        %v5050 = vld [vmem:[%s5 + $0x6e8] sm:$0xff]
        %v5051 = vld [vmem:[%s5 + $0x6f0] sm:$0xff]
        %v5052 = vld [vmem:[%s5 + $0x6f8] sm:$0xff]
        %v5053 = vld [vmem:[%s5 + $0x700] sm:$0xff]
        %v5054 = vld [vmem:[%s5 + $0x708] sm:$0xff]
        %v5055 = vld [vmem:[%s5 + $0x710] sm:$0xff]
        %v5056 = vld [vmem:[%s5 + $0x718] sm:$0xff]
        %v5057 = vld [vmem:[%s5 + $0x720] sm:$0xff]
        %v5058 = vld [vmem:[%s5 + $0x728] sm:$0xff]
        %v5059 = vld [vmem:[%s5 + $0x730] sm:$0xff]
        %v5060 = vld [vmem:[%s5 + $0x738] sm:$0xff]
        %v5061 = vld [vmem:[%s5 + $0x740] sm:$0xff]
        %v5062 = vld [vmem:[%s5 + $0x748] sm:$0xff]
        %v5063 = vld [vmem:[%s5 + $0x750] sm:$0xff]
        %v5064 = vld [vmem:[%s5 + $0x758] sm:$0xff]
        %v5065 = vld [vmem:[%s5 + $0x760] sm:$0xff]
        %v5066 = vld [vmem:[%s5 + $0x768] sm:$0xff]
        %v5067 = vld [vmem:[%s5 + $0x770] sm:$0xff]
        %v5068 = vld [vmem:[%s5 + $0x778] sm:$0xff]
        %v5069 = vld [vmem:[%s5 + $0x780] sm:$0xff]
        %v5070 = vld [vmem:[%s5 + $0x788] sm:$0xff]
        %v5071 = vld [vmem:[%s5 + $0x790] sm:$0xff]
        %v5072 = vld [vmem:[%s5 + $0x798] sm:$0xff]
        %v5073 = vld [vmem:[%s5 + $0x7a0] sm:$0xff]
        %v5074 = vld [vmem:[%s5 + $0x7a8] sm:$0xff]
        %v5075 = vld [vmem:[%s5 + $0x7b0] sm:$0xff]
        %v5076 = vld [vmem:[%s5 + $0x7b8] sm:$0xff]
        %v5077 = vld [vmem:[%s5 + $0x7c0] sm:$0xff]
        %v5078 = vld [vmem:[%s5 + $0x7c8] sm:$0xff]
        %v5079 = vld [vmem:[%s5 + $0x7d0] sm:$0xff]
        %v5080 = vld [vmem:[%s5 + $0x7d8] sm:$0xff]
        %v5081 = vld [vmem:[%s5 + $0x7e0] sm:$0xff]
        %v5082 = vld [vmem:[%s5 + $0x7e8] sm:$0xff]
        %v5083 = vld [vmem:[%s5 + $0x7f0] sm:$0xff]
        %v5084 = vld [vmem:[%s5 + $0x7f8] sm:$0xff]
        %v5085 = vld [vmem:[%s5 + $0x800] sm:$0xff]
        %v5086 = vld [vmem:[%s5 + $0x808] sm:$0xff]
        %v5087 = vld [vmem:[%s5 + $0x810] sm:$0xff]
        %v5088 = vld [vmem:[%s5 + $0x818] sm:$0xff]
        %v5089 = vld [vmem:[%s5 + $0x820] sm:$0xff]
        %v5090 = vld [vmem:[%s5 + $0x828] sm:$0xff]
        %v5091 = vld [vmem:[%s5 + $0x830] sm:$0xff]
        %v5092 = vld [vmem:[%s5 + $0x838] sm:$0xff]
        %v5093 = vld [vmem:[%s5 + $0x840] sm:$0xff]
        %v5094 = vld [vmem:[%s5 + $0x848] sm:$0xff]
        %v5095 = vld [vmem:[%s5 + $0x850] sm:$0xff]
        %v5096 = vld [vmem:[%s5 + $0x858] sm:$0xff]
        %v5097 = vld [vmem:[%s5 + $0x860] sm:$0xff]
        %v5098 = vld [vmem:[%s5 + $0x868] sm:$0xff]
        %v5099 = vld [vmem:[%s5 + $0x870] sm:$0xff]
        %v5100 = vld [vmem:[%s5 + $0x878] sm:$0xff]
        %v5101 = vld [vmem:[%s5 + $0x880] sm:$0xff]
        %v5102 = vld [vmem:[%s5 + $0x888] sm:$0xff]
        %v5103 = vld [vmem:[%s5 + $0x890] sm:$0xff]
        %v5104 = vld [vmem:[%s5 + $0x898] sm:$0xff]
        %v5105 = vld [vmem:[%s5 + $0x8a0] sm:$0xff]
        %v5106 = vld [vmem:[%s5 + $0x8a8] sm:$0xff]
        %v5107 = vld [vmem:[%s5 + $0x8b0] sm:$0xff]
        %v5108 = vld [vmem:[%s5 + $0x8b8] sm:$0xff]
        %v5109 = vld [vmem:[%s5 + $0x8c0] sm:$0xff]
        %v5110 = vld [vmem:[%s5 + $0x8c8] sm:$0xff]
        %v5111 = vld [vmem:[%s5 + $0x8d0] sm:$0xff]
        %v5112 = vld [vmem:[%s5 + $0x8d8] sm:$0xff]
        %v5113 = vld [vmem:[%s5 + $0x8e0] sm:$0xff]
        %v5114 = vld [vmem:[%s5 + $0x8e8] sm:$0xff]
        %v5115 = vld [vmem:[%s5 + $0x8f0] sm:$0xff]
        %v5116 = vld [vmem:[%s5 + $0x8f8] sm:$0xff]
        %v5117 = vld [vmem:[%s5 + $0x900] sm:$0xff]
        %v5118 = vld [vmem:[%s5 + $0x908] sm:$0xff]
        %v5119 = vld [vmem:[%s5 + $0x910] sm:$0xff]
        %v5120 = vld [vmem:[%s5 + $0x918] sm:$0xff]
        %v5121 = vld [vmem:[%s5 + $0x920] sm:$0xff]
        %v5122 = vld [vmem:[%s5 + $0x928] sm:$0xff]
        %v5123 = vld [vmem:[%s5 + $0x930] sm:$0xff]
        %v5124 = vld [vmem:[%s5 + $0x938] sm:$0xff]
        %v5125 = vld [vmem:[%s5 + $0x940] sm:$0xff]
        %v5126 = vld [vmem:[%s5 + $0x948] sm:$0xff]
        %v5127 = vld [vmem:[%s5 + $0x950] sm:$0xff]
        %v5128 = vld [vmem:[%s5 + $0x958] sm:$0xff]
        %v5129 = vld [vmem:[%s5 + $0x960] sm:$0xff]
        %v5130 = vld [vmem:[%s5 + $0x968] sm:$0xff]
        %v5131 = vld [vmem:[%s5 + $0x970] sm:$0xff]
        %v5132 = vld [vmem:[%s5 + $0x978] sm:$0xff]
        %v5133 = vld [vmem:[%s5 + $0x980] sm:$0xff]
        %v5134 = vld [vmem:[%s5 + $0x988] sm:$0xff]
        %v5135 = vld [vmem:[%s5 + $0x990] sm:$0xff]
        %v5136 = vld [vmem:[%s5 + $0x998] sm:$0xff]
        %v5137 = vld [vmem:[%s5 + $0x9a0] sm:$0xff]
        %v5138 = vld [vmem:[%s5 + $0x9a8] sm:$0xff]
        %v5139 = vld [vmem:[%s5 + $0x9b0] sm:$0xff]
        %v5140 = vld [vmem:[%s5 + $0x9b8] sm:$0xff]
        %v5141 = vld [vmem:[%s5 + $0x9c0] sm:$0xff]
        %v5142 = vld [vmem:[%s5 + $0x9c8] sm:$0xff]
        %v5143 = vld [vmem:[%s5 + $0x9d0] sm:$0xff]
        %v5144 = vld [vmem:[%s5 + $0x9d8] sm:$0xff]
        %v5145 = vld [vmem:[%s5 + $0x9e0] sm:$0xff]
        %v5146 = vld [vmem:[%s5 + $0x9e8] sm:$0xff]
        %v5147 = vld [vmem:[%s5 + $0x9f0] sm:$0xff]
        %v5148 = vld [vmem:[%s5 + $0x9f8] sm:$0xff]
        %v5149 = vld [vmem:[%s5 + $0xa00] sm:$0xff]
        %v5150 = vld [vmem:[%s5 + $0xa08] sm:$0xff]
        %v5151 = vld [vmem:[%s5 + $0xa10] sm:$0xff]
        %v5152 = vld [vmem:[%s5 + $0xa18] sm:$0xff]
        %v5153 = vld [vmem:[%s5 + $0xa20] sm:$0xff]
        %v5154 = vld [vmem:[%s5 + $0xa28] sm:$0xff]
        %v5155 = vld [vmem:[%s5 + $0xa30] sm:$0xff]
        %v5156 = vld [vmem:[%s5 + $0xa38] sm:$0xff]
        %v5157 = vld [vmem:[%s5 + $0xa40] sm:$0xff]
        %v5158 = vld [vmem:[%s5 + $0xa48] sm:$0xff]
        %v5159 = vld [vmem:[%s5 + $0xa50] sm:$0xff]
        %v5160 = vld [vmem:[%s5 + $0xa58] sm:$0xff]
        %v5161 = vld [vmem:[%s5 + $0xa60] sm:$0xff]
        %v5162 = vld [vmem:[%s5 + $0xa68] sm:$0xff]
        %v5163 = vld [vmem:[%s5 + $0xa70] sm:$0xff]
        %v5164 = vld [vmem:[%s5 + $0xa78] sm:$0xff]
        %v5165 = vld [vmem:[%s5 + $0xa80] sm:$0xff]
        %v5166 = vld [vmem:[%s5 + $0xa88] sm:$0xff]
        %v5167 = vld [vmem:[%s5 + $0xa90] sm:$0xff]
        %v5168 = vld [vmem:[%s5 + $0xa98] sm:$0xff]
        %v5169 = vld [vmem:[%s5 + $0xaa0] sm:$0xff]
        %v5170 = vld [vmem:[%s5 + $0xaa8] sm:$0xff]
        %v5171 = vld [vmem:[%s5 + $0xab0] sm:$0xff]
        %v5172 = vld [vmem:[%s5 + $0xab8] sm:$0xff]
        %v5173 = vld [vmem:[%s5 + $0xac0] sm:$0xff]
        %v5174 = vld [vmem:[%s5 + $0xac8] sm:$0xff]
        %v5175 = vld [vmem:[%s5 + $0xad0] sm:$0xff]
        %v5176 = vld [vmem:[%s5 + $0xad8] sm:$0xff]
        %v5177 = vld [vmem:[%s5 + $0xae0] sm:$0xff]
        %v5178 = vld [vmem:[%s5 + $0xae8] sm:$0xff]
        %v5179 = vld [vmem:[%s5 + $0xaf0] sm:$0xff]
        %v5180 = vld [vmem:[%s5 + $0xaf8] sm:$0xff]
        %v5181 = vld [vmem:[%s5 + $0xb00] sm:$0xff]
        %v5182 = vld [vmem:[%s5 + $0xb08] sm:$0xff]
        %v5183 = vld [vmem:[%s5 + $0xb10] sm:$0xff]
        %v5184 = vld [vmem:[%s5 + $0xb18] sm:$0xff]
        %v5185 = vld [vmem:[%s5 + $0xb20] sm:$0xff]
        %v5186 = vld [vmem:[%s5 + $0xb28] sm:$0xff]
        %v5187 = vld [vmem:[%s5 + $0xb30] sm:$0xff]
        %v5188 = vld [vmem:[%s5 + $0xb38] sm:$0xff]
        %v5189 = vld [vmem:[%s5 + $0xb40] sm:$0xff]
        %v5190 = vld [vmem:[%s5 + $0xb48] sm:$0xff]
        %v5191 = vld [vmem:[%s5 + $0xb50] sm:$0xff]
        %v5192 = vld [vmem:[%s5 + $0xb58] sm:$0xff]
        %v5193 = vld [vmem:[%s5 + $0xb60] sm:$0xff]
        %v5194 = vld [vmem:[%s5 + $0xb68] sm:$0xff]
        %v5195 = vld [vmem:[%s5 + $0xb70] sm:$0xff]
        %v5196 = vld [vmem:[%s5 + $0xb78] sm:$0xff]
        %v5197 = vld [vmem:[%s5 + $0xb80] sm:$0xff]
        %v5198 = vld [vmem:[%s5 + $0xb88] sm:$0xff]
        %v5199 = vld [vmem:[%s5 + $0xb90] sm:$0xff]
        %v5200 = vld [vmem:[%s5 + $0xb98] sm:$0xff]
        %v5201 = vld [vmem:[%s5 + $0xba0] sm:$0xff]
        %v5202 = vld [vmem:[%s5 + $0xba8] sm:$0xff]
        %v5203 = vld [vmem:[%s5 + $0xbb0] sm:$0xff]
        %v5204 = vld [vmem:[%s5 + $0xbb8] sm:$0xff]
        %v5205 = vld [vmem:[%s5 + $0xbc0] sm:$0xff]
        %v5206 = vld [vmem:[%s5 + $0xbc8] sm:$0xff]
        %v5207 = vld [vmem:[%s5 + $0xbd0] sm:$0xff]
        %v5208 = vld [vmem:[%s5 + $0xbd8] sm:$0xff]
        %v5209 = vld [vmem:[%s5 + $0xbe0] sm:$0xff]
        %v5210 = vld [vmem:[%s5 + $0xbe8] sm:$0xff]
        %v5211 = vld [vmem:[%s5 + $0xbf0] sm:$0xff]
        %v5212 = vld [vmem:[%s5 + $0xbf8] sm:$0xff]
        %v5213 = vld [vmem:[%s6] sm:$0x7]
        %v5215 = vlaneseq
        %v5216 = vshrl.u32 %v5215, 7
        %v5217 = vsub.s32 0, %v5216
        %v5218 = vrot.slane %v5213, %v5217
        %v5219 = vlaneseq
        %v5220 = vshrl.u32 %v5219, 7
        %v5221 = vsub.s32 1, %v5220
        %v5222 = vrot.slane %v5213, %v5221
        %v5223 = vlaneseq
        %v5224 = vshrl.u32 %v5223, 7
        %v5225 = vsub.s32 2, %v5224
        %v5226 = vrot.slane %v5213, %v5225
        %5230 = vmatprep.subr.mxu0 %v4830
        %5231 = vmatpush1.msra.mxu0 %v4829
        %5232 = vmatprep.subr.mxu0 %v4833
        %5233 = vmatpush1.msra.mxu0 %v4832
        %5234 = vmatprep.subr.mxu0 %v4836
        %5235 = vmatpush1.msra.mxu0 %v4835
        %5236 = vmatprep.subr.mxu0 %v4839
        %5237 = vmatpush1.msra.mxu0 %v4838
        %5238 = vmatprep.subr.mxu0 %v4842
        %5239 = vmatpush1.msra.mxu0 %v4841
        %5240 = vmatprep.subr.mxu0 %v4845
        %5241 = vmatpush1.msra.mxu0 %v4844
        %5242 = vmatprep.subr.mxu0 %v4848
        %5243 = vmatpush1.msra.mxu0 %v4847
        %5244 = vmatprep.subr.mxu0 %v4851
        %5245 = vmatpush1.msra.mxu0 %v4850
        %5246 = vmatprep.subr.mxu0 %v4854
        %5247 = vmatpush1.msra.mxu0 %v4853
        %5248 = vmatprep.subr.mxu0 %v4857
        %5249 = vmatpush1.msra.mxu0 %v4856
        %5250 = vmatprep.subr.mxu0 %v4860
        %5251 = vmatpush1.msra.mxu0 %v4859
        %5252 = vmatprep.subr.mxu0 %v4863
        %5253 = vmatpush1.msra.mxu0 %v4862
        %5254 = vmatprep.subr.mxu0 %v4866
        %5255 = vmatpush1.msra.mxu0 %v4865
        %5256 = vmatprep.subr.mxu0 %v4869
        %5257 = vmatpush1.msra.mxu0 %v4868
        %5258 = vmatprep.subr.mxu0 %v4872
        %5259 = vmatpush1.msra.mxu0 %v4871
        %5260 = vmatprep.subr.mxu0 %v4875
        %5261 = vmatpush1.msra.mxu0 %v4874
        %5262 = vmatprep.subr.mxu0 %v4878
        %5263 = vmatpush1.msra.mxu0 %v4877
        %5264 = vmatprep.subr.mxu0 %v4881
        %5265 = vmatpush1.msra.mxu0 %v4880
        %5266 = vmatprep.subr.mxu0 %v4884
        %5267 = vmatpush1.msra.mxu0 %v4883
        %5268 = vmatprep.subr.mxu0 %v4887
        %5269 = vmatpush1.msra.mxu0 %v4886
        %5270 = vmatprep.subr.mxu0 %v4890
        %5271 = vmatpush1.msra.mxu0 %v4889
        %5272 = vmatprep.subr.mxu0 %v4893
        %5273 = vmatpush1.msra.mxu0 %v4892
        %5274 = vmatprep.subr.mxu0 %v4896
        %5275 = vmatpush1.msra.mxu0 %v4895
        %5276 = vmatprep.subr.mxu0 %v4899
        %5277 = vmatpush1.msra.mxu0 %v4898
        %5278 = vmatprep.subr.mxu0 %v4902
        %5279 = vmatpush1.msra.mxu0 %v4901
        %5280 = vmatprep.subr.mxu0 %v4905
        %5281 = vmatpush1.msra.mxu0 %v4904
        %5282 = vmatprep.subr.mxu0 %v4908
        %5283 = vmatpush1.msra.mxu0 %v4907
        %5284 = vmatprep.subr.mxu0 %v4911
        %5285 = vmatpush1.msra.mxu0 %v4910
        %5286 = vmatprep.subr.mxu0 %v4914
        %5287 = vmatpush1.msra.mxu0 %v4913
        %5288 = vmatprep.subr.mxu0 %v4917
        %5289 = vmatpush1.msra.mxu0 %v4916
        %5290 = vmatprep.subr.mxu0 %v4920
        %5291 = vmatpush1.msra.mxu0 %v4919
        %5292 = vmatprep.subr.mxu0 %v4923
        %5293 = vmatpush1.msra.mxu0 %v4922
        %5294 = vmatprep.mubr.f32.mxu0 %v4822
        %5295 = vmatmul.mubr.f32.gmra.mrb[0].mxu0 %v4821
        %v5296 = vpop.f32.mrb[0].mxu0
        %v5297 = vadd.f32 %v5218, %v5296
        %v5298 = vpop.f32.mrb[0].mxu0
        %v5299 = vadd.f32 %v5222, %v5298
        %5300 = vdwg.mxu0
        %5301 = vmatprep.subr.mxu0 %v4926
        %5302 = vmatpush1.msra.mxu0 %v4925
        %5303 = vmatprep.subr.mxu0 %v4929
        %5304 = vmatpush1.msra.mxu0 %v4928
        %5305 = vmatprep.subr.mxu0 %v4932
        %5306 = vmatpush1.msra.mxu0 %v4931
        %5307 = vmatprep.subr.mxu0 %v4935
        %5308 = vmatpush1.msra.mxu0 %v4934
        %5309 = vmatprep.subr.mxu0 %v4938
        %5310 = vmatpush1.msra.mxu0 %v4937
        %5311 = vmatprep.subr.mxu0 %v4941
        %5312 = vmatpush1.msra.mxu0 %v4940
        %5313 = vmatprep.subr.mxu0 %v4944
        %5314 = vmatpush1.msra.mxu0 %v4943
        %5315 = vmatprep.subr.mxu0 %v4947
        %5316 = vmatpush1.msra.mxu0 %v4946
        %5317 = vmatprep.subr.mxu0 %v4950
        %5318 = vmatpush1.msra.mxu0 %v4949
        %5319 = vmatprep.subr.mxu0 %v4953
        %5320 = vmatpush1.msra.mxu0 %v4952
        %5321 = vmatprep.subr.mxu0 %v4956
        %5322 = vmatpush1.msra.mxu0 %v4955
        %5323 = vmatprep.subr.mxu0 %v4959
        %5324 = vmatpush1.msra.mxu0 %v4958
        %5325 = vmatprep.subr.mxu0 %v4962
        %5326 = vmatpush1.msra.mxu0 %v4961
        %5327 = vmatprep.subr.mxu0 %v4965
        %5328 = vmatpush1.msra.mxu0 %v4964
        %5329 = vmatprep.subr.mxu0 %v4968
        %5330 = vmatpush1.msra.mxu0 %v4967
        %5331 = vmatprep.subr.mxu0 %v4971
        %5332 = vmatpush1.msra.mxu0 %v4970
        %5333 = vmatprep.subr.mxu0 %v4974
        %5334 = vmatpush1.msra.mxu0 %v4973
        %5335 = vmatprep.subr.mxu0 %v4977
        %5336 = vmatpush1.msra.mxu0 %v4976
        %5337 = vmatprep.subr.mxu0 %v4980
        %5338 = vmatpush1.msra.mxu0 %v4979
        %5339 = vmatprep.subr.mxu0 %v4983
        %5340 = vmatpush1.msra.mxu0 %v4982
        %5341 = vmatprep.subr.mxu0 %v4986
        %5342 = vmatpush1.msra.mxu0 %v4985
        %5343 = vmatprep.subr.mxu0 %v4989
        %5344 = vmatpush1.msra.mxu0 %v4988
        %5345 = vmatprep.subr.mxu0 %v4992
        %5346 = vmatpush1.msra.mxu0 %v4991
        %5347 = vmatprep.subr.mxu0 %v4995
        %5348 = vmatpush1.msra.mxu0 %v4994
        %5349 = vmatprep.subr.mxu0 %v4998
        %5350 = vmatpush1.msra.mxu0 %v4997
        %5351 = vmatprep.subr.mxu0 %v5001
        %5352 = vmatpush1.msra.mxu0 %v5000
        %5353 = vmatprep.subr.mxu0 %v5004
        %5354 = vmatpush1.msra.mxu0 %v5003
        %5355 = vmatprep.subr.mxu0 %v5007
        %5356 = vmatpush1.msra.mxu0 %v5006
        %5357 = vmatprep.subr.mxu0 %v5010
        %5358 = vmatpush1.msra.mxu0 %v5009
        %5359 = vmatprep.subr.mxu0 %v5013
        %5360 = vmatpush1.msra.mxu0 %v5012
        %5361 = vmatprep.subr.mxu0 %v5016
        %5362 = vmatpush1.msra.mxu0 %v5015
        %5363 = vmatprep.subr.mxu0 %v5019
        %5364 = vmatpush1.msra.mxu0 %v5018
        %5365 = vmatprep.mubr.f32.mxu0 %v4824
        %5366 = vmatmul.mubr.f32.gmra.mrb[0].mxu0 %v4823
        %v5367 = vpop.f32.mrb[0].mxu0
        %v5368 = vadd.f32 %v5297, %v5367
        %v5369 = vpop.f32.mrb[0].mxu0
        %v5370 = vadd.f32 %v5299, %v5369
        %5371 = vdwg.mxu0
        %5372 = vmatprep.subr.mxu0 %v5022
        %5373 = vmatpush1.msra.mxu0 %v5021
        %5374 = vmatprep.subr.mxu0 %v5025
        %5375 = vmatpush1.msra.mxu0 %v5024
        %5376 = vmatprep.subr.mxu0 %v5028
        %5377 = vmatpush1.msra.mxu0 %v5027
        %5378 = vmatprep.subr.mxu0 %v5031
        %5379 = vmatpush1.msra.mxu0 %v5030
        %5380 = vmatprep.subr.mxu0 %v5034
        %5381 = vmatpush1.msra.mxu0 %v5033
        %5382 = vmatprep.subr.mxu0 %v5037
        %5383 = vmatpush1.msra.mxu0 %v5036
        %5384 = vmatprep.subr.mxu0 %v5040
        %5385 = vmatpush1.msra.mxu0 %v5039
        %5386 = vmatprep.subr.mxu0 %v5043
        %5387 = vmatpush1.msra.mxu0 %v5042
        %5388 = vmatprep.subr.mxu0 %v5046
        %5389 = vmatpush1.msra.mxu0 %v5045
        %5390 = vmatprep.subr.mxu0 %v5049
        %5391 = vmatpush1.msra.mxu0 %v5048
        %5392 = vmatprep.subr.mxu0 %v5052
        %5393 = vmatpush1.msra.mxu0 %v5051
        %5394 = vmatprep.subr.mxu0 %v5055
        %5395 = vmatpush1.msra.mxu0 %v5054
        %5396 = vmatprep.subr.mxu0 %v5058
        %5397 = vmatpush1.msra.mxu0 %v5057
        %5398 = vmatprep.subr.mxu0 %v5061
        %5399 = vmatpush1.msra.mxu0 %v5060
        %5400 = vmatprep.subr.mxu0 %v5064
        %5401 = vmatpush1.msra.mxu0 %v5063
        %5402 = vmatprep.subr.mxu0 %v5067
        %5403 = vmatpush1.msra.mxu0 %v5066
        %5404 = vmatprep.subr.mxu0 %v5070
        %5405 = vmatpush1.msra.mxu0 %v5069
        %5406 = vmatprep.subr.mxu0 %v5073
        %5407 = vmatpush1.msra.mxu0 %v5072
        %5408 = vmatprep.subr.mxu0 %v5076
        %5409 = vmatpush1.msra.mxu0 %v5075
        %5410 = vmatprep.subr.mxu0 %v5079
        %5411 = vmatpush1.msra.mxu0 %v5078
        %5412 = vmatprep.subr.mxu0 %v5082
        %5413 = vmatpush1.msra.mxu0 %v5081
        %5414 = vmatprep.subr.mxu0 %v5085
        %5415 = vmatpush1.msra.mxu0 %v5084
        %5416 = vmatprep.subr.mxu0 %v5088
        %5417 = vmatpush1.msra.mxu0 %v5087
        %5418 = vmatprep.subr.mxu0 %v5091
        %5419 = vmatpush1.msra.mxu0 %v5090
        %5420 = vmatprep.subr.mxu0 %v5094
        %5421 = vmatpush1.msra.mxu0 %v5093
        %5422 = vmatprep.subr.mxu0 %v5097
        %5423 = vmatpush1.msra.mxu0 %v5096
        %5424 = vmatprep.subr.mxu0 %v5100
        %5425 = vmatpush1.msra.mxu0 %v5099
        %5426 = vmatprep.subr.mxu0 %v5103
        %5427 = vmatpush1.msra.mxu0 %v5102
        %5428 = vmatprep.subr.mxu0 %v5106
        %5429 = vmatpush1.msra.mxu0 %v5105
        %5430 = vmatprep.subr.mxu0 %v5109
        %5431 = vmatpush1.msra.mxu0 %v5108
        %5432 = vmatprep.subr.mxu0 %v5112
        %5433 = vmatpush1.msra.mxu0 %v5111
        %5434 = vmatprep.subr.mxu0 %v5115
        %5435 = vmatpush1.msra.mxu0 %v5114
        %5436 = vmatprep.mubr.f32.mxu0 %v4826
        %5437 = vmatmul.mubr.f32.gmra.mrb[0].mxu0 %v4825
        %v5438 = vpop.f32.mrb[0].mxu0
        %v5439 = vadd.f32 %v5368, %v5438
        %v5440 = vpop.f32.mrb[0].mxu0
        %v5441 = vadd.f32 %v5370, %v5440
        %5442 = vdwg.mxu0
        %5443 = vmatprep.subr.mxu0 %v5118
        %5444 = vmatpush1.msra.mxu0 %v5117
        %5445 = vmatprep.subr.mxu0 %v5121
        %5446 = vmatpush1.msra.mxu0 %v5120
        %5447 = vmatprep.subr.mxu0 %v5124
        %5448 = vmatpush1.msra.mxu0 %v5123
        %5449 = vmatprep.subr.mxu0 %v5127
        %5450 = vmatpush1.msra.mxu0 %v5126
        %5451 = vmatprep.subr.mxu0 %v5130
        %5452 = vmatpush1.msra.mxu0 %v5129
        %5453 = vmatprep.subr.mxu0 %v5133
        %5454 = vmatpush1.msra.mxu0 %v5132
        %5455 = vmatprep.subr.mxu0 %v5136
        %5456 = vmatpush1.msra.mxu0 %v5135
        %5457 = vmatprep.subr.mxu0 %v5139
        %5458 = vmatpush1.msra.mxu0 %v5138
        %5459 = vmatprep.subr.mxu0 %v5142
        %5460 = vmatpush1.msra.mxu0 %v5141
        %5461 = vmatprep.subr.mxu0 %v5145
        %5462 = vmatpush1.msra.mxu0 %v5144
        %5463 = vmatprep.subr.mxu0 %v5148
        %5464 = vmatpush1.msra.mxu0 %v5147
        %5465 = vmatprep.subr.mxu0 %v5151
        %5466 = vmatpush1.msra.mxu0 %v5150
        %5467 = vmatprep.subr.mxu0 %v5154
        %5468 = vmatpush1.msra.mxu0 %v5153
        %5469 = vmatprep.subr.mxu0 %v5157
        %5470 = vmatpush1.msra.mxu0 %v5156
        %5471 = vmatprep.subr.mxu0 %v5160
        %5472 = vmatpush1.msra.mxu0 %v5159
        %5473 = vmatprep.subr.mxu0 %v5163
        %5474 = vmatpush1.msra.mxu0 %v5162
        %5475 = vmatprep.subr.mxu0 %v5166
        %5476 = vmatpush1.msra.mxu0 %v5165
        %5477 = vmatprep.subr.mxu0 %v5169
        %5478 = vmatpush1.msra.mxu0 %v5168
        %5479 = vmatprep.subr.mxu0 %v5172
        %5480 = vmatpush1.msra.mxu0 %v5171
        %5481 = vmatprep.subr.mxu0 %v5175
        %5482 = vmatpush1.msra.mxu0 %v5174
        %5483 = vmatprep.subr.mxu0 %v5178
        %5484 = vmatpush1.msra.mxu0 %v5177
        %5485 = vmatprep.subr.mxu0 %v5181
        %5486 = vmatpush1.msra.mxu0 %v5180
        %5487 = vmatprep.subr.mxu0 %v5184
        %5488 = vmatpush1.msra.mxu0 %v5183
        %5489 = vmatprep.subr.mxu0 %v5187
        %5490 = vmatpush1.msra.mxu0 %v5186
        %5491 = vmatprep.subr.mxu0 %v5190
        %5492 = vmatpush1.msra.mxu0 %v5189
        %5493 = vmatprep.subr.mxu0 %v5193
        %5494 = vmatpush1.msra.mxu0 %v5192
        %5495 = vmatprep.subr.mxu0 %v5196
        %5496 = vmatpush1.msra.mxu0 %v5195
        %5497 = vmatprep.subr.mxu0 %v5199
        %5498 = vmatpush1.msra.mxu0 %v5198
        %5499 = vmatprep.subr.mxu0 %v5202
        %5500 = vmatpush1.msra.mxu0 %v5201
        %5501 = vmatprep.subr.mxu0 %v5205
        %5502 = vmatpush1.msra.mxu0 %v5204
        %5503 = vmatprep.subr.mxu0 %v5208
        %5504 = vmatpush1.msra.mxu0 %v5207
        %5505 = vmatprep.subr.mxu0 %v5211
        %5506 = vmatpush1.msra.mxu0 %v5210
        %5507 = vmatprep.mubr.f32.mxu0 %v4828
        %5508 = vmatmul.mubr.f32.gmra.mrb[0].mxu0 %v4827
        %v5509 = vpop.f32.mrb[0].mxu0
        %v5510 = vadd.f32 %v5439, %v5509
        %v5511 = vpop.f32.mrb[0].mxu0
        %v5512 = vadd.f32 %v5441, %v5511
        %5513 = vdwg.mxu0
        %5514 = vmatprep.subr.mxu0 0.0
        %5515 = vmatpush1.msra.mxu0 %v4831
        %5516 = vmatprep.subr.mxu0 0.0
        %5517 = vmatpush1.msra.mxu0 %v4834
        %5518 = vmatprep.subr.mxu0 0.0
        %5519 = vmatpush1.msra.mxu0 %v4837
        %5520 = vmatprep.subr.mxu0 0.0
        %5521 = vmatpush1.msra.mxu0 %v4840
        %5522 = vmatprep.subr.mxu0 0.0
        %5523 = vmatpush1.msra.mxu0 %v4843
        %5524 = vmatprep.subr.mxu0 0.0
        %5525 = vmatpush1.msra.mxu0 %v4846
        %5526 = vmatprep.subr.mxu0 0.0
        %5527 = vmatpush1.msra.mxu0 %v4849
        %5528 = vmatprep.subr.mxu0 0.0
        %5529 = vmatpush1.msra.mxu0 %v4852
        %5530 = vmatprep.subr.mxu0 0.0
        %5531 = vmatpush1.msra.mxu0 %v4855
        %5532 = vmatprep.subr.mxu0 0.0
        %5533 = vmatpush1.msra.mxu0 %v4858
        %5534 = vmatprep.subr.mxu0 0.0
        %5535 = vmatpush1.msra.mxu0 %v4861
        %5536 = vmatprep.subr.mxu0 0.0
        %5537 = vmatpush1.msra.mxu0 %v4864
        %5538 = vmatprep.subr.mxu0 0.0
        %5539 = vmatpush1.msra.mxu0 %v4867
        %5540 = vmatprep.subr.mxu0 0.0
        %5541 = vmatpush1.msra.mxu0 %v4870
        %5542 = vmatprep.subr.mxu0 0.0
        %5543 = vmatpush1.msra.mxu0 %v4873
        %5544 = vmatprep.subr.mxu0 0.0
        %5545 = vmatpush1.msra.mxu0 %v4876
        %5546 = vmatprep.subr.mxu0 0.0
        %5547 = vmatpush1.msra.mxu0 %v4879
        %5548 = vmatprep.subr.mxu0 0.0
        %5549 = vmatpush1.msra.mxu0 %v4882
        %5550 = vmatprep.subr.mxu0 0.0
        %5551 = vmatpush1.msra.mxu0 %v4885
        %5552 = vmatprep.subr.mxu0 0.0
        %5553 = vmatpush1.msra.mxu0 %v4888
        %5554 = vmatprep.subr.mxu0 0.0
        %5555 = vmatpush1.msra.mxu0 %v4891
        %5556 = vmatprep.subr.mxu0 0.0
        %5557 = vmatpush1.msra.mxu0 %v4894
        %5558 = vmatprep.subr.mxu0 0.0
        %5559 = vmatpush1.msra.mxu0 %v4897
        %5560 = vmatprep.subr.mxu0 0.0
        %5561 = vmatpush1.msra.mxu0 %v4900
        %5562 = vmatprep.subr.mxu0 0.0
        %5563 = vmatpush1.msra.mxu0 %v4903
        %5564 = vmatprep.subr.mxu0 0.0
        %5565 = vmatpush1.msra.mxu0 %v4906
        %5566 = vmatprep.subr.mxu0 0.0
        %5567 = vmatpush1.msra.mxu0 %v4909
        %5568 = vmatprep.subr.mxu0 0.0
        %5569 = vmatpush1.msra.mxu0 %v4912
        %5570 = vmatprep.subr.mxu0 0.0
        %5571 = vmatpush1.msra.mxu0 %v4915
        %5572 = vmatprep.subr.mxu0 0.0
        %5573 = vmatpush1.msra.mxu0 %v4918
        %5574 = vmatprep.subr.mxu0 0.0
        %5575 = vmatpush1.msra.mxu0 %v4921
        %5576 = vmatprep.subr.mxu0 0.0
        %5577 = vmatpush1.msra.mxu0 %v4924
        %5578 = vmatprep.mubr.f32.mxu0 %v4822
        %5579 = vmatmul.mubr.f32.gmra.mrb[0].mxu0 %v4821
        %v5580 = vpop.f32.mrb[0].mxu0
        %v5581 = vadd.f32 %v5226, %v5580
        %v5582 = vpop.f32.mrb[0].mxu0
        %5583 = vdwg.mxu0
        %5584 = vmatprep.subr.mxu0 0.0
        %5585 = vmatpush1.msra.mxu0 %v4927
        %5586 = vmatprep.subr.mxu0 0.0
        %5587 = vmatpush1.msra.mxu0 %v4930
        %5588 = vmatprep.subr.mxu0 0.0
        %5589 = vmatpush1.msra.mxu0 %v4933
        %5590 = vmatprep.subr.mxu0 0.0
        %5591 = vmatpush1.msra.mxu0 %v4936
        %5592 = vmatprep.subr.mxu0 0.0
        %5593 = vmatpush1.msra.mxu0 %v4939
        %5594 = vmatprep.subr.mxu0 0.0
        %5595 = vmatpush1.msra.mxu0 %v4942
        %5596 = vmatprep.subr.mxu0 0.0
        %5597 = vmatpush1.msra.mxu0 %v4945
        %5598 = vmatprep.subr.mxu0 0.0
        %5599 = vmatpush1.msra.mxu0 %v4948
        %5600 = vmatprep.subr.mxu0 0.0
        %5601 = vmatpush1.msra.mxu0 %v4951
        %5602 = vmatprep.subr.mxu0 0.0
        %5603 = vmatpush1.msra.mxu0 %v4954
        %5604 = vmatprep.subr.mxu0 0.0
        %5605 = vmatpush1.msra.mxu0 %v4957
        %5606 = vmatprep.subr.mxu0 0.0
        %5607 = vmatpush1.msra.mxu0 %v4960
        %5608 = vmatprep.subr.mxu0 0.0
        %5609 = vmatpush1.msra.mxu0 %v4963
        %5610 = vmatprep.subr.mxu0 0.0
        %5611 = vmatpush1.msra.mxu0 %v4966
        %5612 = vmatprep.subr.mxu0 0.0
        %5613 = vmatpush1.msra.mxu0 %v4969
        %5614 = vmatprep.subr.mxu0 0.0
        %5615 = vmatpush1.msra.mxu0 %v4972
        %5616 = vmatprep.subr.mxu0 0.0
        %5617 = vmatpush1.msra.mxu0 %v4975
        %5618 = vmatprep.subr.mxu0 0.0
        %5619 = vmatpush1.msra.mxu0 %v4978
        %5620 = vmatprep.subr.mxu0 0.0
        %5621 = vmatpush1.msra.mxu0 %v4981
        %5622 = vmatprep.subr.mxu0 0.0
        %5623 = vmatpush1.msra.mxu0 %v4984
        %5624 = vmatprep.subr.mxu0 0.0
        %5625 = vmatpush1.msra.mxu0 %v4987
        %5626 = vmatprep.subr.mxu0 0.0
        %5627 = vmatpush1.msra.mxu0 %v4990
        %5628 = vmatprep.subr.mxu0 0.0
        %5629 = vmatpush1.msra.mxu0 %v4993
        %5630 = vmatprep.subr.mxu0 0.0
        %5631 = vmatpush1.msra.mxu0 %v4996
        %5632 = vmatprep.subr.mxu0 0.0
        %5633 = vmatpush1.msra.mxu0 %v4999
        %5634 = vmatprep.subr.mxu0 0.0
        %5635 = vmatpush1.msra.mxu0 %v5002
        %5636 = vmatprep.subr.mxu0 0.0
        %5637 = vmatpush1.msra.mxu0 %v5005
        %5638 = vmatprep.subr.mxu0 0.0
        %5639 = vmatpush1.msra.mxu0 %v5008
        %5640 = vmatprep.subr.mxu0 0.0
        %5641 = vmatpush1.msra.mxu0 %v5011
        %5642 = vmatprep.subr.mxu0 0.0
        %5643 = vmatpush1.msra.mxu0 %v5014
        %5644 = vmatprep.subr.mxu0 0.0
        %5645 = vmatpush1.msra.mxu0 %v5017
        %5646 = vmatprep.subr.mxu0 0.0
        %5647 = vmatpush1.msra.mxu0 %v5020
        %5648 = vmatprep.mubr.f32.mxu0 %v4824
        %5649 = vmatmul.mubr.f32.gmra.mrb[0].mxu0 %v4823
        %v5650 = vpop.f32.mrb[0].mxu0
        %v5651 = vadd.f32 %v5581, %v5650
        %v5652 = vpop.f32.mrb[0].mxu0
        %5653 = vdwg.mxu0
        %5654 = vmatprep.subr.mxu0 0.0
        %5655 = vmatpush1.msra.mxu0 %v5023
        %5656 = vmatprep.subr.mxu0 0.0
        %5657 = vmatpush1.msra.mxu0 %v5026
        %5658 = vmatprep.subr.mxu0 0.0
        %5659 = vmatpush1.msra.mxu0 %v5029
        %5660 = vmatprep.subr.mxu0 0.0
        %5661 = vmatpush1.msra.mxu0 %v5032
        %5662 = vmatprep.subr.mxu0 0.0
        %5663 = vmatpush1.msra.mxu0 %v5035
        %5664 = vmatprep.subr.mxu0 0.0
        %5665 = vmatpush1.msra.mxu0 %v5038
        %5666 = vmatprep.subr.mxu0 0.0
        %5667 = vmatpush1.msra.mxu0 %v5041
        %5668 = vmatprep.subr.mxu0 0.0
        %5669 = vmatpush1.msra.mxu0 %v5044
        %5670 = vmatprep.subr.mxu0 0.0
        %5671 = vmatpush1.msra.mxu0 %v5047
        %5672 = vmatprep.subr.mxu0 0.0
        %5673 = vmatpush1.msra.mxu0 %v5050
        %5674 = vmatprep.subr.mxu0 0.0
        %5675 = vmatpush1.msra.mxu0 %v5053
        %5676 = vmatprep.subr.mxu0 0.0
        %5677 = vmatpush1.msra.mxu0 %v5056
        %5678 = vmatprep.subr.mxu0 0.0
        %5679 = vmatpush1.msra.mxu0 %v5059
        %5680 = vmatprep.subr.mxu0 0.0
        %5681 = vmatpush1.msra.mxu0 %v5062
        %5682 = vmatprep.subr.mxu0 0.0
        %5683 = vmatpush1.msra.mxu0 %v5065
        %5684 = vmatprep.subr.mxu0 0.0
        %5685 = vmatpush1.msra.mxu0 %v5068
        %5686 = vmatprep.subr.mxu0 0.0
        %5687 = vmatpush1.msra.mxu0 %v5071
        %5688 = vmatprep.subr.mxu0 0.0
        %5689 = vmatpush1.msra.mxu0 %v5074
        %5690 = vmatprep.subr.mxu0 0.0
        %5691 = vmatpush1.msra.mxu0 %v5077
        %5692 = vmatprep.subr.mxu0 0.0
        %5693 = vmatpush1.msra.mxu0 %v5080
        %5694 = vmatprep.subr.mxu0 0.0
        %5695 = vmatpush1.msra.mxu0 %v5083
        %5696 = vmatprep.subr.mxu0 0.0
        %5697 = vmatpush1.msra.mxu0 %v5086
        %5698 = vmatprep.subr.mxu0 0.0
        %5699 = vmatpush1.msra.mxu0 %v5089
        %5700 = vmatprep.subr.mxu0 0.0
        %5701 = vmatpush1.msra.mxu0 %v5092
        %5702 = vmatprep.subr.mxu0 0.0
        %5703 = vmatpush1.msra.mxu0 %v5095
        %5704 = vmatprep.subr.mxu0 0.0
        %5705 = vmatpush1.msra.mxu0 %v5098
        %5706 = vmatprep.subr.mxu0 0.0
        %5707 = vmatpush1.msra.mxu0 %v5101
        %5708 = vmatprep.subr.mxu0 0.0
        %5709 = vmatpush1.msra.mxu0 %v5104
        %5710 = vmatprep.subr.mxu0 0.0
        %5711 = vmatpush1.msra.mxu0 %v5107
        %5712 = vmatprep.subr.mxu0 0.0
        %5713 = vmatpush1.msra.mxu0 %v5110
        %5714 = vmatprep.subr.mxu0 0.0
        %5715 = vmatpush1.msra.mxu0 %v5113
        %5716 = vmatprep.subr.mxu0 0.0
        %5717 = vmatpush1.msra.mxu0 %v5116
        %5718 = vmatprep.mubr.f32.mxu0 %v4826
        %5719 = vmatmul.mubr.f32.gmra.mrb[0].mxu0 %v4825
        %v5720 = vpop.f32.mrb[0].mxu0
        %v5721 = vadd.f32 %v5651, %v5720
        %v5722 = vpop.f32.mrb[0].mxu0
        %5723 = vdwg.mxu0
        %5724 = vmatprep.subr.mxu0 0.0
        %5725 = vmatpush1.msra.mxu0 %v5119
        %5726 = vmatprep.subr.mxu0 0.0
        %5727 = vmatpush1.msra.mxu0 %v5122
        %5728 = vmatprep.subr.mxu0 0.0
        %5729 = vmatpush1.msra.mxu0 %v5125
        %5730 = vmatprep.subr.mxu0 0.0
        %5731 = vmatpush1.msra.mxu0 %v5128
        %5732 = vmatprep.subr.mxu0 0.0
        %5733 = vmatpush1.msra.mxu0 %v5131
        %5734 = vmatprep.subr.mxu0 0.0
        %5735 = vmatpush1.msra.mxu0 %v5134
        %5736 = vmatprep.subr.mxu0 0.0
        %5737 = vmatpush1.msra.mxu0 %v5137
        %5738 = vmatprep.subr.mxu0 0.0
        %5739 = vmatpush1.msra.mxu0 %v5140
        %5740 = vmatprep.subr.mxu0 0.0
        %5741 = vmatpush1.msra.mxu0 %v5143
        %5742 = vmatprep.subr.mxu0 0.0
        %5743 = vmatpush1.msra.mxu0 %v5146
        %5744 = vmatprep.subr.mxu0 0.0
        %5745 = vmatpush1.msra.mxu0 %v5149
        %5746 = vmatprep.subr.mxu0 0.0
        %5747 = vmatpush1.msra.mxu0 %v5152
        %5748 = vmatprep.subr.mxu0 0.0
        %5749 = vmatpush1.msra.mxu0 %v5155
        %5750 = vmatprep.subr.mxu0 0.0
        %5751 = vmatpush1.msra.mxu0 %v5158
        %5752 = vmatprep.subr.mxu0 0.0
        %5753 = vmatpush1.msra.mxu0 %v5161
        %5754 = vmatprep.subr.mxu0 0.0
        %5755 = vmatpush1.msra.mxu0 %v5164
        %5756 = vmatprep.subr.mxu0 0.0
        %5757 = vmatpush1.msra.mxu0 %v5167
        %5758 = vmatprep.subr.mxu0 0.0
        %5759 = vmatpush1.msra.mxu0 %v5170
        %5760 = vmatprep.subr.mxu0 0.0
        %5761 = vmatpush1.msra.mxu0 %v5173
        %5762 = vmatprep.subr.mxu0 0.0
        %5763 = vmatpush1.msra.mxu0 %v5176
        %5764 = vmatprep.subr.mxu0 0.0
        %5765 = vmatpush1.msra.mxu0 %v5179
        %5766 = vmatprep.subr.mxu0 0.0
        %5767 = vmatpush1.msra.mxu0 %v5182
        %5768 = vmatprep.subr.mxu0 0.0
        %5769 = vmatpush1.msra.mxu0 %v5185
        %5770 = vmatprep.subr.mxu0 0.0
        %5771 = vmatpush1.msra.mxu0 %v5188
        %5772 = vmatprep.subr.mxu0 0.0
        %5773 = vmatpush1.msra.mxu0 %v5191
        %5774 = vmatprep.subr.mxu0 0.0
        %5775 = vmatpush1.msra.mxu0 %v5194
        %5776 = vmatprep.subr.mxu0 0.0
        %5777 = vmatpush1.msra.mxu0 %v5197
        %5778 = vmatprep.subr.mxu0 0.0
        %5779 = vmatpush1.msra.mxu0 %v5200
        %5780 = vmatprep.subr.mxu0 0.0
        %5781 = vmatpush1.msra.mxu0 %v5203
        %5782 = vmatprep.subr.mxu0 0.0
        %5783 = vmatpush1.msra.mxu0 %v5206
        %5784 = vmatprep.subr.mxu0 0.0
        %5785 = vmatpush1.msra.mxu0 %v5209
        %5786 = vmatprep.subr.mxu0 0.0
        %5787 = vmatpush1.msra.mxu0 %v5212
        %5788 = vmatprep.mubr.f32.mxu0 %v4828
        %5789 = vmatmul.mubr.f32.gmra.mrb[0].mxu0 %v4827
        %v5790 = vpop.f32.mrb[0].mxu0
        %v5791 = vadd.f32 %v5721, %v5790
        %v5792 = vpop.f32.mrb[0].mxu0
        %5793 = vdwg.mxu0
        %v5794 = vmax.f32 %v5510, 0.0
        %v5795 = vmax.f32 %v5512, 0.0
        %v5796 = vmax.f32 %v5791, 0.0
        %v5797 = vld [vmem:[%s7] sm:$0xff]
        %v5798 = vld [vmem:[%s7 + $0x8] sm:$0xff]
        %v5799 = vld [vmem:[%s7 + $0x10] sm:$0xff]
        %v5800 = vld [vmem:[%s7 + $0x18] sm:$0xff]
        %v5801 = vld [vmem:[%s7 + $0x20] sm:$0xff]
        %v5802 = vld [vmem:[%s7 + $0x28] sm:$0xff]
        %v5803 = vld [vmem:[%s7 + $0x30] sm:$0xff]
        %v5804 = vld [vmem:[%s7 + $0x38] sm:$0xff]
        %v5805 = vld [vmem:[%s7 + $0x40] sm:$0xff]
        %v5806 = vld [vmem:[%s7 + $0x48] sm:$0xff]
        %v5807 = vld [vmem:[%s7 + $0x50] sm:$0xff]
        %v5808 = vld [vmem:[%s7 + $0x58] sm:$0xff]
        %v5809 = vld [vmem:[%s7 + $0x60] sm:$0xff]
        %v5810 = vld [vmem:[%s7 + $0x68] sm:$0xff]
        %v5811 = vld [vmem:[%s7 + $0x70] sm:$0xff]
        %v5812 = vld [vmem:[%s7 + $0x78] sm:$0xff]
        %v5813 = vld [vmem:[%s7 + $0x80] sm:$0xff]
        %v5814 = vld [vmem:[%s7 + $0x88] sm:$0xff]
        %v5815 = vld [vmem:[%s7 + $0x90] sm:$0xff]
        %v5816 = vld [vmem:[%s7 + $0x98] sm:$0xff]
        %v5817 = vld [vmem:[%s7 + $0xa0] sm:$0xff]
        %v5818 = vld [vmem:[%s7 + $0xa8] sm:$0xff]
        %v5819 = vld [vmem:[%s7 + $0xb0] sm:$0xff]
        %v5820 = vld [vmem:[%s7 + $0xb8] sm:$0xff]
        %v5821 = vld [vmem:[%s7 + $0xc0] sm:$0xff]
        %v5822 = vld [vmem:[%s7 + $0xc8] sm:$0xff]
        %v5823 = vld [vmem:[%s7 + $0xd0] sm:$0xff]
        %v5824 = vld [vmem:[%s7 + $0xd8] sm:$0xff]
        %v5825 = vld [vmem:[%s7 + $0xe0] sm:$0xff]
        %v5826 = vld [vmem:[%s7 + $0xe8] sm:$0xff]
        %v5827 = vld [vmem:[%s7 + $0xf0] sm:$0xff]
        %v5828 = vld [vmem:[%s7 + $0xf8] sm:$0xff]
        %v5829 = vld [vmem:[%s7 + $0x100] sm:$0xff]
        %v5830 = vld [vmem:[%s7 + $0x108] sm:$0xff]
        %v5831 = vld [vmem:[%s7 + $0x110] sm:$0xff]
        %v5832 = vld [vmem:[%s7 + $0x118] sm:$0xff]
        %v5833 = vld [vmem:[%s7 + $0x120] sm:$0xff]
        %v5834 = vld [vmem:[%s7 + $0x128] sm:$0xff]
        %v5835 = vld [vmem:[%s7 + $0x130] sm:$0xff]
        %v5836 = vld [vmem:[%s7 + $0x138] sm:$0xff]
        %v5837 = vld [vmem:[%s7 + $0x140] sm:$0xff]
        %v5838 = vld [vmem:[%s7 + $0x148] sm:$0xff]
        %v5839 = vld [vmem:[%s7 + $0x150] sm:$0xff]
        %v5840 = vld [vmem:[%s7 + $0x158] sm:$0xff]
        %v5841 = vld [vmem:[%s7 + $0x160] sm:$0xff]
        %v5842 = vld [vmem:[%s7 + $0x168] sm:$0xff]
        %v5843 = vld [vmem:[%s7 + $0x170] sm:$0xff]
        %v5844 = vld [vmem:[%s7 + $0x178] sm:$0xff]
        %v5845 = vld [vmem:[%s7 + $0x180] sm:$0xff]
        %v5846 = vld [vmem:[%s7 + $0x188] sm:$0xff]
        %v5847 = vld [vmem:[%s7 + $0x190] sm:$0xff]
        %v5848 = vld [vmem:[%s7 + $0x198] sm:$0xff]
        %v5849 = vld [vmem:[%s7 + $0x1a0] sm:$0xff]
        %v5850 = vld [vmem:[%s7 + $0x1a8] sm:$0xff]
        %v5851 = vld [vmem:[%s7 + $0x1b0] sm:$0xff]
        %v5852 = vld [vmem:[%s7 + $0x1b8] sm:$0xff]
        %v5853 = vld [vmem:[%s7 + $0x1c0] sm:$0xff]
        %v5854 = vld [vmem:[%s7 + $0x1c8] sm:$0xff]
        %v5855 = vld [vmem:[%s7 + $0x1d0] sm:$0xff]
        %v5856 = vld [vmem:[%s7 + $0x1d8] sm:$0xff]
        %v5857 = vld [vmem:[%s7 + $0x1e0] sm:$0xff]
        %v5858 = vld [vmem:[%s7 + $0x1e8] sm:$0xff]
        %v5859 = vld [vmem:[%s7 + $0x1f0] sm:$0xff]
        %v5860 = vld [vmem:[%s7 + $0x1f8] sm:$0xff]
        %v5861 = vld [vmem:[%s7 + $0x200] sm:$0xff]
        %v5862 = vld [vmem:[%s7 + $0x208] sm:$0xff]
        %v5863 = vld [vmem:[%s7 + $0x210] sm:$0xff]
        %v5864 = vld [vmem:[%s7 + $0x218] sm:$0xff]
        %v5865 = vld [vmem:[%s7 + $0x220] sm:$0xff]
        %v5866 = vld [vmem:[%s7 + $0x228] sm:$0xff]
        %v5867 = vld [vmem:[%s7 + $0x230] sm:$0xff]
        %v5868 = vld [vmem:[%s7 + $0x238] sm:$0xff]
        %v5869 = vld [vmem:[%s7 + $0x240] sm:$0xff]
        %v5870 = vld [vmem:[%s7 + $0x248] sm:$0xff]
        %v5871 = vld [vmem:[%s7 + $0x250] sm:$0xff]
        %v5872 = vld [vmem:[%s7 + $0x258] sm:$0xff]
        %v5873 = vld [vmem:[%s7 + $0x260] sm:$0xff]
        %v5874 = vld [vmem:[%s7 + $0x268] sm:$0xff]
        %v5875 = vld [vmem:[%s7 + $0x270] sm:$0xff]
        %v5876 = vld [vmem:[%s7 + $0x278] sm:$0xff]
        %v5877 = vld [vmem:[%s7 + $0x280] sm:$0xff]
        %v5878 = vld [vmem:[%s7 + $0x288] sm:$0xff]
        %v5879 = vld [vmem:[%s7 + $0x290] sm:$0xff]
        %v5880 = vld [vmem:[%s7 + $0x298] sm:$0xff]
        %v5881 = vld [vmem:[%s7 + $0x2a0] sm:$0xff]
        %v5882 = vld [vmem:[%s7 + $0x2a8] sm:$0xff]
        %v5883 = vld [vmem:[%s7 + $0x2b0] sm:$0xff]
        %v5884 = vld [vmem:[%s7 + $0x2b8] sm:$0xff]
        %v5885 = vld [vmem:[%s7 + $0x2c0] sm:$0xff]
        %v5886 = vld [vmem:[%s7 + $0x2c8] sm:$0xff]
        %v5887 = vld [vmem:[%s7 + $0x2d0] sm:$0xff]
        %v5888 = vld [vmem:[%s7 + $0x2d8] sm:$0xff]
        %v5889 = vld [vmem:[%s7 + $0x2e0] sm:$0xff]
        %v5890 = vld [vmem:[%s7 + $0x2e8] sm:$0xff]
        %v5891 = vld [vmem:[%s7 + $0x2f0] sm:$0xff]
        %v5892 = vld [vmem:[%s7 + $0x2f8] sm:$0xff]
        %v5893 = vld [vmem:[%s8] sm:$0x3]
        %v5895 = vlaneseq
        %v5896 = vshrl.u32 %v5895, 7
        %v5897 = vsub.s32 0, %v5896
        %v5898 = vrot.slane %v5893, %v5897
        %v5899 = vlaneseq
        %v5900 = vshrl.u32 %v5899, 7
        %v5901 = vsub.s32 1, %v5900
        %v5902 = vrot.slane %v5893, %v5901
        %5905 = vmatprep.subr.mxu0 %v5798
        %5906 = vmatpush1.msra.mxu0 %v5797
        %5907 = vmatprep.subr.mxu0 %v5800
        %5908 = vmatpush1.msra.mxu0 %v5799
        %5909 = vmatprep.subr.mxu0 %v5802
        %5910 = vmatpush1.msra.mxu0 %v5801
        %5911 = vmatprep.subr.mxu0 %v5804
        %5912 = vmatpush1.msra.mxu0 %v5803
        %5913 = vmatprep.subr.mxu0 %v5806
        %5914 = vmatpush1.msra.mxu0 %v5805
        %5915 = vmatprep.subr.mxu0 %v5808
        %5916 = vmatpush1.msra.mxu0 %v5807
        %5917 = vmatprep.subr.mxu0 %v5810
        %5918 = vmatpush1.msra.mxu0 %v5809
        %5919 = vmatprep.subr.mxu0 %v5812
        %5920 = vmatpush1.msra.mxu0 %v5811
        %5921 = vmatprep.subr.mxu0 %v5814
        %5922 = vmatpush1.msra.mxu0 %v5813
        %5923 = vmatprep.subr.mxu0 %v5816
        %5924 = vmatpush1.msra.mxu0 %v5815
        %5925 = vmatprep.subr.mxu0 %v5818
        %5926 = vmatpush1.msra.mxu0 %v5817
        %5927 = vmatprep.subr.mxu0 %v5820
        %5928 = vmatpush1.msra.mxu0 %v5819
        %5929 = vmatprep.subr.mxu0 %v5822
        %5930 = vmatpush1.msra.mxu0 %v5821
        %5931 = vmatprep.subr.mxu0 %v5824
        %5932 = vmatpush1.msra.mxu0 %v5823
        %5933 = vmatprep.subr.mxu0 %v5826
        %5934 = vmatpush1.msra.mxu0 %v5825
        %5935 = vmatprep.subr.mxu0 %v5828
        %5936 = vmatpush1.msra.mxu0 %v5827
        %5937 = vmatprep.subr.mxu0 %v5830
        %5938 = vmatpush1.msra.mxu0 %v5829
        %5939 = vmatprep.subr.mxu0 %v5832
        %5940 = vmatpush1.msra.mxu0 %v5831
        %5941 = vmatprep.subr.mxu0 %v5834
        %5942 = vmatpush1.msra.mxu0 %v5833
        %5943 = vmatprep.subr.mxu0 %v5836
        %5944 = vmatpush1.msra.mxu0 %v5835
        %5945 = vmatprep.subr.mxu0 %v5838
        %5946 = vmatpush1.msra.mxu0 %v5837
        %5947 = vmatprep.subr.mxu0 %v5840
        %5948 = vmatpush1.msra.mxu0 %v5839
        %5949 = vmatprep.subr.mxu0 %v5842
        %5950 = vmatpush1.msra.mxu0 %v5841
        %5951 = vmatprep.subr.mxu0 %v5844
        %5952 = vmatpush1.msra.mxu0 %v5843
        %5953 = vmatprep.subr.mxu0 %v5846
        %5954 = vmatpush1.msra.mxu0 %v5845
        %5955 = vmatprep.subr.mxu0 %v5848
        %5956 = vmatpush1.msra.mxu0 %v5847
        %5957 = vmatprep.subr.mxu0 %v5850
        %5958 = vmatpush1.msra.mxu0 %v5849
        %5959 = vmatprep.subr.mxu0 %v5852
        %5960 = vmatpush1.msra.mxu0 %v5851
        %5961 = vmatprep.subr.mxu0 %v5854
        %5962 = vmatpush1.msra.mxu0 %v5853
        %5963 = vmatprep.subr.mxu0 %v5856
        %5964 = vmatpush1.msra.mxu0 %v5855
        %5965 = vmatprep.subr.mxu0 %v5858
        %5966 = vmatpush1.msra.mxu0 %v5857
        %5967 = vmatprep.subr.mxu0 %v5860
        %5968 = vmatpush1.msra.mxu0 %v5859
        %5969 = vmatprep.mubr.f32.mxu0 %v5795
        %5970 = vmatmul.mubr.f32.gmra.mrb[0].mxu0 %v5794
        %v5971 = vpop.f32.mrb[0].mxu0
        %v5972 = vadd.f32 %v5898, %v5971
        %v5973 = vpop.f32.mrb[0].mxu0
        %v5974 = vadd.f32 %v5902, %v5973
        %5975 = vdwg.mxu0
        %5976 = vmatprep.subr.mxu0 %v5862
        %5977 = vmatpush1.msra.mxu0 %v5861
        %5978 = vmatprep.subr.mxu0 %v5864
        %5979 = vmatpush1.msra.mxu0 %v5863
        %5980 = vmatprep.subr.mxu0 %v5866
        %5981 = vmatpush1.msra.mxu0 %v5865
        %5982 = vmatprep.subr.mxu0 %v5868
        %5983 = vmatpush1.msra.mxu0 %v5867
        %5984 = vmatprep.subr.mxu0 %v5870
        %5985 = vmatpush1.msra.mxu0 %v5869
        %5986 = vmatprep.subr.mxu0 %v5872
        %5987 = vmatpush1.msra.mxu0 %v5871
        %5988 = vmatprep.subr.mxu0 %v5874
        %5989 = vmatpush1.msra.mxu0 %v5873
        %5990 = vmatprep.subr.mxu0 %v5876
        %5991 = vmatpush1.msra.mxu0 %v5875
        %5992 = vmatprep.subr.mxu0 %v5878
        %5993 = vmatpush1.msra.mxu0 %v5877
        %5994 = vmatprep.subr.mxu0 %v5880
        %5995 = vmatpush1.msra.mxu0 %v5879
        %5996 = vmatprep.subr.mxu0 %v5882
        %5997 = vmatpush1.msra.mxu0 %v5881
        %5998 = vmatprep.subr.mxu0 %v5884
        %5999 = vmatpush1.msra.mxu0 %v5883
        %6000 = vmatprep.subr.mxu0 %v5886
        %6001 = vmatpush1.msra.mxu0 %v5885
        %6002 = vmatprep.subr.mxu0 %v5888
        %6003 = vmatpush1.msra.mxu0 %v5887
        %6004 = vmatprep.subr.mxu0 %v5890
        %6005 = vmatpush1.msra.mxu0 %v5889
        %6006 = vmatprep.subr.mxu0 %v5892
        %6007 = vmatpush1.msra.mxu0 %v5891
        %6008 = vmatprep.subr.mxu0 0.0
        %6009 = vmatpush1.msra.mxu0 0.0
        %6010 = vmatprep.subr.mxu0 0.0
        %6011 = vmatpush1.msra.mxu0 0.0
        %6012 = vmatprep.subr.mxu0 0.0
        %6013 = vmatpush1.msra.mxu0 0.0
        %6014 = vmatprep.subr.mxu0 0.0
        %6015 = vmatpush1.msra.mxu0 0.0
        %6016 = vmatprep.subr.mxu0 0.0
        %6017 = vmatpush1.msra.mxu0 0.0
        %6018 = vmatprep.subr.mxu0 0.0
        %6019 = vmatpush1.msra.mxu0 0.0
        %6020 = vmatprep.subr.mxu0 0.0
        %6021 = vmatpush1.msra.mxu0 0.0
        %6022 = vmatprep.subr.mxu0 0.0
        %6023 = vmatpush1.msra.mxu0 0.0
        %6024 = vmatprep.subr.mxu0 0.0
        %6025 = vmatpush1.msra.mxu0 0.0
        %6026 = vmatprep.subr.mxu0 0.0
        %6027 = vmatpush1.msra.mxu0 0.0
        %6028 = vmatprep.subr.mxu0 0.0
        %6029 = vmatpush1.msra.mxu0 0.0
        %6030 = vmatprep.subr.mxu0 0.0
        %6031 = vmatpush1.msra.mxu0 0.0
        %6032 = vmatprep.subr.mxu0 0.0
        %6033 = vmatpush1.msra.mxu0 0.0
        %6034 = vmatprep.subr.mxu0 0.0
        %6035 = vmatpush1.msra.mxu0 0.0
        %6036 = vmatprep.subr.mxu0 0.0
        %6037 = vmatpush1.msra.mxu0 0.0
        %6038 = vmatprep.subr.mxu0 0.0
        %6039 = vmatpush1.msra.mxu0 0.0
        %6040 = vmatprep.mubr.f32.mxu0 0.0
        %6041 = vmatmul.mubr.f32.gmra.mrb[0].mxu0 %v5796
        %v6042 = vpop.f32.mrb[0].mxu0
        %v6043 = vadd.f32 %v5972, %v6042
        %v6044 = vpop.f32.mrb[0].mxu0
        %v6045 = vadd.f32 %v5974, %v6044
        %6046 = vdwg.mxu0
        %v6047 = vmax.f32 %v6043, 0.0
        %v6048 = vmax.f32 %v6045, 0.0
        %v6049 = vld [vmem:[%s9] sm:$0xff]
        %v6050 = vld [vmem:[%s9 + $0x8] sm:$0xff]
        %v6051 = vld [vmem:[%s9 + $0x10] sm:$0xff]
        %v6052 = vld [vmem:[%s9 + $0x18] sm:$0xff]
        %v6053 = vld [vmem:[%s9 + $0x20] sm:$0xff]
        %v6054 = vld [vmem:[%s9 + $0x28] sm:$0xff]
        %v6055 = vld [vmem:[%s9 + $0x30] sm:$0xff]
        %v6056 = vld [vmem:[%s9 + $0x38] sm:$0xff]
        %v6057 = vld [vmem:[%s9 + $0x40] sm:$0xff]
        %v6058 = vld [vmem:[%s9 + $0x48] sm:$0xff]
        %v6059 = vld [vmem:[%s9 + $0x50] sm:$0xff]
        %v6060 = vld [vmem:[%s9 + $0x58] sm:$0xff]
        %v6061 = vld [vmem:[%s9 + $0x60] sm:$0xff]
        %v6062 = vld [vmem:[%s9 + $0x68] sm:$0xff]
        %v6063 = vld [vmem:[%s9 + $0x70] sm:$0xff]
        %v6064 = vld [vmem:[%s9 + $0x78] sm:$0xff]
        %v6065 = vld [vmem:[%s9 + $0x80] sm:$0xff]
        %v6066 = vld [vmem:[%s9 + $0x88] sm:$0xff]
        %v6067 = vld [vmem:[%s9 + $0x90] sm:$0xff]
        %v6068 = vld [vmem:[%s9 + $0x98] sm:$0xff]
        %v6069 = vld [vmem:[%s9 + $0xa0] sm:$0xff]
        %v6070 = vld [vmem:[%s9 + $0xa8] sm:$0xff]
        %v6071 = vld [vmem:[%s9 + $0xb0] sm:$0xff]
        %v6072 = vld [vmem:[%s9 + $0xb8] sm:$0xff]
        %v6073 = vld [vmem:[%s10] sm:$0x1]
        %v6075 = vsel %vm2313, %v6048, 0
        %6077 = vmatprep.subr.mxu0 0.0
        %6078 = vmatpush1.msra.mxu0 %v6049
        %6079 = vmatprep.subr.mxu0 0.0
        %6080 = vmatpush1.msra.mxu0 %v6050
        %6081 = vmatprep.subr.mxu0 0.0
        %6082 = vmatpush1.msra.mxu0 %v6051
        %6083 = vmatprep.subr.mxu0 0.0
        %6084 = vmatpush1.msra.mxu0 %v6052
        %6085 = vmatprep.subr.mxu0 0.0
        %6086 = vmatpush1.msra.mxu0 %v6053
        %6087 = vmatprep.subr.mxu0 0.0
        %6088 = vmatpush1.msra.mxu0 %v6054
        %6089 = vmatprep.subr.mxu0 0.0
        %6090 = vmatpush1.msra.mxu0 %v6055
        %6091 = vmatprep.subr.mxu0 0.0
        %6092 = vmatpush1.msra.mxu0 %v6056
        %6093 = vmatprep.subr.mxu0 0.0
        %6094 = vmatpush1.msra.mxu0 %v6057
        %6095 = vmatprep.subr.mxu0 0.0
        %6096 = vmatpush1.msra.mxu0 %v6058
        %6097 = vmatprep.subr.mxu0 0.0
        %6098 = vmatpush1.msra.mxu0 %v6059
        %6099 = vmatprep.subr.mxu0 0.0
        %6100 = vmatpush1.msra.mxu0 %v6060
        %6101 = vmatprep.subr.mxu0 0.0
        %6102 = vmatpush1.msra.mxu0 %v6061
        %6103 = vmatprep.subr.mxu0 0.0
        %6104 = vmatpush1.msra.mxu0 %v6062
        %6105 = vmatprep.subr.mxu0 0.0
        %6106 = vmatpush1.msra.mxu0 %v6063
        %6107 = vmatprep.subr.mxu0 0.0
        %6108 = vmatpush1.msra.mxu0 %v6064
        %6109 = vmatprep.subr.mxu0 0.0
        %6110 = vmatpush1.msra.mxu0 %v6065
        %6111 = vmatprep.subr.mxu0 0.0
        %6112 = vmatpush1.msra.mxu0 %v6066
        %6113 = vmatprep.subr.mxu0 0.0
        %6114 = vmatpush1.msra.mxu0 %v6067
        %6115 = vmatprep.subr.mxu0 0.0
        %6116 = vmatpush1.msra.mxu0 %v6068
        %6117 = vmatprep.subr.mxu0 0.0
        %6118 = vmatpush1.msra.mxu0 %v6069
        %6119 = vmatprep.subr.mxu0 0.0
        %6120 = vmatpush1.msra.mxu0 %v6070
        %6121 = vmatprep.subr.mxu0 0.0
        %6122 = vmatpush1.msra.mxu0 %v6071
        %6123 = vmatprep.subr.mxu0 0.0
        %6124 = vmatpush1.msra.mxu0 %v6072
        %6125 = vmatprep.subr.mxu0 0.0
        %6126 = vmatpush1.msra.mxu0 0.0
        %6127 = vmatprep.subr.mxu0 0.0
        %6128 = vmatpush1.msra.mxu0 0.0
        %6129 = vmatprep.subr.mxu0 0.0
        %6130 = vmatpush1.msra.mxu0 0.0
        %6131 = vmatprep.subr.mxu0 0.0
        %6132 = vmatpush1.msra.mxu0 0.0
        %6133 = vmatprep.subr.mxu0 0.0
        %6134 = vmatpush1.msra.mxu0 0.0
        %6135 = vmatprep.subr.mxu0 0.0
        %6136 = vmatpush1.msra.mxu0 0.0
        %6137 = vmatprep.subr.mxu0 0.0
        %6138 = vmatpush1.msra.mxu0 0.0
        %6139 = vmatprep.subr.mxu0 0.0
        %6140 = vmatpush1.msra.mxu0 0.0
        %6141 = vmatprep.mubr.f32.mxu0 %v6075
        %6142 = vmatmul.mubr.f32.gmra.mrb[0].mxu0 %v6047
        %v6143 = vpop.f32.mrb[0].mxu0
        %v6144 = vadd.f32 %v6073, %v6143
        %v6145 = vpop.f32.mrb[0].mxu0
        %6146 = vdwg.mxu0
        %6147 = vst [vmem:[%s378] sm:$0x1] %v6144
        %s6148 = sand.u32 %s269, 1
        %s6149 = scalar_lea.sflag [#allocation4], %s6148
        %s6150 = sand.u32 %s269, 1
        %s6151 = scalar_lea.vmem [#allocation3], %s6150
        // Predicated region
        $region65: #{net_forward.1} parent=63 // pred_check
          %p6152 = pneg %p279
        $region66: #{net_forward.1} parent=63 // pred_check_branch
          %6154 = sbr.rel (%p6152) target = $region68
        $region67: #{net_forward.1} parent=63 // pred_region
          %s6156 = ssub.s32 16, 16
          %6157 = vsyncadd %s6149, %s6156
          %s6158 = smul.addr %s25, 16
          %s6159 = scalar_lea.hbm %s11, %s6158
          %s6161 = sshll.u32 %s6151, 4
          %s6162 = int_to_ptr.vmem [resolvable:$true] %s6161
          %6164 = dma.vmem_to_hbm [thread:$0]  %s6162, 16, %s6159, %s6149
        $region68: #{net_forward.1} parent=63 // pred_fallthru
          _
      $region64: #{net_forward.1} parent=5 // pred_fallthru
        _
      %p6165 = scmp.le.s32.totalorder 2, %s20
      // Predicated region
      $region69: #{net_forward.1} parent=5 // pred_check
        %p6166 = pneg %p6165
      $region70: #{net_forward.1} parent=5 // pred_check_branch
        %6168 = sbr.rel (%p6166) target = $region72
      $region71: #{net_forward.1} parent=5 // pred_region
        %s6169 = ssub.s32 %s20, 2
        // Predicated region
        $region73: #{net_forward.1} parent=71 // pred_check
          %p6170 = pneg %p285
        $region74: #{net_forward.1} parent=71 // pred_check_branch
          %6172 = sbr.rel (%p6170) target = $region76
        $region75: #{net_forward.1} parent=71 // pred_region
          %s6173 = sand.u32 %s270, 1
          %s6174 = scalar_lea.sflag [#allocation4], %s6173
          %s6175 = sand.u32 %s270, 1
          %s6176 = scalar_lea.vmem [#allocation3], %s6175
          %6177 = dma.done %s6174, 16
        $region76: #{net_forward.1} parent=71 // pred_fallthru
          _
      $region72: #{net_forward.1} parent=5 // pred_fallthru
        _
    $region6: #{net_forward.1} parent=1 // loop_footer
      %s24 = sadd.s32 1, %s20
    $region7: #{net_forward.1} parent=1 // loop_footer_branch
      %19 = sbr.rel target = $region3
    $region8: #{net_forward.1} parent=1 // loop_exit
      _
    %6178 = vsyncpa [#allocation4], 1
    %s6179 = scalar_lea.sflag [#allocation4], 1
    %6180 = vsyncpa %s6179, 1

</llo_original>
